<compile_context>
chip_gen: v5e
topology: v5e:2x2
jax: 0.10.0
libtpu: 0.0.40
codegen_flags: <defaults>
</compile_context>

<pallas_src>
import functools

import jax
import jax.numpy as jnp
from jax.experimental import pallas as pl
from jax.experimental.pallas import tpu as pltpu


# -----------------------------------------------------------------------------
# Kernel 1: conv1 + relu + conv2 + relu + 2x2 max-pool, fully fused per image.
#
# Layout of the conv1 activation inside the kernel (per image):
#   a_even[y, u, c] = a1[y, 2u,   c]   (30, 16, 32)   u = x // 2, slot u=15 pad
#   a_odd [y, u, c] = a1[y, 2u+1, c]
#   a_even1 / a_odd1 are the same planes shifted u -> u+1.
# conv2 output column 2u+pj needs input columns 2u+pj+dj, i.e. for
#   pj=0: dj=0,1,2 -> (a_even, a_odd,  a_even1)
#   pj=1: dj=0,1,2 -> (a_odd,  a_even1, a_odd1)
# so stacking the three dj planes along channels (K=96) turns each kh (=di)
# tap into one (448, 96) @ (96, 32) dot from a contiguous row window.
# -----------------------------------------------------------------------------
def _conv_stage_kernel(p1_ref, w1_ref, b1_ref, w2_ref, b2_ref, o_ref):
    # conv1 + relu as an im2col matmul; rows already in (parity, y, u) order.
    h = jnp.dot(p1_ref[0], w1_ref[...], preferred_element_type=jnp.float32)
    h = jnp.maximum(h + b1_ref[...], 0.0).astype(jnp.bfloat16)      # (960, 32)

    a_even = h[0:480].reshape(30, 16, 32)      # a1[y, 2u,   :]
    a_odd = h[480:960].reshape(30, 16, 32)     # a1[y, 2u+1, :]
    # u -> u+1 shifted copies; the wrapped slot lands in the u=15 pad column.
    a_even1 = jnp.concatenate([a_even[:, 1:, :], a_even[:, :1, :]], axis=1)
    a_odd1 = jnp.concatenate([a_odd[:, 1:, :], a_odd[:, :1, :]], axis=1)

    b2 = b2_ref[...]

    def conv2_relu(g):                         # g: (30, 16, 96), lanes = (dj, cin)
        acc = jnp.zeros((448, 32), jnp.float32)
        for di in range(3):                    # 3 dots of (448,96)@(96,32)
            lhs = g[di:di + 28].reshape(448, 96)   # tile-aligned (free) collapse
            acc = acc + jnp.dot(lhs, w2_ref[di],
                                preferred_element_type=jnp.float32)
        return jnp.maximum(acc + b2, 0.0)

    r_even = conv2_relu(jnp.concatenate([a_even, a_odd, a_even1], axis=-1))
    r_odd = conv2_relu(jnp.concatenate([a_odd, a_even1, a_odd1], axis=-1))

    m = jnp.maximum(r_even, r_odd)                     # max-pool over x
    m = jnp.max(m.reshape(14, 2, 16, 32), axis=1)      # max-pool over y
    o_ref[0] = m.astype(o_ref.dtype)                   # (14, 16, 32), u=14,15 pad


def conv_stage(patches1, w1, b1, w2, b2):
    bsz = patches1.shape[0]
    return pl.pallas_call(
        _conv_stage_kernel,
        out_shape=jax.ShapeDtypeStruct((bsz, 14, 16, 32), jnp.bfloat16),
        grid=(bsz,),
        in_specs=[
            pl.BlockSpec((1, 960, 27), lambda b: (b, 0, 0)),
            pl.BlockSpec((27, 32), lambda b: (0, 0)),
            pl.BlockSpec((1, 32), lambda b: (0, 0)),
            pl.BlockSpec((3, 96, 32), lambda b: (0, 0, 0)),
            pl.BlockSpec((1, 32), lambda b: (0, 0)),
        ],
        out_specs=pl.BlockSpec((1, 14, 16, 32), lambda b: (b, 0, 0, 0)),
        compiler_params=pltpu.CompilerParams(
            dimension_semantics=("parallel",)),
    )(patches1, w1, b1, w2, b2)


# -----------------------------------------------------------------------------
# Kernel 2: fc1 + relu + BatchNorm1d (training-mode batch stats) + fc2,
# pipelined over the K=6272 reduction so the 1.6 MB fc1 weight is streamed.
# The batch dimension is never tiled (BN statistics stay exact).
# -----------------------------------------------------------------------------
def _fc_head_kernel(x_ref, w1_ref, b1_ref, g_ref, be_ref, w2_ref, b2_ref,
                    o_ref, acc_ref, *, eps):
    @pl.when(pl.program_id(0) == 0)
    def _():
        acc_ref[...] = jnp.zeros_like(acc_ref)

    acc_ref[...] += jnp.dot(x_ref[...], w1_ref[...],
                            preferred_element_type=jnp.float32)

    @pl.when(pl.program_id(0) == pl.num_programs(0) - 1)
    def _():
        h = jnp.maximum(acc_ref[...] + b1_ref[...], 0.0)              # fc1+relu
        mean = jnp.mean(h, axis=0, keepdims=True)                     # BN (train)
        var = jnp.mean(jnp.square(h - mean), axis=0, keepdims=True)   # biased var
        y = (h - mean) * jax.lax.rsqrt(var + eps)
        y = y * g_ref[...] + be_ref[...]
        out = jnp.dot(y.astype(jnp.bfloat16), w2_ref[...],
                      preferred_element_type=jnp.float32)             # fc2
        o_ref[...] = (out + b2_ref[...]).astype(o_ref.dtype)


def fc_head(x, w1, b1, gamma, beta, w2, b2, *, tk=896, eps=1e-5):
    bsz, k = x.shape
    n1 = w1.shape[1]
    n2 = w2.shape[1]
    assert k % tk == 0 and tk % 128 == 0
    return pl.pallas_call(
        functools.partial(_fc_head_kernel, eps=eps),
        out_shape=jax.ShapeDtypeStruct((bsz, n2), jnp.float32),
        grid=(k // tk,),
        in_specs=[
            pl.BlockSpec((bsz, tk), lambda i: (0, i)),
            pl.BlockSpec((tk, n1), lambda i: (i, 0)),
            pl.BlockSpec((1, n1), lambda i: (0, 0)),
            pl.BlockSpec((1, n1), lambda i: (0, 0)),
            pl.BlockSpec((1, n1), lambda i: (0, 0)),
            pl.BlockSpec((n1, n2), lambda i: (0, 0)),
            pl.BlockSpec((1, n2), lambda i: (0, 0)),
        ],
        out_specs=pl.BlockSpec((bsz, n2), lambda i: (0, 0)),
        scratch_shapes=[pltpu.VMEM((bsz, n1), jnp.float32)],
        compiler_params=pltpu.CompilerParams(
            dimension_semantics=("arbitrary",)),
    )(x, w1, b1, gamma, beta, w2, b2)


# -----------------------------------------------------------------------------
# Parameters: PyTorch-shaped synthetic init + one-time kernel re-layout.
# -----------------------------------------------------------------------------
def init_params(key):
    ks = jax.random.split(key, 8)

    def w(k, shape, fan_in):
        return jax.random.normal(k, shape, jnp.float32) / jnp.sqrt(fan_in)

    return {
        "conv1_w": w(ks[0], (32, 3, 3, 3), 27),
        "conv1_b": w(ks[1], (32,), 27),
        "conv2_w": w(ks[2], (32, 32, 3, 3), 288),
        "conv2_b": w(ks[3], (32,), 288),
        "fc1_w": w(ks[4], (128, 6272), 6272),
        "fc1_b": w(ks[5], (128,), 6272),
        "fc2_w": w(ks[6], (100, 128), 128),
        "fc2_b": w(ks[7], (100,), 128),
        "bn1_gamma": jnp.ones((128,), jnp.float32),
        "bn1_beta": jnp.zeros((128,), jnp.float32),
    }


def prepare_params(raw):
    """One-time re-layout / bf16 casts, hoisted out of the jitted forward."""
    # conv1 OIHW -> (kh*kw*cin, cout); rows ordered (kh, kw, cin) = patch order.
    w1 = (jnp.transpose(raw["conv1_w"], (2, 3, 1, 0))
             .reshape(27, 32).astype(jnp.bfloat16))
    # conv2 OIHW -> (kh, kw*cin, cout); within one kh, rows ordered (kw, cin)
    # to match the in-kernel channel stacking of the three kw planes.
    w2 = (jnp.transpose(raw["conv2_w"], (2, 3, 1, 0))
             .reshape(3, 96, 32).astype(jnp.bfloat16))
    # fc1 (128, 6272) with NCHW-flatten columns -> (6272, 128) rows re-ordered
    # to the (h, w, c) flatten produced by the fused conv kernel.
    fc1 = (raw["fc1_w"].T.reshape(32, 14, 14, 128)
              .transpose(1, 2, 0, 3).reshape(6272, 128).astype(jnp.bfloat16))
    return {
        "w1": w1, "b1": raw["conv1_b"].reshape(1, -1),
        "w2": w2, "b2": raw["conv2_b"].reshape(1, -1),
        "fc1_w": fc1, "fc1_b": raw["fc1_b"].reshape(1, -1),
        "bn1_gamma": raw["bn1_gamma"].reshape(1, -1),
        "bn1_beta": raw["bn1_beta"].reshape(1, -1),
        "fc2_w": raw["fc2_w"].T.astype(jnp.bfloat16),
        "fc2_b": raw["fc2_b"].reshape(1, -1),
    }


# -----------------------------------------------------------------------------
# Forward pass (all_gather/cat are identities at world_size = 1).
# -----------------------------------------------------------------------------
@jax.jit
def net_forward(x_nchw, p):
    bsz = x_nchw.shape[0]
    x = jnp.transpose(x_nchw, (0, 2, 3, 1)).astype(jnp.bfloat16)      # NHWC

    # conv1 im2col (data movement only); rows ordered (x-parity, y, x//2),
    # with the x//2 axis zero-padded 15 -> 16 so in-kernel reshapes stay
    # sublane-tile aligned.
    cols = [x[:, i:i + 30, j:j + 30, :] for i in range(3) for j in range(3)]
    pat = jnp.stack(cols, axis=3).reshape(bsz, 30, 30, 27)
    pat = jnp.stack([pat[:, :, 0::2, :], pat[:, :, 1::2, :]], axis=1)
    pat = jnp.pad(pat, ((0, 0), (0, 0), (0, 0), (0, 1), (0, 0)))
    patches1 = pat.reshape(bsz, 960, 27)

    # conv1 + relu + conv2 + relu + 2x2 max-pool, one fused kernel.
    pooled = conv_stage(patches1, p["w1"], p["b1"], p["w2"], p["b2"])
    # drop the two pad columns, flatten in (h, w, c) order (fc1 weight rows
    # were permuted to match, so no activation transpose is needed).
    xf = pooled[:, :, :14, :].reshape(bsz, 6272)

    # fc1 + relu + bn1 + fc2, K-pipelined.
    return fc_head(xf, p["fc1_w"], p["fc1_b"], p["bn1_gamma"], p["bn1_beta"],
                   p["fc2_w"], p["fc2_b"])


# -----------------------------------------------------------------------------
# Pure-JAX reference (same bf16 rounding points) for a loose correctness check.
# -----------------------------------------------------------------------------
def reference_forward(x_nchw, raw, eps=1e-5):
    def b16(a):
        return a.astype(jnp.bfloat16).astype(jnp.float32)

    x = b16(x_nchw)
    c1 = jax.lax.conv_general_dilated(x, b16(raw["conv1_w"]), (1, 1), "VALID")
    c1 = jnp.maximum(c1 + raw["conv1_b"][None, :, None, None], 0.0)
    c1 = b16(c1)
    c2 = jax.lax.conv_general_dilated(c1, b16(raw["conv2_w"]), (1, 1), "VALID")
    c2 = jnp.maximum(c2 + raw["conv2_b"][None, :, None, None], 0.0)
    b, c, hh, ww = c2.shape
    pooled = c2.reshape(b, c, hh // 2, 2, ww // 2, 2).max(axis=(3, 5))
    xf = b16(pooled.reshape(b, -1))
    h1 = jnp.maximum(xf @ b16(raw["fc1_w"]).T + raw["fc1_b"], 0.0)
    mean = h1.mean(axis=0, keepdims=True)
    var = ((h1 - mean) ** 2).mean(axis=0, keepdims=True)
    y = (h1 - mean) * jax.lax.rsqrt(var + eps)
    y = y * raw["bn1_gamma"] + raw["bn1_beta"]
    return b16(y) @ b16(raw["fc2_w"]).T + raw["fc2_b"]


if __name__ == "__main__":
    key = jax.random.PRNGKey(0)
    k_x, k_p = jax.random.split(key)
    # fc1's in_features 6272 = 32*14*14 implies 3x32x32 input images; batch 2.
    x = jax.random.normal(k_x, (2, 3, 32, 32), jnp.float32)
    raw = init_params(k_p)
    params = prepare_params(raw)

    out = jax.block_until_ready(net_forward(x, params))
    assert out.shape == (2, 100) and out.dtype == jnp.float32

    ref = jax.block_until_ready(reference_forward(x, raw))
    max_err = float(jnp.max(jnp.abs(out - ref)))
    assert bool(jnp.allclose(out, ref, rtol=5e-2, atol=5e-2)), max_err

    print("KERNEL_OK")
</pallas_src>

<mosaic_0001>
module attributes {stable_mosaic.version = 11 : i64} {
  func.func @_conv_stage_kernel(%arg0: i32, %arg1: memref<1x960x27xbf16, #tpu.memory_space<vmem>>, %arg2: memref<27x32xbf16, #tpu.memory_space<vmem>>, %arg3: memref<1x32xf32, #tpu.memory_space<vmem>>, %arg4: memref<3x96x32xbf16, #tpu.memory_space<vmem>>, %arg5: memref<1x32xf32, #tpu.memory_space<vmem>>, %arg6: memref<1x14x16x32xbf16, #tpu.memory_space<vmem>>) attributes {dimension_semantics = [#tpu.dimension_semantics<parallel>], iteration_bounds = array<i64: 2>, scalar_prefetch = 0 : i64, scratch_operands = 0 : i64, tpu.core_type = #tpu.core_type<tc>, window_params = [{transform_indices = @transform_0, window_bounds = array<i64: 1, 960, 27>}, {pipeline_mode = #tpu.pipeline_mode<synchronous>, transform_indices = @transform_1, window_bounds = array<i64: 27, 32>}, {pipeline_mode = #tpu.pipeline_mode<synchronous>, transform_indices = @transform_2, window_bounds = array<i64: 1, 32>}, {pipeline_mode = #tpu.pipeline_mode<synchronous>, transform_indices = @transform_3, window_bounds = array<i64: 3, 96, 32>}, {pipeline_mode = #tpu.pipeline_mode<synchronous>, transform_indices = @transform_4, window_bounds = array<i64: 1, 32>}, {transform_indices = @transform_5, window_bounds = array<i64: 1, 14, 16, 32>}]} {
    %c0 = arith.constant 0 : index
    %c0_0 = arith.constant 0 : index
    %c0_1 = arith.constant 0 : index
    %0 = vector.load %arg1[%c0, %c0_0, %c0_1] : memref<1x960x27xbf16, #tpu.memory_space<vmem>>, vector<1x960x27xbf16>
    %1 = vector.shape_cast %0 : vector<1x960x27xbf16> to vector<960x27xbf16>
    %c0_2 = arith.constant 0 : index
    %c0_3 = arith.constant 0 : index
    %2 = vector.load %arg2[%c0_2, %c0_3] : memref<27x32xbf16, #tpu.memory_space<vmem>>, vector<27x32xbf16>
    %cst = arith.constant dense<0.000000e+00> : vector<960x32xf32>
    %3 = tpu.matmul %1, %2, %cst {dimension_numbers = #tpu.dot_dimension_numbers<[1], [0], [0], [1], [0, 0, 1, 1], [], []>} : vector<960x27xbf16>, vector<27x32xbf16>, vector<960x32xf32> -> vector<960x32xf32>
    %c0_4 = arith.constant 0 : index
    %c0_5 = arith.constant 0 : index
    %4 = vector.load %arg3[%c0_4, %c0_5] : memref<1x32xf32, #tpu.memory_space<vmem>>, vector<1x32xf32>
    %5 = vector.broadcast %4 : vector<1x32xf32> to vector<960x32xf32>
    %6 = arith.addf %3, %5 : vector<960x32xf32>
    %cst_6 = arith.constant 0.000000e+00 : f32
    %7 = vector.broadcast %cst_6 : f32 to vector<960x32xf32>
    %8 = arith.maximumf %6, %7 : vector<960x32xf32>
    %9 = arith.truncf %8 : vector<960x32xf32> to vector<960x32xbf16>
    %10 = vector.extract_strided_slice %9 {offsets = [0, 0], sizes = [480, 32], strides = [1, 1]} : vector<960x32xbf16> to vector<480x32xbf16>
    %11 = vector.shape_cast %10 : vector<480x32xbf16> to vector<30x16x32xbf16>
    %12 = vector.extract_strided_slice %9 {offsets = [480, 0], sizes = [480, 32], strides = [1, 1]} : vector<960x32xbf16> to vector<480x32xbf16>
    %13 = vector.shape_cast %12 : vector<480x32xbf16> to vector<30x16x32xbf16>
    %14 = vector.extract_strided_slice %11 {offsets = [0, 1, 0], sizes = [30, 15, 32], strides = [1, 1, 1]} : vector<30x16x32xbf16> to vector<30x15x32xbf16>
    %15 = vector.extract_strided_slice %11 {offsets = [0, 0, 0], sizes = [30, 1, 32], strides = [1, 1, 1]} : vector<30x16x32xbf16> to vector<30x1x32xbf16>
    %16 = tpu.concatenate %14, %15 in 1 : vector<30x15x32xbf16>, vector<30x1x32xbf16> -> vector<30x16x32xbf16>
    %17 = vector.extract_strided_slice %13 {offsets = [0, 1, 0], sizes = [30, 15, 32], strides = [1, 1, 1]} : vector<30x16x32xbf16> to vector<30x15x32xbf16>
    %18 = vector.extract_strided_slice %13 {offsets = [0, 0, 0], sizes = [30, 1, 32], strides = [1, 1, 1]} : vector<30x16x32xbf16> to vector<30x1x32xbf16>
    %19 = tpu.concatenate %17, %18 in 1 : vector<30x15x32xbf16>, vector<30x1x32xbf16> -> vector<30x16x32xbf16>
    %c0_7 = arith.constant 0 : index
    %c0_8 = arith.constant 0 : index
    %20 = vector.load %arg5[%c0_7, %c0_8] : memref<1x32xf32, #tpu.memory_space<vmem>>, vector<1x32xf32>
    %21 = tpu.concatenate %11, %13, %16 in 2 : vector<30x16x32xbf16>, vector<30x16x32xbf16>, vector<30x16x32xbf16> -> vector<30x16x96xbf16>
    %cst_9 = arith.constant 0.000000e+00 : f32
    %22 = vector.broadcast %cst_9 : f32 to vector<448x32xf32>
    %23 = vector.extract_strided_slice %21 {offsets = [0, 0, 0], sizes = [28, 16, 96], strides = [1, 1, 1]} : vector<30x16x96xbf16> to vector<28x16x96xbf16>
    %24 = vector.shape_cast %23 : vector<28x16x96xbf16> to vector<448x96xbf16>
    %c0_10 = arith.constant 0 : index
    %c0_11 = arith.constant 0 : index
    %c0_12 = arith.constant 0 : index
    %25 = vector.load %arg4[%c0_10, %c0_11, %c0_12] : memref<3x96x32xbf16, #tpu.memory_space<vmem>>, vector<1x96x32xbf16>
    %26 = vector.shape_cast %25 : vector<1x96x32xbf16> to vector<96x32xbf16>
    %cst_13 = arith.constant dense<0.000000e+00> : vector<448x32xf32>
    %27 = tpu.matmul %24, %26, %cst_13 {dimension_numbers = #tpu.dot_dimension_numbers<[1], [0], [0], [1], [0, 0, 1, 1], [], []>} : vector<448x96xbf16>, vector<96x32xbf16>, vector<448x32xf32> -> vector<448x32xf32>
    %28 = arith.addf %22, %27 : vector<448x32xf32>
    %29 = vector.extract_strided_slice %21 {offsets = [1, 0, 0], sizes = [28, 16, 96], strides = [1, 1, 1]} : vector<30x16x96xbf16> to vector<28x16x96xbf16>
    %30 = vector.shape_cast %29 : vector<28x16x96xbf16> to vector<448x96xbf16>
    %c1 = arith.constant 1 : index
    %c0_14 = arith.constant 0 : index
    %c0_15 = arith.constant 0 : index
    %31 = vector.load %arg4[%c1, %c0_14, %c0_15] : memref<3x96x32xbf16, #tpu.memory_space<vmem>>, vector<1x96x32xbf16>
    %32 = vector.shape_cast %31 : vector<1x96x32xbf16> to vector<96x32xbf16>
    %cst_16 = arith.constant dense<0.000000e+00> : vector<448x32xf32>
    %33 = tpu.matmul %30, %32, %cst_16 {dimension_numbers = #tpu.dot_dimension_numbers<[1], [0], [0], [1], [0, 0, 1, 1], [], []>} : vector<448x96xbf16>, vector<96x32xbf16>, vector<448x32xf32> -> vector<448x32xf32>
    %34 = arith.addf %28, %33 : vector<448x32xf32>
    %35 = vector.extract_strided_slice %21 {offsets = [2, 0, 0], sizes = [28, 16, 96], strides = [1, 1, 1]} : vector<30x16x96xbf16> to vector<28x16x96xbf16>
    %36 = vector.shape_cast %35 : vector<28x16x96xbf16> to vector<448x96xbf16>
    %c2 = arith.constant 2 : index
    %c0_17 = arith.constant 0 : index
    %c0_18 = arith.constant 0 : index
    %37 = vector.load %arg4[%c2, %c0_17, %c0_18] : memref<3x96x32xbf16, #tpu.memory_space<vmem>>, vector<1x96x32xbf16>
    %38 = vector.shape_cast %37 : vector<1x96x32xbf16> to vector<96x32xbf16>
    %cst_19 = arith.constant dense<0.000000e+00> : vector<448x32xf32>
    %39 = tpu.matmul %36, %38, %cst_19 {dimension_numbers = #tpu.dot_dimension_numbers<[1], [0], [0], [1], [0, 0, 1, 1], [], []>} : vector<448x96xbf16>, vector<96x32xbf16>, vector<448x32xf32> -> vector<448x32xf32>
    %40 = arith.addf %34, %39 : vector<448x32xf32>
    %41 = vector.broadcast %20 : vector<1x32xf32> to vector<448x32xf32>
    %42 = arith.addf %40, %41 : vector<448x32xf32>
    %cst_20 = arith.constant 0.000000e+00 : f32
    %43 = vector.broadcast %cst_20 : f32 to vector<448x32xf32>
    %44 = arith.maximumf %42, %43 : vector<448x32xf32>
    %45 = tpu.concatenate %13, %16, %19 in 2 : vector<30x16x32xbf16>, vector<30x16x32xbf16>, vector<30x16x32xbf16> -> vector<30x16x96xbf16>
    %cst_21 = arith.constant 0.000000e+00 : f32
    %46 = vector.broadcast %cst_21 : f32 to vector<448x32xf32>
    %47 = vector.extract_strided_slice %45 {offsets = [0, 0, 0], sizes = [28, 16, 96], strides = [1, 1, 1]} : vector<30x16x96xbf16> to vector<28x16x96xbf16>
    %48 = vector.shape_cast %47 : vector<28x16x96xbf16> to vector<448x96xbf16>
    %c0_22 = arith.constant 0 : index
    %c0_23 = arith.constant 0 : index
    %c0_24 = arith.constant 0 : index
    %49 = vector.load %arg4[%c0_22, %c0_23, %c0_24] : memref<3x96x32xbf16, #tpu.memory_space<vmem>>, vector<1x96x32xbf16>
    %50 = vector.shape_cast %49 : vector<1x96x32xbf16> to vector<96x32xbf16>
    %cst_25 = arith.constant dense<0.000000e+00> : vector<448x32xf32>
    %51 = tpu.matmul %48, %50, %cst_25 {dimension_numbers = #tpu.dot_dimension_numbers<[1], [0], [0], [1], [0, 0, 1, 1], [], []>} : vector<448x96xbf16>, vector<96x32xbf16>, vector<448x32xf32> -> vector<448x32xf32>
    %52 = arith.addf %46, %51 : vector<448x32xf32>
    %53 = vector.extract_strided_slice %45 {offsets = [1, 0, 0], sizes = [28, 16, 96], strides = [1, 1, 1]} : vector<30x16x96xbf16> to vector<28x16x96xbf16>
    %54 = vector.shape_cast %53 : vector<28x16x96xbf16> to vector<448x96xbf16>
    %c1_26 = arith.constant 1 : index
    %c0_27 = arith.constant 0 : index
    %c0_28 = arith.constant 0 : index
    %55 = vector.load %arg4[%c1_26, %c0_27, %c0_28] : memref<3x96x32xbf16, #tpu.memory_space<vmem>>, vector<1x96x32xbf16>
    %56 = vector.shape_cast %55 : vector<1x96x32xbf16> to vector<96x32xbf16>
    %cst_29 = arith.constant dense<0.000000e+00> : vector<448x32xf32>
    %57 = tpu.matmul %54, %56, %cst_29 {dimension_numbers = #tpu.dot_dimension_numbers<[1], [0], [0], [1], [0, 0, 1, 1], [], []>} : vector<448x96xbf16>, vector<96x32xbf16>, vector<448x32xf32> -> vector<448x32xf32>
    %58 = arith.addf %52, %57 : vector<448x32xf32>
    %59 = vector.extract_strided_slice %45 {offsets = [2, 0, 0], sizes = [28, 16, 96], strides = [1, 1, 1]} : vector<30x16x96xbf16> to vector<28x16x96xbf16>
    %60 = vector.shape_cast %59 : vector<28x16x96xbf16> to vector<448x96xbf16>
    %c2_30 = arith.constant 2 : index
    %c0_31 = arith.constant 0 : index
    %c0_32 = arith.constant 0 : index
    %61 = vector.load %arg4[%c2_30, %c0_31, %c0_32] : memref<3x96x32xbf16, #tpu.memory_space<vmem>>, vector<1x96x32xbf16>
    %62 = vector.shape_cast %61 : vector<1x96x32xbf16> to vector<96x32xbf16>
    %cst_33 = arith.constant dense<0.000000e+00> : vector<448x32xf32>
    %63 = tpu.matmul %60, %62, %cst_33 {dimension_numbers = #tpu.dot_dimension_numbers<[1], [0], [0], [1], [0, 0, 1, 1], [], []>} : vector<448x96xbf16>, vector<96x32xbf16>, vector<448x32xf32> -> vector<448x32xf32>
    %64 = arith.addf %58, %63 : vector<448x32xf32>
    %65 = vector.broadcast %20 : vector<1x32xf32> to vector<448x32xf32>
    %66 = arith.addf %64, %65 : vector<448x32xf32>
    %cst_34 = arith.constant 0.000000e+00 : f32
    %67 = vector.broadcast %cst_34 : f32 to vector<448x32xf32>
    %68 = arith.maximumf %66, %67 : vector<448x32xf32>
    %69 = arith.maximumf %44, %68 : vector<448x32xf32>
    %70 = vector.shape_cast %69 : vector<448x32xf32> to vector<14x2x16x32xf32>
    %cst_35 = arith.constant dense<0xFF800000> : vector<14x16x32xf32>
    %71 = vector.multi_reduction <maximumf>, %70, %cst_35 [1] : vector<14x2x16x32xf32> to vector<14x16x32xf32>
    %72 = arith.truncf %71 : vector<14x16x32xf32> to vector<14x16x32xbf16>
    %c0_36 = arith.constant 0 : index
    %c0_37 = arith.constant 0 : index
    %c0_38 = arith.constant 0 : index
    %c0_39 = arith.constant 0 : index
    %73 = vector.load %arg6[%c0_36, %c0_37, %c0_38, %c0_39] : memref<1x14x16x32xbf16, #tpu.memory_space<vmem>>, vector<1x14x16x32xbf16>
    %74 = vector.shape_cast %73 : vector<1x14x16x32xbf16> to vector<14x16x32xbf16>
    %75 = vector.shape_cast %72 : vector<14x16x32xbf16> to vector<1x14x16x32xbf16>
    tpu.vector_store %arg6[%c0_36, %c0_37, %c0_38, %c0_39], %75 {strides = array<i32>} : memref<1x14x16x32xbf16, #tpu.memory_space<vmem>>, vector<1x14x16x32xbf16>,
    return
  }
  func.func @transform_0(%arg0: i32) -> (i32, i32, i32) {
    %c0_i32 = arith.constant 0 : i32
    %c0_i32_0 = arith.constant 0 : i32
    %c0_i32_1 = arith.constant 0 : i32
    return %arg0, %c0_i32, %c0_i32_0 : i32, i32, i32
  }
  func.func @transform_1(%arg0: i32) -> (i32, i32) {
    %c0_i32 = arith.constant 0 : i32
    %c0_i32_0 = arith.constant 0 : i32
    %c0_i32_1 = arith.constant 0 : i32
    return %c0_i32, %c0_i32_0 : i32, i32
  }
  func.func @transform_2(%arg0: i32) -> (i32, i32) {
    %c0_i32 = arith.constant 0 : i32
    %c0_i32_0 = arith.constant 0 : i32
    %c0_i32_1 = arith.constant 0 : i32
    return %c0_i32, %c0_i32_0 : i32, i32
  }
  func.func @transform_3(%arg0: i32) -> (i32, i32, i32) {
    %c0_i32 = arith.constant 0 : i32
    %c0_i32_0 = arith.constant 0 : i32
    %c0_i32_1 = arith.constant 0 : i32
    %c0_i32_2 = arith.constant 0 : i32
    return %c0_i32, %c0_i32_0, %c0_i32_1 : i32, i32, i32
  }
  func.func @transform_4(%arg0: i32) -> (i32, i32) {
    %c0_i32 = arith.constant 0 : i32
    %c0_i32_0 = arith.constant 0 : i32
    %c0_i32_1 = arith.constant 0 : i32
    return %c0_i32, %c0_i32_0 : i32, i32
  }
  func.func @transform_5(%arg0: i32) -> (i32, i32, i32, i32) {
    %c0_i32 = arith.constant 0 : i32
    %c0_i32_0 = arith.constant 0 : i32
    %c0_i32_1 = arith.constant 0 : i32
    %c0_i32_2 = arith.constant 0 : i32
    return %arg0, %c0_i32, %c0_i32_0, %c0_i32_1 : i32, i32, i32, i32
  }
}

module attributes {stable_mosaic.version = 11 : i64} {
  func.func @_fc_head_kernel(%arg0: i32, %arg1: memref<2x896xbf16, #tpu.memory_space<vmem>>, %arg2: memref<896x128xbf16, #tpu.memory_space<vmem>>, %arg3: memref<1x128xf32, #tpu.memory_space<vmem>>, %arg4: memref<1x128xf32, #tpu.memory_space<vmem>>, %arg5: memref<1x128xf32, #tpu.memory_space<vmem>>, %arg6: memref<128x100xbf16, #tpu.memory_space<vmem>>, %arg7: memref<1x100xf32, #tpu.memory_space<vmem>>, %arg8: memref<2x100xf32, #tpu.memory_space<vmem>>, %arg9: memref<2x128xf32, #tpu.memory_space<vmem>>) attributes {dimension_semantics = [#tpu.dimension_semantics<arbitrary>], iteration_bounds = array<i64: 7>, scalar_prefetch = 0 : i64, scratch_operands = 1 : i64, tpu.core_type = #tpu.core_type<tc>, window_params = [{transform_indices = @transform_0, window_bounds = array<i64: 2, 896>}, {transform_indices = @transform_1, window_bounds = array<i64: 896, 128>}, {pipeline_mode = #tpu.pipeline_mode<synchronous>, transform_indices = @transform_2, window_bounds = array<i64: 1, 128>}, {pipeline_mode = #tpu.pipeline_mode<synchronous>, transform_indices = @transform_3, window_bounds = array<i64: 1, 128>}, {pipeline_mode = #tpu.pipeline_mode<synchronous>, transform_indices = @transform_4, window_bounds = array<i64: 1, 128>}, {pipeline_mode = #tpu.pipeline_mode<synchronous>, transform_indices = @transform_5, window_bounds = array<i64: 128, 100>}, {pipeline_mode = #tpu.pipeline_mode<synchronous>, transform_indices = @transform_6, window_bounds = array<i64: 1, 100>}, {pipeline_mode = #tpu.pipeline_mode<synchronous>, transform_indices = @transform_7, window_bounds = array<i64: 2, 100>}]} {
    %c0_i32 = arith.constant 0 : i32
    %0 = arith.cmpi eq, %arg0, %c0_i32 : i32
    %1 = arith.extui %0 : i1 to i32
    %c0_i32_0 = arith.constant 0 : i32
    %2 = arith.cmpi ne, %1, %c0_i32_0 : i32
    scf.if %2 {
      %cst_9 = arith.constant 0.000000e+00 : f32
      %12 = vector.broadcast %cst_9 : f32 to vector<2x128xf32>
      %c0_10 = arith.constant 0 : index
      %c0_11 = arith.constant 0 : index
      %13 = vector.load %arg9[%c0_10, %c0_11] : memref<2x128xf32, #tpu.memory_space<vmem>>, vector<2x128xf32>
      tpu.vector_store %arg9[%c0_10, %c0_11], %12 {strides = array<i32>} : memref<2x128xf32, #tpu.memory_space<vmem>>, vector<2x128xf32>,
    } else {
    }
    %c0 = arith.constant 0 : index
    %c0_1 = arith.constant 0 : index
    %3 = vector.load %arg9[%c0, %c0_1] : memref<2x128xf32, #tpu.memory_space<vmem>>, vector<2x128xf32>
    %c0_2 = arith.constant 0 : index
    %c0_3 = arith.constant 0 : index
    %4 = vector.load %arg1[%c0_2, %c0_3] : memref<2x896xbf16, #tpu.memory_space<vmem>>, vector<2x896xbf16>
    %c0_4 = arith.constant 0 : index
    %c0_5 = arith.constant 0 : index
    %5 = vector.load %arg2[%c0_4, %c0_5] : memref<896x128xbf16, #tpu.memory_space<vmem>>, vector<896x128xbf16>
    %cst = arith.constant dense<0.000000e+00> : vector<2x128xf32>
    %6 = tpu.matmul %4, %5, %cst {dimension_numbers = #tpu.dot_dimension_numbers<[1], [0], [0], [1], [0, 0, 1, 1], [], []>} : vector<2x896xbf16>, vector<896x128xbf16>, vector<2x128xf32> -> vector<2x128xf32>
    %7 = arith.addf %3, %6 : vector<2x128xf32>
    %c0_6 = arith.constant 0 : index
    %c0_7 = arith.constant 0 : index
    %8 = vector.load %arg9[%c0_6, %c0_7] : memref<2x128xf32, #tpu.memory_space<vmem>>, vector<2x128xf32>
    tpu.vector_store %arg9[%c0_6, %c0_7], %7 {strides = array<i32>} : memref<2x128xf32, #tpu.memory_space<vmem>>, vector<2x128xf32>,
    %c6_i32 = arith.constant 6 : i32
    %9 = arith.cmpi eq, %arg0, %c6_i32 : i32
    %10 = arith.extui %9 : i1 to i32
    %c0_i32_8 = arith.constant 0 : i32
    %11 = arith.cmpi ne, %10, %c0_i32_8 : i32
    scf.if %11 {
      %c0_9 = arith.constant 0 : index
      %c0_10 = arith.constant 0 : index
      %12 = vector.load %arg9[%c0_9, %c0_10] : memref<2x128xf32, #tpu.memory_space<vmem>>, vector<2x128xf32>
      %c0_11 = arith.constant 0 : index
      %c0_12 = arith.constant 0 : index
      %13 = vector.load %arg3[%c0_11, %c0_12] : memref<1x128xf32, #tpu.memory_space<vmem>>, vector<1x128xf32>
      %14 = vector.broadcast %13 : vector<1x128xf32> to vector<2x128xf32>
      %15 = arith.addf %12, %14 : vector<2x128xf32>
      %cst_13 = arith.constant 0.000000e+00 : f32
      %16 = vector.broadcast %cst_13 : f32 to vector<2x128xf32>
      %17 = arith.maximumf %15, %16 : vector<2x128xf32>
      %cst_14 = arith.constant dense<0.000000e+00> : vector<128xf32>
      %18 = vector.multi_reduction <add>, %17, %cst_14 [0] : vector<2x128xf32> to vector<128xf32>
      %19 = vector.shape_cast %18 : vector<128xf32> to vector<1x128xf32>
      %cst_15 = arith.constant 2.000000e+00 : f32
      %20 = vector.broadcast %cst_15 : f32 to vector<1x128xf32>
      %21 = arith.divf %19, %20 : vector<1x128xf32>
      %22 = vector.broadcast %21 : vector<1x128xf32> to vector<2x128xf32>
      %23 = arith.subf %17, %22 : vector<2x128xf32>
      %24 = arith.mulf %23, %23 : vector<2x128xf32>
      %cst_16 = arith.constant dense<0.000000e+00> : vector<128xf32>
      %25 = vector.multi_reduction <add>, %24, %cst_16 [0] : vector<2x128xf32> to vector<128xf32>
      %26 = vector.shape_cast %25 : vector<128xf32> to vector<1x128xf32>
      %cst_17 = arith.constant 2.000000e+00 : f32
      %27 = vector.broadcast %cst_17 : f32 to vector<1x128xf32>
      %28 = arith.divf %26, %27 : vector<1x128xf32>
      %29 = vector.broadcast %21 : vector<1x128xf32> to vector<2x128xf32>
      %30 = arith.subf %17, %29 : vector<2x128xf32>
      %cst_18 = arith.constant 9.99999974E-6 : f32
      %31 = vector.broadcast %cst_18 : f32 to vector<1x128xf32>
      %32 = arith.addf %28, %31 : vector<1x128xf32>
      %33 = math.rsqrt %32 : vector<1x128xf32>
      %34 = vector.broadcast %33 : vector<1x128xf32> to vector<2x128xf32>
      %35 = arith.mulf %30, %34 : vector<2x128xf32>
      %c0_19 = arith.constant 0 : index
      %c0_20 = arith.constant 0 : index
      %36 = vector.load %arg4[%c0_19, %c0_20] : memref<1x128xf32, #tpu.memory_space<vmem>>, vector<1x128xf32>
      %37 = vector.broadcast %36 : vector<1x128xf32> to vector<2x128xf32>
      %38 = arith.mulf %35, %37 : vector<2x128xf32>
      %c0_21 = arith.constant 0 : index
      %c0_22 = arith.constant 0 : index
      %39 = vector.load %arg5[%c0_21, %c0_22] : memref<1x128xf32, #tpu.memory_space<vmem>>, vector<1x128xf32>
      %40 = vector.broadcast %39 : vector<1x128xf32> to vector<2x128xf32>
      %41 = arith.addf %38, %40 : vector<2x128xf32>
      %42 = arith.truncf %41 : vector<2x128xf32> to vector<2x128xbf16>
      %c0_23 = arith.constant 0 : index
      %c0_24 = arith.constant 0 : index
      %43 = vector.load %arg6[%c0_23, %c0_24] : memref<128x100xbf16, #tpu.memory_space<vmem>>, vector<128x100xbf16>
      %cst_25 = arith.constant dense<0.000000e+00> : vector<2x100xf32>
      %44 = tpu.matmul %42, %43, %cst_25 {dimension_numbers = #tpu.dot_dimension_numbers<[1], [0], [0], [1], [0, 0, 1, 1], [], []>} : vector<2x128xbf16>, vector<128x100xbf16>, vector<2x100xf32> -> vector<2x100xf32>
      %c0_26 = arith.constant 0 : index
      %c0_27 = arith.constant 0 : index
      %45 = vector.load %arg7[%c0_26, %c0_27] : memref<1x100xf32, #tpu.memory_space<vmem>>, vector<1x100xf32>
      %46 = vector.broadcast %45 : vector<1x100xf32> to vector<2x100xf32>
      %47 = arith.addf %44, %46 : vector<2x100xf32>
      %c0_28 = arith.constant 0 : index
      %c0_29 = arith.constant 0 : index
      %48 = vector.load %arg8[%c0_28, %c0_29] : memref<2x100xf32, #tpu.memory_space<vmem>>, vector<2x100xf32>
      tpu.vector_store %arg8[%c0_28, %c0_29], %47 {strides = array<i32>} : memref<2x100xf32, #tpu.memory_space<vmem>>, vector<2x100xf32>,
    } else {
    }
    return
  }
  func.func @transform_0(%arg0: i32) -> (i32, i32) {
    %c0_i32 = arith.constant 0 : i32
    %c0_i32_0 = arith.constant 0 : i32
    return %c0_i32, %arg0 : i32, i32
  }
  func.func @transform_1(%arg0: i32) -> (i32, i32) {
    %c0_i32 = arith.constant 0 : i32
    %c0_i32_0 = arith.constant 0 : i32
    return %arg0, %c0_i32 : i32, i32
  }
  func.func @transform_2(%arg0: i32) -> (i32, i32) {
    %c0_i32 = arith.constant 0 : i32
    %c0_i32_0 = arith.constant 0 : i32
    %c0_i32_1 = arith.constant 0 : i32
    return %c0_i32, %c0_i32_0 : i32, i32
  }
  func.func @transform_3(%arg0: i32) -> (i32, i32) {
    %c0_i32 = arith.constant 0 : i32
    %c0_i32_0 = arith.constant 0 : i32
    %c0_i32_1 = arith.constant 0 : i32
    return %c0_i32, %c0_i32_0 : i32, i32
  }
  func.func @transform_4(%arg0: i32) -> (i32, i32) {
    %c0_i32 = arith.constant 0 : i32
    %c0_i32_0 = arith.constant 0 : i32
    %c0_i32_1 = arith.constant 0 : i32
    return %c0_i32, %c0_i32_0 : i32, i32
  }
  func.func @transform_5(%arg0: i32) -> (i32, i32) {
    %c0_i32 = arith.constant 0 : i32
    %c0_i32_0 = arith.constant 0 : i32
    %c0_i32_1 = arith.constant 0 : i32
    return %c0_i32, %c0_i32_0 : i32, i32
  }
  func.func @transform_6(%arg0: i32) -> (i32, i32) {
    %c0_i32 = arith.constant 0 : i32
    %c0_i32_0 = arith.constant 0 : i32
    %c0_i32_1 = arith.constant 0 : i32
    return %c0_i32, %c0_i32_0 : i32, i32
  }
  func.func @transform_7(%arg0: i32) -> (i32, i32) {
    %c0_i32 = arith.constant 0 : i32
    %c0_i32_0 = arith.constant 0 : i32
    %c0_i32_1 = arith.constant 0 : i32
    return %c0_i32, %c0_i32_0 : i32, i32
  }
}

</mosaic_0001>

<llo_original>
// kernel: net_forward.3
$region0: #{net_forward.3}
  #allocation0 [shape = 'u32[]', space=smem, size = 0x4, offset = 0x4, fixed_abs, tag = 'smem constant byte address 0x4 - core index']
  #allocation1 [shape = 'u32[72,128]{1,0:T(1,128)}', space=vmem, size = 0x9000, scoped, tag = 'internal scratch']
  #allocation2 [shape = 'f32[2,128]{1,0:T(2,128)}', space=vmem, size = 0x400, scoped, tag = 'scratch operand']
  %s0 = inlined_call_operand.vmem [shape: bf16[2,6272], index: 0, kind: input, shape index: {}]
  %s1 = inlined_call_operand.vmem [shape: bf16[6272,128], index: 1, kind: input, shape index: {}]
  %s2 = inlined_call_operand.vmem [shape: f32[1,128], index: 2, kind: input, shape index: {}]
  %s3 = inlined_call_operand.vmem [shape: f32[1,128], index: 3, kind: input, shape index: {}]
  %s4 = inlined_call_operand.vmem [shape: f32[1,128], index: 4, kind: input, shape index: {}]
  %s5 = inlined_call_operand.vmem [shape: bf16[128,100], index: 5, kind: input, shape index: {}]
  %s6 = inlined_call_operand.vmem [shape: f32[1,100], index: 6, kind: input, shape index: {}]
  %s7 = inlined_call_operand.hbm [shape: f32[2,100], index: 7, kind: output, shape index: {}]
  %s8 = sld [smem:[#allocation0]]
  $region69: #{net_forward.3} parent=0
    _
  %s10 = ssub.s32 1, %s8
  %s11 = scalar_select 0, %s10, %s8
  $region1: #{net_forward.3} parent=0
    #allocation3 [shape = 'u8[1024]{0}', space=vmem, size = 0x400, scoped, tag = 'output window, operand 0, single buffered']
    #allocation4 [shape = 's32[2]{0}', space=sflag, size = 0x8, scoped, tag = 'scoped memory for net_forward.3']
    %12 = vsyncpa [#allocation4], 0
    loop: start=0, step=1, limit=9
    $region2: #{net_forward.3} parent=1 // loop_pre_header
      _
    $region3: #{net_forward.3} parent=1 // loop_header
      %s14 = sphi 0, %s18
      %p15 = scmp.ge.s32.totalorder %s14, 9
      %s24 = sphi 0, %s26
      %s27 = sphi 0, %s24
      %s28 = sphi 0, %s27
      %s44 = sphi 0, %s28
      %s50 = sphi 0, %s52
      %s53 = sphi 0, %s50
      %s54 = sphi 0, %s53
      %s70 = sphi 0, %s54
      %s74 = sphi 0, %s74
      %s76 = sphi 0, %s74
      %s77 = sphi 0, %s76
      %s91 = sphi 0, %s77
      %s95 = sphi 0, %s95
      %s97 = sphi 0, %s95
      %s98 = sphi 0, %s97
      %s112 = sphi 0, %s98
      %s116 = sphi 0, %s116
      %s118 = sphi 0, %s116
      %s119 = sphi 0, %s118
      %s133 = sphi 0, %s119
      %s137 = sphi 0, %s137
      %s139 = sphi 0, %s137
      %s140 = sphi 0, %s139
      %s154 = sphi 0, %s140
      %s158 = sphi 0, %s158
      %s160 = sphi 0, %s158
      %s161 = sphi 0, %s160
      %s175 = sphi 0, %s161
      %s179 = sphi 0, %s179
      %s181 = sphi 0, %s179
      %s182 = sphi 0, %s181
      %s196 = sphi 0, %s182
    $region4: #{net_forward.3} parent=1 // loop_header_branch
      %17 = sbr.rel (%p15) target = $region8
    $region5: #{net_forward.3} parent=1 // loop_body
      %s19 = ssub.s32 %s14, 1
      %s20 = ssub.s32 %s14, 2
      %s21 = sadd.s32 %s14, 1
      %s22 = ssub.s32 %s14, %s21
      %p23 = scmp.eq.s32.totalorder %s22, 0
      %s25 = sadd.s32 %s24, 1
      %s26 = scalar_select %p23, %s24, %s25
      %p29 = pneg %p23
      %p30 = scmp.eq.s32.totalorder %s14, 6
      %p31 = por %p29, %p30
      %p32 = scmp.ne.s32.totalorder %s24, %s27
      %p33 = scmp.eq.s32.totalorder %s14, 0
      %p34 = por %p32, %p33
      %p35 = scmp.ne.s32.totalorder %s24, %s27
      %p36 = scmp.eq.s32.totalorder %s19, 6
      %p37 = por %p35, %p36
      %p38 = scmp.ne.s32.totalorder %s27, %s28
      %p39 = scmp.eq.s32.totalorder %s19, 0
      %p40 = por %p38, %p39
      %p41 = scmp.ne.s32.totalorder %s27, %s28
      %p42 = scmp.eq.s32.totalorder %s20, 6
      %p43 = por %p41, %p42
      %p45 = scmp.ne.s32.totalorder %s28, %s44
      %p46 = scmp.eq.s32.totalorder %s20, 0
      %p47 = por %p45, %p46
      %s48 = ssub.s32 %s14, %s21
      %p49 = scmp.eq.s32.totalorder %s48, 0
      %s51 = sadd.s32 %s50, 1
      %s52 = scalar_select %p49, %s50, %s51
      %p55 = pneg %p49
      %p56 = scmp.eq.s32.totalorder %s14, 6
      %p57 = por %p55, %p56
      %p58 = scmp.ne.s32.totalorder %s50, %s53
      %p59 = scmp.eq.s32.totalorder %s14, 0
      %p60 = por %p58, %p59
      %p61 = scmp.ne.s32.totalorder %s50, %s53
      %p62 = scmp.eq.s32.totalorder %s19, 6
      %p63 = por %p61, %p62
      %p64 = scmp.ne.s32.totalorder %s53, %s54
      %p65 = scmp.eq.s32.totalorder %s19, 0
      %p66 = por %p64, %p65
      %p67 = scmp.ne.s32.totalorder %s53, %s54
      %p68 = scmp.eq.s32.totalorder %s20, 6
      %p69 = por %p67, %p68
      %p71 = scmp.ne.s32.totalorder %s54, %s70
      %p72 = scmp.eq.s32.totalorder %s20, 0
      %p73 = por %p71, %p72
      %s75 = sadd.s32 %s74, 1
      %p78 = scmp.eq.s32.totalorder %s14, 6
      %p79 = scmp.ne.s32.totalorder %s74, %s76
      %p80 = scmp.eq.s32.totalorder %s14, 0
      %p81 = por %p79, %p80
      %p82 = scmp.ne.s32.totalorder %s74, %s76
      %p83 = scmp.eq.s32.totalorder %s19, 6
      %p84 = por %p82, %p83
      %p85 = scmp.ne.s32.totalorder %s76, %s77
      %p86 = scmp.eq.s32.totalorder %s19, 0
      %p87 = por %p85, %p86
      %p88 = scmp.ne.s32.totalorder %s76, %s77
      %p89 = scmp.eq.s32.totalorder %s20, 6
      %p90 = por %p88, %p89
      %p92 = scmp.ne.s32.totalorder %s77, %s91
      %p93 = scmp.eq.s32.totalorder %s20, 0
      %p94 = por %p92, %p93
      %s96 = sadd.s32 %s95, 1
      %p99 = scmp.eq.s32.totalorder %s14, 6
      %p100 = scmp.ne.s32.totalorder %s95, %s97
      %p101 = scmp.eq.s32.totalorder %s14, 0
      %p102 = por %p100, %p101
      %p103 = scmp.ne.s32.totalorder %s95, %s97
      %p104 = scmp.eq.s32.totalorder %s19, 6
      %p105 = por %p103, %p104
      %p106 = scmp.ne.s32.totalorder %s97, %s98
      %p107 = scmp.eq.s32.totalorder %s19, 0
      %p108 = por %p106, %p107
      %p109 = scmp.ne.s32.totalorder %s97, %s98
      %p110 = scmp.eq.s32.totalorder %s20, 6
      %p111 = por %p109, %p110
      %p113 = scmp.ne.s32.totalorder %s98, %s112
      %p114 = scmp.eq.s32.totalorder %s20, 0
      %p115 = por %p113, %p114
      %s117 = sadd.s32 %s116, 1
      %p120 = scmp.eq.s32.totalorder %s14, 6
      %p121 = scmp.ne.s32.totalorder %s116, %s118
      %p122 = scmp.eq.s32.totalorder %s14, 0
      %p123 = por %p121, %p122
      %p124 = scmp.ne.s32.totalorder %s116, %s118
      %p125 = scmp.eq.s32.totalorder %s19, 6
      %p126 = por %p124, %p125
      %p127 = scmp.ne.s32.totalorder %s118, %s119
      %p128 = scmp.eq.s32.totalorder %s19, 0
      %p129 = por %p127, %p128
      %p130 = scmp.ne.s32.totalorder %s118, %s119
      %p131 = scmp.eq.s32.totalorder %s20, 6
      %p132 = por %p130, %p131
      %p134 = scmp.ne.s32.totalorder %s119, %s133
      %p135 = scmp.eq.s32.totalorder %s20, 0
      %p136 = por %p134, %p135
      %s138 = sadd.s32 %s137, 1
      %p141 = scmp.eq.s32.totalorder %s14, 6
      %p142 = scmp.ne.s32.totalorder %s137, %s139
      %p143 = scmp.eq.s32.totalorder %s14, 0
      %p144 = por %p142, %p143
      %p145 = scmp.ne.s32.totalorder %s137, %s139
      %p146 = scmp.eq.s32.totalorder %s19, 6
      %p147 = por %p145, %p146
      %p148 = scmp.ne.s32.totalorder %s139, %s140
      %p149 = scmp.eq.s32.totalorder %s19, 0
      %p150 = por %p148, %p149
      %p151 = scmp.ne.s32.totalorder %s139, %s140
      %p152 = scmp.eq.s32.totalorder %s20, 6
      %p153 = por %p151, %p152
      %p155 = scmp.ne.s32.totalorder %s140, %s154
      %p156 = scmp.eq.s32.totalorder %s20, 0
      %p157 = por %p155, %p156
      %s159 = sadd.s32 %s158, 1
      %p162 = scmp.eq.s32.totalorder %s14, 6
      %p163 = scmp.ne.s32.totalorder %s158, %s160
      %p164 = scmp.eq.s32.totalorder %s14, 0
      %p165 = por %p163, %p164
      %p166 = scmp.ne.s32.totalorder %s158, %s160
      %p167 = scmp.eq.s32.totalorder %s19, 6
      %p168 = por %p166, %p167
      %p169 = scmp.ne.s32.totalorder %s160, %s161
      %p170 = scmp.eq.s32.totalorder %s19, 0
      %p171 = por %p169, %p170
      %p172 = scmp.ne.s32.totalorder %s160, %s161
      %p173 = scmp.eq.s32.totalorder %s20, 6
      %p174 = por %p172, %p173
      %p176 = scmp.ne.s32.totalorder %s161, %s175
      %p177 = scmp.eq.s32.totalorder %s20, 0
      %p178 = por %p176, %p177
      %s180 = sadd.s32 %s179, 1
      %p183 = scmp.eq.s32.totalorder %s14, 6
      %p184 = scmp.ne.s32.totalorder %s179, %s181
      %p185 = scmp.eq.s32.totalorder %s14, 0
      %p186 = por %p184, %p185
      %p187 = scmp.ne.s32.totalorder %s179, %s181
      %p188 = scmp.eq.s32.totalorder %s19, 6
      %p189 = por %p187, %p188
      %p190 = scmp.ne.s32.totalorder %s181, %s182
      %p191 = scmp.eq.s32.totalorder %s19, 0
      %p192 = por %p190, %p191
      %p193 = scmp.ne.s32.totalorder %s181, %s182
      %p194 = scmp.eq.s32.totalorder %s20, 6
      %p195 = por %p193, %p194
      %p197 = scmp.ne.s32.totalorder %s182, %s196
      %p198 = scmp.eq.s32.totalorder %s20, 0
      %p199 = por %p197, %p198
      %p200 = scmp.le.s32.totalorder 1, %s14
      %p201 = scmp.lt.s32.totalorder %s14, 8
      %p202 = pnand %p200, %p201
      %p203 = pneg %p202
      // Predicated region
      $region9: #{net_forward.3} parent=5 // pred_check
        _
      $region10: #{net_forward.3} parent=5 // pred_check_branch
        %205 = sbr.rel (%p202) target = $region12
      $region11: #{net_forward.3} parent=5 // pred_region
        %s206 = ssub.s32 %s14, 1
        // Predicated region
        $region13: #{net_forward.3} parent=11 // pred_check
          %p207 = pneg %p87
        $region14: #{net_forward.3} parent=11 // pred_check_branch
          %209 = sbr.rel (%p207) target = $region16
        $region15: #{net_forward.3} parent=11 // pred_region
          _
        $region16: #{net_forward.3} parent=11 // pred_fallthru
          _
        // Predicated region
        $region17: #{net_forward.3} parent=11 // pred_check
          %p210 = pneg %p108
        $region18: #{net_forward.3} parent=11 // pred_check_branch
          %212 = sbr.rel (%p210) target = $region20
        $region19: #{net_forward.3} parent=11 // pred_region
          _
        $region20: #{net_forward.3} parent=11 // pred_fallthru
          _
        // Predicated region
        $region21: #{net_forward.3} parent=11 // pred_check
          %p213 = pneg %p129
        $region22: #{net_forward.3} parent=11 // pred_check_branch
          %215 = sbr.rel (%p213) target = $region24
        $region23: #{net_forward.3} parent=11 // pred_region
          _
        $region24: #{net_forward.3} parent=11 // pred_fallthru
          _
        // Predicated region
        $region25: #{net_forward.3} parent=11 // pred_check
          %p216 = pneg %p150
        $region26: #{net_forward.3} parent=11 // pred_check_branch
          %218 = sbr.rel (%p216) target = $region28
        $region27: #{net_forward.3} parent=11 // pred_region
          _
        $region28: #{net_forward.3} parent=11 // pred_fallthru
          _
        // Predicated region
        $region29: #{net_forward.3} parent=11 // pred_check
          %p219 = pneg %p171
        $region30: #{net_forward.3} parent=11 // pred_check_branch
          %221 = sbr.rel (%p219) target = $region32
        $region31: #{net_forward.3} parent=11 // pred_region
          _
        $region32: #{net_forward.3} parent=11 // pred_fallthru
          _
      $region12: #{net_forward.3} parent=5 // pred_fallthru
        _
      %p222 = scmp.lt.s32.totalorder %s14, 7
      // Predicated region
      $region33: #{net_forward.3} parent=5 // pred_check
        %p223 = pneg %p222
      $region34: #{net_forward.3} parent=5 // pred_check_branch
        %225 = sbr.rel (%p223) target = $region36
      $region35: #{net_forward.3} parent=5 // pred_region
        // Predicated region
        $region37: #{net_forward.3} parent=35 // pred_check
          %p226 = pneg %p34
        $region38: #{net_forward.3} parent=35 // pred_check_branch
          %228 = sbr.rel (%p226) target = $region40
        $region39: #{net_forward.3} parent=35 // pred_region
          %s229 = smul.u32 7, %s14
          %p230 = scmp.lt.s32.totalorder %s229, 48
          %s231 = scalar_select %p230, %s229, 48
          %s232 = scalar_lea.vmem %s0, %s231
          %s233 = smul.u32 7, %s14
        $region40: #{net_forward.3} parent=35 // pred_fallthru
          _
        // Predicated region
        $region41: #{net_forward.3} parent=35 // pred_check
          %p234 = pneg %p60
        $region42: #{net_forward.3} parent=35 // pred_check_branch
          %236 = sbr.rel (%p234) target = $region44
        $region43: #{net_forward.3} parent=35 // pred_region
          %s237 = smul.u32 112, %s14
          %p238 = scmp.lt.s32.totalorder %s237, 783
          %s239 = scalar_select %p238, %s237, 783
          %s240 = smul.addr %s239, 4
          %s241 = scalar_lea.vmem %s1, %s240
          %s242 = smul.u32 112, %s14
        $region44: #{net_forward.3} parent=35 // pred_fallthru
          _
      $region36: #{net_forward.3} parent=5 // pred_fallthru
        _
      %p243 = scmp.le.s32.totalorder 1, %s14
      %p244 = scmp.lt.s32.totalorder %s14, 8
      %p245 = pnand %p243, %p244
      %p246 = pneg %p245
      // Predicated region
      $region45: #{net_forward.3} parent=5 // pred_check
        _
      $region46: #{net_forward.3} parent=5 // pred_check_branch
        %248 = sbr.rel (%p245) target = $region48
      $region47: #{net_forward.3} parent=5 // pred_region
        %s249 = ssub.s32 %s14, 1
        %s250 = smul.u32 7, %s19
        %p251 = scmp.lt.s32.totalorder %s250, 48
        %s252 = scalar_select %p251, %s250, 48
        %s253 = scalar_lea.vmem %s0, %s252
        %p254 = pneg %p40
        %p255 = pneg %p37
        %s256 = smul.u32 112, %s19
        %p257 = scmp.lt.s32.totalorder %s256, 783
        %s258 = scalar_select %p257, %s256, 783
        %s259 = smul.addr %s258, 4
        %s260 = scalar_lea.vmem %s1, %s259
        %p261 = pneg %p66
        %p262 = pneg %p63
        %p263 = pneg %p87
        %p264 = pneg %p84
        %p265 = pneg %p108
        %p266 = pneg %p105
        %p267 = pneg %p129
        %p268 = pneg %p126
        %p269 = pneg %p150
        %p270 = pneg %p147
        %p271 = pneg %p171
        %p272 = pneg %p168
        %p273 = pneg %p192
        %p274 = pneg %p189
        %s275 = smul.u32 7, %s19
        %p276 = scmp.lt.s32.totalorder %s275, 48
        %s277 = scalar_select %p276, %s275, 48
        %s278 = scalar_lea.vmem %s0, %s277
        %s279 = smul.u32 7, %s19
        %s280 = smul.u32 112, %s19
        %p281 = scmp.lt.s32.totalorder %s280, 783
        %s282 = scalar_select %p281, %s280, 783
        %s283 = smul.addr %s282, 4
        %s284 = scalar_lea.vmem %s1, %s283
        %s285 = smul.u32 112, %s19
        %p286 = scmp.eq.s32.totalorder %s19, 0
        // Predicated region
        $region49: #{net_forward.3} parent=47 // pred_check
          %p287 = pneg %p286
        $region50: #{net_forward.3} parent=47 // pred_check_branch
          %289 = sbr.rel (%p287) target = $region52
        $region51: #{net_forward.3} parent=47 // pred_region
          %290 = vst [vmem:[#allocation2] sm:$0x3] 0.0
        $region52: #{net_forward.3} parent=47 // pred_fallthru
          _
        %v291 = vld [vmem:[#allocation2] sm:$0x3]
        %v292 = vld [vmem:[%s278] sm:$0x7f]
        %v293 = vld [vmem:[%s284] sm:$0xf]
        %v294 = vld [vmem:[%s284 + $0x4] sm:$0xf]
        %v295 = vld [vmem:[%s284 + $0x8] sm:$0xf]
        %v296 = vld [vmem:[%s284 + $0xc] sm:$0xf]
        %v297 = vld [vmem:[%s284 + $0x10] sm:$0xf]
        %v298 = vld [vmem:[%s284 + $0x14] sm:$0xf]
        %v299 = vld [vmem:[%s284 + $0x18] sm:$0xf]
        %v300 = vld [vmem:[%s284 + $0x1c] sm:$0xf]
        %v301 = vld [vmem:[%s284 + $0x20] sm:$0xf]
        %v302 = vld [vmem:[%s284 + $0x24] sm:$0xf]
        %v303 = vld [vmem:[%s284 + $0x28] sm:$0xf]
        %v304 = vld [vmem:[%s284 + $0x2c] sm:$0xf]
        %v305 = vld [vmem:[%s284 + $0x30] sm:$0xf]
        %v306 = vld [vmem:[%s284 + $0x34] sm:$0xf]
        %v307 = vld [vmem:[%s284 + $0x38] sm:$0xf]
        %v308 = vld [vmem:[%s284 + $0x3c] sm:$0xf]
        %v309 = vld [vmem:[%s284 + $0x40] sm:$0xf]
        %v310 = vld [vmem:[%s284 + $0x44] sm:$0xf]
        %v311 = vld [vmem:[%s284 + $0x48] sm:$0xf]
        %v312 = vld [vmem:[%s284 + $0x4c] sm:$0xf]
        %v313 = vld [vmem:[%s284 + $0x50] sm:$0xf]
        %v314 = vld [vmem:[%s284 + $0x54] sm:$0xf]
        %v315 = vld [vmem:[%s284 + $0x58] sm:$0xf]
        %v316 = vld [vmem:[%s284 + $0x5c] sm:$0xf]
        %v317 = vld [vmem:[%s284 + $0x60] sm:$0xf]
        %v318 = vld [vmem:[%s284 + $0x64] sm:$0xf]
        %v319 = vld [vmem:[%s284 + $0x68] sm:$0xf]
        %v320 = vld [vmem:[%s284 + $0x6c] sm:$0xf]
        %v321 = vld [vmem:[%s284 + $0x70] sm:$0xf]
        %v322 = vld [vmem:[%s284 + $0x74] sm:$0xf]
        %v323 = vld [vmem:[%s284 + $0x78] sm:$0xf]
        %v324 = vld [vmem:[%s284 + $0x7c] sm:$0xf]
        %v325 = vld [vmem:[%s284 + $0x80] sm:$0xf]
        %v326 = vld [vmem:[%s284 + $0x84] sm:$0xf]
        %v327 = vld [vmem:[%s284 + $0x88] sm:$0xf]
        %v328 = vld [vmem:[%s284 + $0x8c] sm:$0xf]
        %v329 = vld [vmem:[%s284 + $0x90] sm:$0xf]
        %v330 = vld [vmem:[%s284 + $0x94] sm:$0xf]
        %v331 = vld [vmem:[%s284 + $0x98] sm:$0xf]
        %v332 = vld [vmem:[%s284 + $0x9c] sm:$0xf]
        %v333 = vld [vmem:[%s284 + $0xa0] sm:$0xf]
        %v334 = vld [vmem:[%s284 + $0xa4] sm:$0xf]
        %v335 = vld [vmem:[%s284 + $0xa8] sm:$0xf]
        %v336 = vld [vmem:[%s284 + $0xac] sm:$0xf]
        %v337 = vld [vmem:[%s284 + $0xb0] sm:$0xf]
        %v338 = vld [vmem:[%s284 + $0xb4] sm:$0xf]
        %v339 = vld [vmem:[%s284 + $0xb8] sm:$0xf]
        %v340 = vld [vmem:[%s284 + $0xbc] sm:$0xf]
        %v341 = vld [vmem:[%s284 + $0xc0] sm:$0xf]
        %v342 = vld [vmem:[%s284 + $0xc4] sm:$0xf]
        %v343 = vld [vmem:[%s284 + $0xc8] sm:$0xf]
        %v344 = vld [vmem:[%s284 + $0xcc] sm:$0xf]
        %v345 = vld [vmem:[%s284 + $0xd0] sm:$0xf]
        %v346 = vld [vmem:[%s284 + $0xd4] sm:$0xf]
        %v347 = vld [vmem:[%s284 + $0xd8] sm:$0xf]
        %v348 = vld [vmem:[%s284 + $0xdc] sm:$0xf]
        %v349 = vld [vmem:[%s284 + $0xe0] sm:$0xf]
        %v350 = vld [vmem:[%s284 + $0xe4] sm:$0xf]
        %v351 = vld [vmem:[%s284 + $0xe8] sm:$0xf]
        %v352 = vld [vmem:[%s284 + $0xec] sm:$0xf]
        %v353 = vld [vmem:[%s284 + $0xf0] sm:$0xf]
        %v354 = vld [vmem:[%s284 + $0xf4] sm:$0xf]
        %v355 = vld [vmem:[%s284 + $0xf8] sm:$0xf]
        %v356 = vld [vmem:[%s284 + $0xfc] sm:$0xf]
        %v357 = vld [vmem:[%s284 + $0x100] sm:$0xf]
        %v358 = vld [vmem:[%s284 + $0x104] sm:$0xf]
        %v359 = vld [vmem:[%s284 + $0x108] sm:$0xf]
        %v360 = vld [vmem:[%s284 + $0x10c] sm:$0xf]
        %v361 = vld [vmem:[%s284 + $0x110] sm:$0xf]
        %v362 = vld [vmem:[%s284 + $0x114] sm:$0xf]
        %v363 = vld [vmem:[%s284 + $0x118] sm:$0xf]
        %v364 = vld [vmem:[%s284 + $0x11c] sm:$0xf]
        %v365 = vld [vmem:[%s284 + $0x120] sm:$0xf]
        %v366 = vld [vmem:[%s284 + $0x124] sm:$0xf]
        %v367 = vld [vmem:[%s284 + $0x128] sm:$0xf]
        %v368 = vld [vmem:[%s284 + $0x12c] sm:$0xf]
        %v369 = vld [vmem:[%s284 + $0x130] sm:$0xf]
        %v370 = vld [vmem:[%s284 + $0x134] sm:$0xf]
        %v371 = vld [vmem:[%s284 + $0x138] sm:$0xf]
        %v372 = vld [vmem:[%s284 + $0x13c] sm:$0xf]
        %v373 = vld [vmem:[%s284 + $0x140] sm:$0xf]
        %v374 = vld [vmem:[%s284 + $0x144] sm:$0xf]
        %v375 = vld [vmem:[%s284 + $0x148] sm:$0xf]
        %v376 = vld [vmem:[%s284 + $0x14c] sm:$0xf]
        %v377 = vld [vmem:[%s284 + $0x150] sm:$0xf]
        %v378 = vld [vmem:[%s284 + $0x154] sm:$0xf]
        %v379 = vld [vmem:[%s284 + $0x158] sm:$0xf]
        %v380 = vld [vmem:[%s284 + $0x15c] sm:$0xf]
        %v381 = vld [vmem:[%s284 + $0x160] sm:$0xf]
        %v382 = vld [vmem:[%s284 + $0x164] sm:$0xf]
        %v383 = vld [vmem:[%s284 + $0x168] sm:$0xf]
        %v384 = vld [vmem:[%s284 + $0x16c] sm:$0xf]
        %v385 = vld [vmem:[%s284 + $0x170] sm:$0xf]
        %v386 = vld [vmem:[%s284 + $0x174] sm:$0xf]
        %v387 = vld [vmem:[%s284 + $0x178] sm:$0xf]
        %v388 = vld [vmem:[%s284 + $0x17c] sm:$0xf]
        %v389 = vld [vmem:[%s284 + $0x180] sm:$0xf]
        %v390 = vld [vmem:[%s284 + $0x184] sm:$0xf]
        %v391 = vld [vmem:[%s284 + $0x188] sm:$0xf]
        %v392 = vld [vmem:[%s284 + $0x18c] sm:$0xf]
        %v393 = vld [vmem:[%s284 + $0x190] sm:$0xf]
        %v394 = vld [vmem:[%s284 + $0x194] sm:$0xf]
        %v395 = vld [vmem:[%s284 + $0x198] sm:$0xf]
        %v396 = vld [vmem:[%s284 + $0x19c] sm:$0xf]
        %v397 = vld [vmem:[%s284 + $0x1a0] sm:$0xf]
        %v398 = vld [vmem:[%s284 + $0x1a4] sm:$0xf]
        %v399 = vld [vmem:[%s284 + $0x1a8] sm:$0xf]
        %v400 = vld [vmem:[%s284 + $0x1ac] sm:$0xf]
        %v401 = vld [vmem:[%s284 + $0x1b0] sm:$0xf]
        %v402 = vld [vmem:[%s284 + $0x1b4] sm:$0xf]
        %v403 = vld [vmem:[%s284 + $0x1b8] sm:$0xf]
        %v404 = vld [vmem:[%s284 + $0x1bc] sm:$0xf]
        %406 = vst [vmem:[#allocation1] ss:$9 sm:$0xff] %v292
        %v407 = vld [vmem:[#allocation1] sm:$0xff]
        %v408 = vld [vmem:[#allocation1 + $0x9] sm:$0xff]
        %v409 = vld [vmem:[#allocation1 + $0x12] sm:$0xff]
        %v410 = vld [vmem:[#allocation1 + $0x1b] sm:$0xff]
        %v411 = vld [vmem:[#allocation1 + $0x24] sm:$0xff]
        %v412 = vld [vmem:[#allocation1 + $0x2d] sm:$0xff]
        %v413 = vld [vmem:[#allocation1 + $0x36] sm:$0xff]
        %v533 = vunpack.c.l.b16 %v293
        %v534 = vunpack.c.l.b16 %v294
        %v535 = vunpack.c.l.b16 %v295
        %v536 = vunpack.c.l.b16 %v296
        %v537 = vunpack.c.l.b16 %v297
        %v538 = vunpack.c.l.b16 %v298
        %v539 = vunpack.c.l.b16 %v299
        %v540 = vunpack.c.l.b16 %v300
        %v541 = vunpack.c.l.b16 %v301
        %v542 = vunpack.c.l.b16 %v302
        %v543 = vunpack.c.l.b16 %v303
        %v544 = vunpack.c.l.b16 %v304
        %v545 = vunpack.c.l.b16 %v305
        %v546 = vunpack.c.l.b16 %v306
        %v547 = vunpack.c.l.b16 %v307
        %v548 = vunpack.c.l.b16 %v308
        %v549 = vunpack.c.l.b16 %v309
        %v550 = vunpack.c.l.b16 %v310
        %v551 = vunpack.c.l.b16 %v311
        %v552 = vunpack.c.l.b16 %v312
        %v553 = vunpack.c.l.b16 %v313
        %v554 = vunpack.c.l.b16 %v314
        %v555 = vunpack.c.l.b16 %v315
        %v556 = vunpack.c.l.b16 %v316
        %v557 = vunpack.c.l.b16 %v317
        %v558 = vunpack.c.l.b16 %v318
        %v559 = vunpack.c.l.b16 %v319
        %v560 = vunpack.c.l.b16 %v320
        %v561 = vunpack.c.l.b16 %v321
        %v562 = vunpack.c.l.b16 %v322
        %v563 = vunpack.c.l.b16 %v323
        %v564 = vunpack.c.l.b16 %v324
        %v565 = vunpack.c.l.b16 %v325
        %v566 = vunpack.c.l.b16 %v326
        %v567 = vunpack.c.l.b16 %v327
        %v568 = vunpack.c.l.b16 %v328
        %v569 = vunpack.c.l.b16 %v329
        %v570 = vunpack.c.l.b16 %v330
        %v571 = vunpack.c.l.b16 %v331
        %v572 = vunpack.c.l.b16 %v332
        %v573 = vunpack.c.l.b16 %v333
        %v574 = vunpack.c.l.b16 %v334
        %v575 = vunpack.c.l.b16 %v335
        %v576 = vunpack.c.l.b16 %v336
        %v577 = vunpack.c.l.b16 %v337
        %v578 = vunpack.c.l.b16 %v338
        %v579 = vunpack.c.l.b16 %v339
        %v580 = vunpack.c.l.b16 %v340
        %v581 = vunpack.c.l.b16 %v341
        %v582 = vunpack.c.l.b16 %v342
        %v583 = vunpack.c.l.b16 %v343
        %v584 = vunpack.c.l.b16 %v344
        %v585 = vunpack.c.l.b16 %v345
        %v586 = vunpack.c.l.b16 %v346
        %v587 = vunpack.c.l.b16 %v347
        %v588 = vunpack.c.l.b16 %v348
        %v589 = vunpack.c.l.b16 %v349
        %v590 = vunpack.c.l.b16 %v350
        %v591 = vunpack.c.l.b16 %v351
        %v592 = vunpack.c.l.b16 %v352
        %v593 = vunpack.c.l.b16 %v353
        %v594 = vunpack.c.l.b16 %v354
        %v595 = vunpack.c.l.b16 %v355
        %v596 = vunpack.c.l.b16 %v356
        %v597 = vunpack.c.l.b16 %v357
        %v598 = vunpack.c.l.b16 %v358
        %v599 = vunpack.c.l.b16 %v359
        %v600 = vunpack.c.l.b16 %v360
        %v601 = vunpack.c.l.b16 %v361
        %v602 = vunpack.c.l.b16 %v362
        %v603 = vunpack.c.l.b16 %v363
        %v604 = vunpack.c.l.b16 %v364
        %v605 = vunpack.c.l.b16 %v365
        %v606 = vunpack.c.l.b16 %v366
        %v607 = vunpack.c.l.b16 %v367
        %v608 = vunpack.c.l.b16 %v368
        %v609 = vunpack.c.l.b16 %v369
        %v610 = vunpack.c.l.b16 %v370
        %v611 = vunpack.c.l.b16 %v371
        %v612 = vunpack.c.l.b16 %v372
        %v613 = vunpack.c.l.b16 %v373
        %v614 = vunpack.c.l.b16 %v374
        %v615 = vunpack.c.l.b16 %v375
        %v616 = vunpack.c.l.b16 %v376
        %v617 = vunpack.c.l.b16 %v377
        %v618 = vunpack.c.l.b16 %v378
        %v619 = vunpack.c.l.b16 %v379
        %v620 = vunpack.c.l.b16 %v380
        %v621 = vunpack.c.l.b16 %v381
        %v622 = vunpack.c.l.b16 %v382
        %v623 = vunpack.c.l.b16 %v383
        %v624 = vunpack.c.l.b16 %v384
        %v625 = vunpack.c.l.b16 %v385
        %v626 = vunpack.c.l.b16 %v386
        %v627 = vunpack.c.l.b16 %v387
        %v628 = vunpack.c.l.b16 %v388
        %v629 = vunpack.c.l.b16 %v389
        %v630 = vunpack.c.l.b16 %v390
        %v631 = vunpack.c.l.b16 %v391
        %v632 = vunpack.c.l.b16 %v392
        %v633 = vunpack.c.l.b16 %v393
        %v634 = vunpack.c.l.b16 %v394
        %v635 = vunpack.c.l.b16 %v395
        %v636 = vunpack.c.l.b16 %v396
        %v637 = vunpack.c.l.b16 %v397
        %v638 = vunpack.c.l.b16 %v398
        %v639 = vunpack.c.l.b16 %v399
        %v640 = vunpack.c.l.b16 %v400
        %v641 = vunpack.c.l.b16 %v401
        %v642 = vunpack.c.l.b16 %v402
        %v643 = vunpack.c.l.b16 %v403
        %v644 = vunpack.c.l.b16 %v404
        %v645 = vpack.c.b16 %v534, %v533
        %v646 = vpack.c.b16 %v536, %v535
        %v647 = vpack.c.b16 %v538, %v537
        %v648 = vpack.c.b16 %v540, %v539
        %v649 = vpack.c.b16 %v542, %v541
        %v650 = vpack.c.b16 %v544, %v543
        %v651 = vpack.c.b16 %v546, %v545
        %v652 = vpack.c.b16 %v548, %v547
        %v653 = vpack.c.b16 %v550, %v549
        %v654 = vpack.c.b16 %v552, %v551
        %v655 = vpack.c.b16 %v554, %v553
        %v656 = vpack.c.b16 %v556, %v555
        %v657 = vpack.c.b16 %v558, %v557
        %v658 = vpack.c.b16 %v560, %v559
        %v659 = vpack.c.b16 %v562, %v561
        %v660 = vpack.c.b16 %v564, %v563
        %v661 = vpack.c.b16 %v566, %v565
        %v662 = vpack.c.b16 %v568, %v567
        %v663 = vpack.c.b16 %v570, %v569
        %v664 = vpack.c.b16 %v572, %v571
        %v665 = vpack.c.b16 %v574, %v573
        %v666 = vpack.c.b16 %v576, %v575
        %v667 = vpack.c.b16 %v578, %v577
        %v668 = vpack.c.b16 %v580, %v579
        %v669 = vpack.c.b16 %v582, %v581
        %v670 = vpack.c.b16 %v584, %v583
        %v671 = vpack.c.b16 %v586, %v585
        %v672 = vpack.c.b16 %v588, %v587
        %v673 = vpack.c.b16 %v590, %v589
        %v674 = vpack.c.b16 %v592, %v591
        %v675 = vpack.c.b16 %v594, %v593
        %v676 = vpack.c.b16 %v596, %v595
        %v677 = vpack.c.b16 %v598, %v597
        %v678 = vpack.c.b16 %v600, %v599
        %v679 = vpack.c.b16 %v602, %v601
        %v680 = vpack.c.b16 %v604, %v603
        %v681 = vpack.c.b16 %v606, %v605
        %v682 = vpack.c.b16 %v608, %v607
        %v683 = vpack.c.b16 %v610, %v609
        %v684 = vpack.c.b16 %v612, %v611
        %v685 = vpack.c.b16 %v614, %v613
        %v686 = vpack.c.b16 %v616, %v615
        %v687 = vpack.c.b16 %v618, %v617
        %v688 = vpack.c.b16 %v620, %v619
        %v689 = vpack.c.b16 %v622, %v621
        %v690 = vpack.c.b16 %v624, %v623
        %v691 = vpack.c.b16 %v626, %v625
        %v692 = vpack.c.b16 %v628, %v627
        %v693 = vpack.c.b16 %v630, %v629
        %v694 = vpack.c.b16 %v632, %v631
        %v695 = vpack.c.b16 %v634, %v633
        %v696 = vpack.c.b16 %v636, %v635
        %v697 = vpack.c.b16 %v638, %v637
        %v698 = vpack.c.b16 %v640, %v639
        %v699 = vpack.c.b16 %v642, %v641
        %v700 = vpack.c.b16 %v644, %v643
        %757 = vmatpush.bf16.msra.mxu0 %v652
        %758 = vmatpush.bf16.msra.mxu0 %v651
        %759 = vmatpush.bf16.msra.mxu0 %v650
        %760 = vmatpush.bf16.msra.mxu0 %v649
        %761 = vmatpush.bf16.msra.mxu0 %v648
        %762 = vmatpush.bf16.msra.mxu0 %v647
        %763 = vmatpush.bf16.msra.mxu0 %v646
        %764 = vmatpush.bf16.msra.mxu0 %v645
        %765 = vmatmul.bf16.gmra.mxu0 %v407
        %v766 = vpop.f32.mrf.mxu0
        %v767 = vadd.f32 0.0, %v766
        %v768 = vpop.f32.mrf.mxu0
        %769 = vdwg.mxu0
        %770 = vmatpush.bf16.msra.mxu0 %v660
        %771 = vmatpush.bf16.msra.mxu0 %v659
        %772 = vmatpush.bf16.msra.mxu0 %v658
        %773 = vmatpush.bf16.msra.mxu0 %v657
        %774 = vmatpush.bf16.msra.mxu0 %v656
        %775 = vmatpush.bf16.msra.mxu0 %v655
        %776 = vmatpush.bf16.msra.mxu0 %v654
        %777 = vmatpush.bf16.msra.mxu0 %v653
        %778 = vmatmul.bf16.gmra.mxu0 %v408
        %v779 = vpop.f32.mrf.mxu0
        %v780 = vadd.f32 %v767, %v779
        %v781 = vpop.f32.mrf.mxu0
        %782 = vdwg.mxu0
        %783 = vmatpush.bf16.msra.mxu0 %v668
        %784 = vmatpush.bf16.msra.mxu0 %v667
        %785 = vmatpush.bf16.msra.mxu0 %v666
        %786 = vmatpush.bf16.msra.mxu0 %v665
        %787 = vmatpush.bf16.msra.mxu0 %v664
        %788 = vmatpush.bf16.msra.mxu0 %v663
        %789 = vmatpush.bf16.msra.mxu0 %v662
        %790 = vmatpush.bf16.msra.mxu0 %v661
        %791 = vmatmul.bf16.gmra.mxu0 %v409
        %v792 = vpop.f32.mrf.mxu0
        %v793 = vadd.f32 %v780, %v792
        %v794 = vpop.f32.mrf.mxu0
        %795 = vdwg.mxu0
        %796 = vmatpush.bf16.msra.mxu0 %v676
        %797 = vmatpush.bf16.msra.mxu0 %v675
        %798 = vmatpush.bf16.msra.mxu0 %v674
        %799 = vmatpush.bf16.msra.mxu0 %v673
        %800 = vmatpush.bf16.msra.mxu0 %v672
        %801 = vmatpush.bf16.msra.mxu0 %v671
        %802 = vmatpush.bf16.msra.mxu0 %v670
        %803 = vmatpush.bf16.msra.mxu0 %v669
        %804 = vmatmul.bf16.gmra.mxu0 %v410
        %v805 = vpop.f32.mrf.mxu0
        %v806 = vadd.f32 %v793, %v805
        %v807 = vpop.f32.mrf.mxu0
        %808 = vdwg.mxu0
        %809 = vmatpush.bf16.msra.mxu0 %v684
        %810 = vmatpush.bf16.msra.mxu0 %v683
        %811 = vmatpush.bf16.msra.mxu0 %v682
        %812 = vmatpush.bf16.msra.mxu0 %v681
        %813 = vmatpush.bf16.msra.mxu0 %v680
        %814 = vmatpush.bf16.msra.mxu0 %v679
        %815 = vmatpush.bf16.msra.mxu0 %v678
        %816 = vmatpush.bf16.msra.mxu0 %v677
        %817 = vmatmul.bf16.gmra.mxu0 %v411
        %v818 = vpop.f32.mrf.mxu0
        %v819 = vadd.f32 %v806, %v818
        %v820 = vpop.f32.mrf.mxu0
        %821 = vdwg.mxu0
        %822 = vmatpush.bf16.msra.mxu0 %v692
        %823 = vmatpush.bf16.msra.mxu0 %v691
        %824 = vmatpush.bf16.msra.mxu0 %v690
        %825 = vmatpush.bf16.msra.mxu0 %v689
        %826 = vmatpush.bf16.msra.mxu0 %v688
        %827 = vmatpush.bf16.msra.mxu0 %v687
        %828 = vmatpush.bf16.msra.mxu0 %v686
        %829 = vmatpush.bf16.msra.mxu0 %v685
        %830 = vmatmul.bf16.gmra.mxu0 %v412
        %v831 = vpop.f32.mrf.mxu0
        %v832 = vadd.f32 %v819, %v831
        %v833 = vpop.f32.mrf.mxu0
        %834 = vdwg.mxu0
        %835 = vmatpush.bf16.msra.mxu0 %v700
        %836 = vmatpush.bf16.msra.mxu0 %v699
        %837 = vmatpush.bf16.msra.mxu0 %v698
        %838 = vmatpush.bf16.msra.mxu0 %v697
        %839 = vmatpush.bf16.msra.mxu0 %v696
        %840 = vmatpush.bf16.msra.mxu0 %v695
        %841 = vmatpush.bf16.msra.mxu0 %v694
        %842 = vmatpush.bf16.msra.mxu0 %v693
        %843 = vmatmul.bf16.gmra.mxu0 %v413
        %v844 = vpop.f32.mrf.mxu0
        %v845 = vadd.f32 %v832, %v844
        %v846 = vpop.f32.mrf.mxu0
        %847 = vdwg.mxu0
        %v848 = vadd.f32 %v291, %v845
        %849 = vst [vmem:[#allocation2] sm:$0x3] %v848
        %p850 = scmp.eq.s32.totalorder %s19, 6
        // Predicated region
        $region53: #{net_forward.3} parent=47 // pred_check
          %p851 = pneg %p850
        $region54: #{net_forward.3} parent=47 // pred_check_branch
          %853 = sbr.rel (%p851) target = $region56
        $region55: #{net_forward.3} parent=47 // pred_region
          %v854 = vld [vmem:[#allocation2] sm:$0x3]
          %v855 = vld [vmem:[%s2] sm:$0x1]
          %v857 = vperm.slane %v855, 0
          %v859 = vadd.f32 %v854, %v857
          %v860 = vmax.f32 %v859, 0.0
          %vm861 = vcmask 1041408
          %v862 = vsel %vm861, %v860, 0.0
          %v863 = vrot.slane %v862, 4
          %v864 = vadd.f32 %v862, %v863
          %v865 = vrot.slane %v864, 2
          %v866 = vadd.f32 %v864, %v865
          %v867 = vrot.slane %v866, 1
          %v868 = vadd.f32 %v866, %v867
          %v869 = vrcp.pop 2.0
          %v870 = vmul.f32 2.0, %v869
          %v871 = vsub.f32 1.0, %v870
          %v872 = vmul.f32 %v869, %v871
          %v873 = vadd.f32 %v869, %v872
          %vm874 = vweird.f32 %v869
          %v875 = vsel %vm874, %v869, %v873
          %v876 = vmul.f32 %v868, %v875
          %v877 = vsub.f32 %v860, %v876
          %v878 = vmul.f32 %v877, %v877
          %v879 = vsel %vm861, %v878, 0.0
          %v880 = vrot.slane %v879, 4
          %v881 = vadd.f32 %v879, %v880
          %v882 = vrot.slane %v881, 2
          %v883 = vadd.f32 %v881, %v882
          %v884 = vrot.slane %v883, 1
          %v885 = vadd.f32 %v883, %v884
          %v886 = vmul.f32 %v885, %v875
          %v887 = vadd.f32 %v886, 1e-05
          %v888 = vrsqrt.pop %v887
          %v889 = vmul.f32 %v888, %v887
          %v890 = vmul.f32 %v889, %v888
          %v891 = vmul.f32 0.5, %v890
          %v892 = vsub.f32 1.5, %v891
          %v893 = vmul.f32 %v888, %v892
          %vm894 = vweird.f32 %v887
          %vm895 = vweird.f32 %v888
          %vm896 = vmor %vm894, %vm895
          %v897 = vsel %vm896, %v888, %v893
          %v898 = vmul.f32 %v877, %v897
          %v899 = vld [vmem:[%s3] sm:$0x1]
          %v901 = vperm.slane %v899, 0
          %v903 = vmul.f32 %v898, %v901
          %v904 = vld [vmem:[%s4] sm:$0x1]
          %v906 = vperm.slane %v904, 0
          %v908 = vadd.f32 %v903, %v906
          %v909 = vpack.c.bf16 %v908, %v908
          %v910 = vld [vmem:[%s5] sm:$0xf]
          %v911 = vld [vmem:[%s5 + $0x4] sm:$0xf]
          %v912 = vld [vmem:[%s5 + $0x8] sm:$0xf]
          %v913 = vld [vmem:[%s5 + $0xc] sm:$0xf]
          %v914 = vld [vmem:[%s5 + $0x10] sm:$0xf]
          %v915 = vld [vmem:[%s5 + $0x14] sm:$0xf]
          %v916 = vld [vmem:[%s5 + $0x18] sm:$0xf]
          %v917 = vld [vmem:[%s5 + $0x1c] sm:$0xf]
          %v918 = vld [vmem:[%s5 + $0x20] sm:$0xf]
          %v919 = vld [vmem:[%s5 + $0x24] sm:$0xf]
          %v920 = vld [vmem:[%s5 + $0x28] sm:$0xf]
          %v921 = vld [vmem:[%s5 + $0x2c] sm:$0xf]
          %v922 = vld [vmem:[%s5 + $0x30] sm:$0xf]
          %v923 = vld [vmem:[%s5 + $0x34] sm:$0xf]
          %v924 = vld [vmem:[%s5 + $0x38] sm:$0xf]
          %v925 = vld [vmem:[%s5 + $0x3c] sm:$0xf]
          %v926 = vld [vmem:[%s6] sm:$0x1]
          %v928 = vperm.slane %v926, 0
          %v946 = vunpack.c.l.b16 %v910
          %v947 = vunpack.c.l.b16 %v911
          %v948 = vunpack.c.l.b16 %v912
          %v949 = vunpack.c.l.b16 %v913
          %v950 = vunpack.c.l.b16 %v914
          %v951 = vunpack.c.l.b16 %v915
          %v952 = vunpack.c.l.b16 %v916
          %v953 = vunpack.c.l.b16 %v917
          %v954 = vunpack.c.l.b16 %v918
          %v955 = vunpack.c.l.b16 %v919
          %v956 = vunpack.c.l.b16 %v920
          %v957 = vunpack.c.l.b16 %v921
          %v958 = vunpack.c.l.b16 %v922
          %v959 = vunpack.c.l.b16 %v923
          %v960 = vunpack.c.l.b16 %v924
          %v961 = vunpack.c.l.b16 %v925
          %v962 = vpack.c.b16 %v947, %v946
          %v963 = vpack.c.b16 %v949, %v948
          %v964 = vpack.c.b16 %v951, %v950
          %v965 = vpack.c.b16 %v953, %v952
          %v966 = vpack.c.b16 %v955, %v954
          %v967 = vpack.c.b16 %v957, %v956
          %v968 = vpack.c.b16 %v959, %v958
          %v969 = vpack.c.b16 %v961, %v960
          %978 = vmatpush.bf16.msra.mxu0 %v969
          %979 = vmatpush.bf16.msra.mxu0 %v968
          %980 = vmatpush.bf16.msra.mxu0 %v967
          %981 = vmatpush.bf16.msra.mxu0 %v966
          %982 = vmatpush.bf16.msra.mxu0 %v965
          %983 = vmatpush.bf16.msra.mxu0 %v964
          %984 = vmatpush.bf16.msra.mxu0 %v963
          %985 = vmatpush.bf16.msra.mxu0 %v962
          %986 = vmatmul.bf16.gmra.mxu0 %v909
          %v987 = vpop.f32.mrf.mxu0
          %v988 = vadd.f32 %v928, %v987
          %v989 = vpop.f32.mrf.mxu0
          %990 = vdwg.mxu0
          %vm991 = vcmask 812032
          %992 = vst.msk [vmem:[#allocation3] sm:$0x3] %vm991, %v988
        $region56: #{net_forward.3} parent=47 // pred_fallthru
          _
        // Predicated region
        $region57: #{net_forward.3} parent=47 // pred_check
          %p993 = pneg %p189
        $region58: #{net_forward.3} parent=47 // pred_check_branch
          %995 = sbr.rel (%p993) target = $region60
        $region59: #{net_forward.3} parent=47 // pred_region
          %997 = vsyncadd [#allocation4], 0
          %s999 = sshll.u32 [#allocation3], 4
          %s1000 = int_to_ptr.vmem [resolvable:$true] %s999
          %s1001 = sshll.u32 %s7, 4
          %s1002 = int_to_ptr.hbm [resolvable:$true] %s1001
          %1004 = dma.vmem_to_hbm [thread:$0]  %s1000, 32, %s1002, [#allocation4]
        $region60: #{net_forward.3} parent=47 // pred_fallthru
          _
        // Predicated region
        $region61: #{net_forward.3} parent=47 // pred_check
          %p1005 = pneg %p189
        $region62: #{net_forward.3} parent=47 // pred_check_branch
          %1007 = sbr.rel (%p1005) target = $region64
        $region63: #{net_forward.3} parent=47 // pred_region
          %1009 = dma.done [#allocation4], 32
        $region64: #{net_forward.3} parent=47 // pred_fallthru
          _
      $region48: #{net_forward.3} parent=5 // pred_fallthru
        _
      %p1010 = scmp.le.s32.totalorder 2, %s14
      // Predicated region
      $region65: #{net_forward.3} parent=5 // pred_check
        %p1011 = pneg %p1010
      $region66: #{net_forward.3} parent=5 // pred_check_branch
        %1013 = sbr.rel (%p1011) target = $region68
      $region67: #{net_forward.3} parent=5 // pred_region
        %s1014 = ssub.s32 %s14, 2
      $region68: #{net_forward.3} parent=5 // pred_fallthru
        _
    $region6: #{net_forward.3} parent=1 // loop_footer
      %s18 = sadd.s32 1, %s14
    $region7: #{net_forward.3} parent=1 // loop_footer_branch
      %13 = sbr.rel target = $region3
    $region8: #{net_forward.3} parent=1 // loop_exit
      _
    %1015 = vsyncpa [#allocation4], 1
    %s1016 = scalar_lea.sflag [#allocation4], 1
    %1017 = vsyncpa %s1016, 1

// kernel: net_forward.2
$region0: #{net_forward.2}
  #allocation0 [shape = 'u32[]', space=smem, size = 0x4, offset = 0x4, fixed_abs, tag = 'smem constant byte address 0x4 - core index']
  #allocation1 [shape = 'u32[72,128]{1,0:T(1,128)}', space=vmem, size = 0x9000, scoped, tag = 'internal scratch']
  %s0 = inlined_call_operand.vmem [shape: bf16[2,960,27], index: 0, kind: input, shape index: {}]
  %s1 = inlined_call_operand.vmem [shape: bf16[27,32], index: 1, kind: input, shape index: {}]
  %s2 = inlined_call_operand.vmem [shape: f32[1,32], index: 2, kind: input, shape index: {}]
  %s3 = inlined_call_operand.vmem [shape: bf16[3,96,32], index: 3, kind: input, shape index: {}]
  %s4 = inlined_call_operand.vmem [shape: f32[1,32], index: 4, kind: input, shape index: {}]
  %s5 = inlined_call_operand.vmem [shape: bf16[2,14,16,32], index: 5, kind: output, shape index: {}]
  %s6 = sld [smem:[#allocation0]]
  $region53: #{net_forward.2} parent=0
    _
  %s8 = ssub.s32 1, %s6
  %s9 = scalar_select 0, %s8, %s6
  loop: start=0, step=1, limit=4
  $region2: #{net_forward.2} parent=0 // loop_pre_header
    _
  $region3: #{net_forward.2} parent=0 // loop_header
    %s11 = sphi 0, %s15
    %p12 = scmp.ge.s32.totalorder %s11, 4
    %s21 = sphi 0, %s23
    %s24 = sphi 0, %s21
    %s25 = sphi 0, %s24
    %s41 = sphi 0, %s25
    %s45 = sphi 0, %s45
    %s47 = sphi 0, %s45
    %s48 = sphi 0, %s47
    %s62 = sphi 0, %s48
    %s66 = sphi 0, %s66
    %s68 = sphi 0, %s66
    %s69 = sphi 0, %s68
    %s83 = sphi 0, %s69
    %s87 = sphi 0, %s87
    %s89 = sphi 0, %s87
    %s90 = sphi 0, %s89
    %s104 = sphi 0, %s90
    %s108 = sphi 0, %s108
    %s110 = sphi 0, %s108
    %s111 = sphi 0, %s110
    %s125 = sphi 0, %s111
    %s131 = sphi 0, %s133
    %s134 = sphi 0, %s131
    %s135 = sphi 0, %s134
    %s151 = sphi 0, %s135
  $region4: #{net_forward.2} parent=0 // loop_header_branch
    %14 = sbr.rel (%p12) target = $region8
  $region5: #{net_forward.2} parent=0 // loop_body
    %s16 = ssub.s32 %s11, 1
    %s17 = ssub.s32 %s11, 2
    %s18 = sadd.s32 %s11, 1
    %s19 = ssub.s32 %s11, %s18
    %p20 = scmp.eq.s32.totalorder %s19, 0
    %s22 = sadd.s32 %s21, 1
    %s23 = scalar_select %p20, %s21, %s22
    %p26 = pneg %p20
    %p27 = scmp.eq.s32.totalorder %s11, 1
    %p28 = por %p26, %p27
    %p29 = scmp.ne.s32.totalorder %s21, %s24
    %p30 = scmp.eq.s32.totalorder %s11, 0
    %p31 = por %p29, %p30
    %p32 = scmp.ne.s32.totalorder %s21, %s24
    %p33 = scmp.eq.s32.totalorder %s16, 1
    %p34 = por %p32, %p33
    %p35 = scmp.ne.s32.totalorder %s24, %s25
    %p36 = scmp.eq.s32.totalorder %s16, 0
    %p37 = por %p35, %p36
    %p38 = scmp.ne.s32.totalorder %s24, %s25
    %p39 = scmp.eq.s32.totalorder %s17, 1
    %p40 = por %p38, %p39
    %p42 = scmp.ne.s32.totalorder %s25, %s41
    %p43 = scmp.eq.s32.totalorder %s17, 0
    %p44 = por %p42, %p43
    %s46 = sadd.s32 %s45, 1
    %p49 = scmp.eq.s32.totalorder %s11, 1
    %p50 = scmp.ne.s32.totalorder %s45, %s47
    %p51 = scmp.eq.s32.totalorder %s11, 0
    %p52 = por %p50, %p51
    %p53 = scmp.ne.s32.totalorder %s45, %s47
    %p54 = scmp.eq.s32.totalorder %s16, 1
    %p55 = por %p53, %p54
    %p56 = scmp.ne.s32.totalorder %s47, %s48
    %p57 = scmp.eq.s32.totalorder %s16, 0
    %p58 = por %p56, %p57
    %p59 = scmp.ne.s32.totalorder %s47, %s48
    %p60 = scmp.eq.s32.totalorder %s17, 1
    %p61 = por %p59, %p60
    %p63 = scmp.ne.s32.totalorder %s48, %s62
    %p64 = scmp.eq.s32.totalorder %s17, 0
    %p65 = por %p63, %p64
    %s67 = sadd.s32 %s66, 1
    %p70 = scmp.eq.s32.totalorder %s11, 1
    %p71 = scmp.ne.s32.totalorder %s66, %s68
    %p72 = scmp.eq.s32.totalorder %s11, 0
    %p73 = por %p71, %p72
    %p74 = scmp.ne.s32.totalorder %s66, %s68
    %p75 = scmp.eq.s32.totalorder %s16, 1
    %p76 = por %p74, %p75
    %p77 = scmp.ne.s32.totalorder %s68, %s69
    %p78 = scmp.eq.s32.totalorder %s16, 0
    %p79 = por %p77, %p78
    %p80 = scmp.ne.s32.totalorder %s68, %s69
    %p81 = scmp.eq.s32.totalorder %s17, 1
    %p82 = por %p80, %p81
    %p84 = scmp.ne.s32.totalorder %s69, %s83
    %p85 = scmp.eq.s32.totalorder %s17, 0
    %p86 = por %p84, %p85
    %s88 = sadd.s32 %s87, 1
    %p91 = scmp.eq.s32.totalorder %s11, 1
    %p92 = scmp.ne.s32.totalorder %s87, %s89
    %p93 = scmp.eq.s32.totalorder %s11, 0
    %p94 = por %p92, %p93
    %p95 = scmp.ne.s32.totalorder %s87, %s89
    %p96 = scmp.eq.s32.totalorder %s16, 1
    %p97 = por %p95, %p96
    %p98 = scmp.ne.s32.totalorder %s89, %s90
    %p99 = scmp.eq.s32.totalorder %s16, 0
    %p100 = por %p98, %p99
    %p101 = scmp.ne.s32.totalorder %s89, %s90
    %p102 = scmp.eq.s32.totalorder %s17, 1
    %p103 = por %p101, %p102
    %p105 = scmp.ne.s32.totalorder %s90, %s104
    %p106 = scmp.eq.s32.totalorder %s17, 0
    %p107 = por %p105, %p106
    %s109 = sadd.s32 %s108, 1
    %p112 = scmp.eq.s32.totalorder %s11, 1
    %p113 = scmp.ne.s32.totalorder %s108, %s110
    %p114 = scmp.eq.s32.totalorder %s11, 0
    %p115 = por %p113, %p114
    %p116 = scmp.ne.s32.totalorder %s108, %s110
    %p117 = scmp.eq.s32.totalorder %s16, 1
    %p118 = por %p116, %p117
    %p119 = scmp.ne.s32.totalorder %s110, %s111
    %p120 = scmp.eq.s32.totalorder %s16, 0
    %p121 = por %p119, %p120
    %p122 = scmp.ne.s32.totalorder %s110, %s111
    %p123 = scmp.eq.s32.totalorder %s17, 1
    %p124 = por %p122, %p123
    %p126 = scmp.ne.s32.totalorder %s111, %s125
    %p127 = scmp.eq.s32.totalorder %s17, 0
    %p128 = por %p126, %p127
    %s129 = ssub.s32 %s11, %s18
    %p130 = scmp.eq.s32.totalorder %s129, 0
    %s132 = sadd.s32 %s131, 1
    %s133 = scalar_select %p130, %s131, %s132
    %p136 = pneg %p130
    %p137 = scmp.eq.s32.totalorder %s11, 1
    %p138 = por %p136, %p137
    %p139 = scmp.ne.s32.totalorder %s131, %s134
    %p140 = scmp.eq.s32.totalorder %s11, 0
    %p141 = por %p139, %p140
    %p142 = scmp.ne.s32.totalorder %s131, %s134
    %p143 = scmp.eq.s32.totalorder %s16, 1
    %p144 = por %p142, %p143
    %p145 = scmp.ne.s32.totalorder %s134, %s135
    %p146 = scmp.eq.s32.totalorder %s16, 0
    %p147 = por %p145, %p146
    %p148 = scmp.ne.s32.totalorder %s134, %s135
    %p149 = scmp.eq.s32.totalorder %s17, 1
    %p150 = por %p148, %p149
    %p152 = scmp.ne.s32.totalorder %s135, %s151
    %p153 = scmp.eq.s32.totalorder %s17, 0
    %p154 = por %p152, %p153
    %p155 = scmp.le.s32.totalorder 1, %s11
    %p156 = scmp.lt.s32.totalorder %s11, 3
    %p157 = pnand %p155, %p156
    %p158 = pneg %p157
    // Predicated region
    $region9: #{net_forward.2} parent=5 // pred_check
      _
    $region10: #{net_forward.2} parent=5 // pred_check_branch
      %160 = sbr.rel (%p157) target = $region12
    $region11: #{net_forward.2} parent=5 // pred_region
      %s161 = ssub.s32 %s11, 1
      // Predicated region
      $region13: #{net_forward.2} parent=11 // pred_check
        %p162 = pneg %p58
      $region14: #{net_forward.2} parent=11 // pred_check_branch
        %164 = sbr.rel (%p162) target = $region16
      $region15: #{net_forward.2} parent=11 // pred_region
        _
      $region16: #{net_forward.2} parent=11 // pred_fallthru
        _
      // Predicated region
      $region17: #{net_forward.2} parent=11 // pred_check
        %p165 = pneg %p79
      $region18: #{net_forward.2} parent=11 // pred_check_branch
        %167 = sbr.rel (%p165) target = $region20
      $region19: #{net_forward.2} parent=11 // pred_region
        _
      $region20: #{net_forward.2} parent=11 // pred_fallthru
        _
      // Predicated region
      $region21: #{net_forward.2} parent=11 // pred_check
        %p168 = pneg %p100
      $region22: #{net_forward.2} parent=11 // pred_check_branch
        %170 = sbr.rel (%p168) target = $region24
      $region23: #{net_forward.2} parent=11 // pred_region
        _
      $region24: #{net_forward.2} parent=11 // pred_fallthru
        _
      // Predicated region
      $region25: #{net_forward.2} parent=11 // pred_check
        %p171 = pneg %p121
      $region26: #{net_forward.2} parent=11 // pred_check_branch
        %173 = sbr.rel (%p171) target = $region28
      $region27: #{net_forward.2} parent=11 // pred_region
        _
      $region28: #{net_forward.2} parent=11 // pred_fallthru
        _
    $region12: #{net_forward.2} parent=5 // pred_fallthru
      _
    %p174 = scmp.lt.s32.totalorder %s11, 2
    // Predicated region
    $region29: #{net_forward.2} parent=5 // pred_check
      %p175 = pneg %p174
    $region30: #{net_forward.2} parent=5 // pred_check_branch
      %177 = sbr.rel (%p175) target = $region32
    $region31: #{net_forward.2} parent=5 // pred_region
      // Predicated region
      $region33: #{net_forward.2} parent=31 // pred_check
        %p178 = pneg %p31
      $region34: #{net_forward.2} parent=31 // pred_check_branch
        %180 = sbr.rel (%p178) target = $region36
      $region35: #{net_forward.2} parent=31 // pred_region
        %p181 = scmp.lt.s32.totalorder %s11, 1
        %s182 = scalar_select %p181, %s11, 1
        %s183 = smul.addr %s182, 120
        %s184 = smul.addr %s183, 4
        %s185 = scalar_lea.vmem %s0, %s184
      $region36: #{net_forward.2} parent=31 // pred_fallthru
        _
    $region32: #{net_forward.2} parent=5 // pred_fallthru
      _
    %p186 = scmp.le.s32.totalorder 1, %s11
    %p187 = scmp.lt.s32.totalorder %s11, 3
    %p188 = pnand %p186, %p187
    %p189 = pneg %p188
    // Predicated region
    $region37: #{net_forward.2} parent=5 // pred_check
      _
    $region38: #{net_forward.2} parent=5 // pred_check_branch
      %191 = sbr.rel (%p188) target = $region40
    $region39: #{net_forward.2} parent=5 // pred_region
      %s192 = ssub.s32 %s11, 1
      %p193 = scmp.lt.s32.totalorder %s16, 1
      %s194 = scalar_select %p193, %s16, 1
      %s195 = smul.addr %s194, 120
      %s196 = smul.addr %s195, 4
      %s197 = scalar_lea.vmem %s0, %s196
      %p198 = pneg %p37
      %p199 = pneg %p34
      %p200 = pneg %p58
      %p201 = pneg %p55
      %p202 = pneg %p79
      %p203 = pneg %p76
      %p204 = pneg %p100
      %p205 = pneg %p97
      %p206 = pneg %p121
      %p207 = pneg %p118
      %p208 = pneg %p147
      %p209 = pneg %p144
      %p210 = scmp.lt.s32.totalorder %s16, 1
      %s211 = scalar_select %p210, %s16, 1
      %s212 = smul.addr %s211, 28
      %s213 = smul.addr %s212, 4
      %s214 = scalar_lea.vmem %s5, %s213
      %p215 = scmp.lt.s32.totalorder %s16, 1
      %s216 = scalar_select %p215, %s16, 1
      %s217 = smul.addr %s216, 120
      %s218 = smul.addr %s217, 4
      %s219 = scalar_lea.vmem %s0, %s218
      %p220 = scmp.lt.s32.totalorder %s16, 1
      %s221 = scalar_select %p220, %s16, 1
      %s222 = smul.addr %s221, 28
      %s223 = smul.addr %s222, 4
      %s224 = scalar_lea.vmem %s5, %s223
      %v226 = vld [vmem:[%s219] sm:$0xf]
      %v227 = vld [vmem:[%s219 + $0x4] sm:$0xf]
      %v228 = vld [vmem:[%s219 + $0x8] sm:$0xf]
      %v229 = vld [vmem:[%s219 + $0xc] sm:$0xf]
      %v230 = vld [vmem:[%s219 + $0x10] sm:$0xf]
      %v231 = vld [vmem:[%s219 + $0x14] sm:$0xf]
      %v232 = vld [vmem:[%s219 + $0x18] sm:$0xf]
      %v233 = vld [vmem:[%s219 + $0x1c] sm:$0xf]
      %v234 = vld [vmem:[%s219 + $0x20] sm:$0xf]
      %v235 = vld [vmem:[%s219 + $0x24] sm:$0xf]
      %v236 = vld [vmem:[%s219 + $0x28] sm:$0xf]
      %v237 = vld [vmem:[%s219 + $0x2c] sm:$0xf]
      %v238 = vld [vmem:[%s219 + $0x30] sm:$0xf]
      %v239 = vld [vmem:[%s219 + $0x34] sm:$0xf]
      %v240 = vld [vmem:[%s219 + $0x38] sm:$0xf]
      %v241 = vld [vmem:[%s219 + $0x3c] sm:$0xf]
      %v242 = vld [vmem:[%s219 + $0x40] sm:$0xf]
      %v243 = vld [vmem:[%s219 + $0x44] sm:$0xf]
      %v244 = vld [vmem:[%s219 + $0x48] sm:$0xf]
      %v245 = vld [vmem:[%s219 + $0x4c] sm:$0xf]
      %v246 = vld [vmem:[%s219 + $0x50] sm:$0xf]
      %v247 = vld [vmem:[%s219 + $0x54] sm:$0xf]
      %v248 = vld [vmem:[%s219 + $0x58] sm:$0xf]
      %v249 = vld [vmem:[%s219 + $0x5c] sm:$0xf]
      %v250 = vld [vmem:[%s219 + $0x60] sm:$0xf]
      %v251 = vld [vmem:[%s219 + $0x64] sm:$0xf]
      %v252 = vld [vmem:[%s219 + $0x68] sm:$0xf]
      %v253 = vld [vmem:[%s219 + $0x6c] sm:$0xf]
      %v254 = vld [vmem:[%s219 + $0x70] sm:$0xf]
      %v255 = vld [vmem:[%s219 + $0x74] sm:$0xf]
      %v256 = vld [vmem:[%s219 + $0x78] sm:$0xf]
      %v257 = vld [vmem:[%s219 + $0x7c] sm:$0xf]
      %v258 = vld [vmem:[%s219 + $0x80] sm:$0xf]
      %v259 = vld [vmem:[%s219 + $0x84] sm:$0xf]
      %v260 = vld [vmem:[%s219 + $0x88] sm:$0xf]
      %v261 = vld [vmem:[%s219 + $0x8c] sm:$0xf]
      %v262 = vld [vmem:[%s219 + $0x90] sm:$0xf]
      %v263 = vld [vmem:[%s219 + $0x94] sm:$0xf]
      %v264 = vld [vmem:[%s219 + $0x98] sm:$0xf]
      %v265 = vld [vmem:[%s219 + $0x9c] sm:$0xf]
      %v266 = vld [vmem:[%s219 + $0xa0] sm:$0xf]
      %v267 = vld [vmem:[%s219 + $0xa4] sm:$0xf]
      %v268 = vld [vmem:[%s219 + $0xa8] sm:$0xf]
      %v269 = vld [vmem:[%s219 + $0xac] sm:$0xf]
      %v270 = vld [vmem:[%s219 + $0xb0] sm:$0xf]
      %v271 = vld [vmem:[%s219 + $0xb4] sm:$0xf]
      %v272 = vld [vmem:[%s219 + $0xb8] sm:$0xf]
      %v273 = vld [vmem:[%s219 + $0xbc] sm:$0xf]
      %v274 = vld [vmem:[%s219 + $0xc0] sm:$0xf]
      %v275 = vld [vmem:[%s219 + $0xc4] sm:$0xf]
      %v276 = vld [vmem:[%s219 + $0xc8] sm:$0xf]
      %v277 = vld [vmem:[%s219 + $0xcc] sm:$0xf]
      %v278 = vld [vmem:[%s219 + $0xd0] sm:$0xf]
      %v279 = vld [vmem:[%s219 + $0xd4] sm:$0xf]
      %v280 = vld [vmem:[%s219 + $0xd8] sm:$0xf]
      %v281 = vld [vmem:[%s219 + $0xdc] sm:$0xf]
      %v282 = vld [vmem:[%s219 + $0xe0] sm:$0xf]
      %v283 = vld [vmem:[%s219 + $0xe4] sm:$0xf]
      %v284 = vld [vmem:[%s219 + $0xe8] sm:$0xf]
      %v285 = vld [vmem:[%s219 + $0xec] sm:$0xf]
      %v286 = vld [vmem:[%s219 + $0xf0] sm:$0xf]
      %v287 = vld [vmem:[%s219 + $0xf4] sm:$0xf]
      %v288 = vld [vmem:[%s219 + $0xf8] sm:$0xf]
      %v289 = vld [vmem:[%s219 + $0xfc] sm:$0xf]
      %v290 = vld [vmem:[%s219 + $0x100] sm:$0xf]
      %v291 = vld [vmem:[%s219 + $0x104] sm:$0xf]
      %v292 = vld [vmem:[%s219 + $0x108] sm:$0xf]
      %v293 = vld [vmem:[%s219 + $0x10c] sm:$0xf]
      %v294 = vld [vmem:[%s219 + $0x110] sm:$0xf]
      %v295 = vld [vmem:[%s219 + $0x114] sm:$0xf]
      %v296 = vld [vmem:[%s219 + $0x118] sm:$0xf]
      %v297 = vld [vmem:[%s219 + $0x11c] sm:$0xf]
      %v298 = vld [vmem:[%s219 + $0x120] sm:$0xf]
      %v299 = vld [vmem:[%s219 + $0x124] sm:$0xf]
      %v300 = vld [vmem:[%s219 + $0x128] sm:$0xf]
      %v301 = vld [vmem:[%s219 + $0x12c] sm:$0xf]
      %v302 = vld [vmem:[%s219 + $0x130] sm:$0xf]
      %v303 = vld [vmem:[%s219 + $0x134] sm:$0xf]
      %v304 = vld [vmem:[%s219 + $0x138] sm:$0xf]
      %v305 = vld [vmem:[%s219 + $0x13c] sm:$0xf]
      %v306 = vld [vmem:[%s219 + $0x140] sm:$0xf]
      %v307 = vld [vmem:[%s219 + $0x144] sm:$0xf]
      %v308 = vld [vmem:[%s219 + $0x148] sm:$0xf]
      %v309 = vld [vmem:[%s219 + $0x14c] sm:$0xf]
      %v310 = vld [vmem:[%s219 + $0x150] sm:$0xf]
      %v311 = vld [vmem:[%s219 + $0x154] sm:$0xf]
      %v312 = vld [vmem:[%s219 + $0x158] sm:$0xf]
      %v313 = vld [vmem:[%s219 + $0x15c] sm:$0xf]
      %v314 = vld [vmem:[%s219 + $0x160] sm:$0xf]
      %v315 = vld [vmem:[%s219 + $0x164] sm:$0xf]
      %v316 = vld [vmem:[%s219 + $0x168] sm:$0xf]
      %v317 = vld [vmem:[%s219 + $0x16c] sm:$0xf]
      %v318 = vld [vmem:[%s219 + $0x170] sm:$0xf]
      %v319 = vld [vmem:[%s219 + $0x174] sm:$0xf]
      %v320 = vld [vmem:[%s219 + $0x178] sm:$0xf]
      %v321 = vld [vmem:[%s219 + $0x17c] sm:$0xf]
      %v322 = vld [vmem:[%s219 + $0x180] sm:$0xf]
      %v323 = vld [vmem:[%s219 + $0x184] sm:$0xf]
      %v324 = vld [vmem:[%s219 + $0x188] sm:$0xf]
      %v325 = vld [vmem:[%s219 + $0x18c] sm:$0xf]
      %v326 = vld [vmem:[%s219 + $0x190] sm:$0xf]
      %v327 = vld [vmem:[%s219 + $0x194] sm:$0xf]
      %v328 = vld [vmem:[%s219 + $0x198] sm:$0xf]
      %v329 = vld [vmem:[%s219 + $0x19c] sm:$0xf]
      %v330 = vld [vmem:[%s219 + $0x1a0] sm:$0xf]
      %v331 = vld [vmem:[%s219 + $0x1a4] sm:$0xf]
      %v332 = vld [vmem:[%s219 + $0x1a8] sm:$0xf]
      %v333 = vld [vmem:[%s219 + $0x1ac] sm:$0xf]
      %v334 = vld [vmem:[%s219 + $0x1b0] sm:$0xf]
      %v335 = vld [vmem:[%s219 + $0x1b4] sm:$0xf]
      %v336 = vld [vmem:[%s219 + $0x1b8] sm:$0xf]
      %v337 = vld [vmem:[%s219 + $0x1bc] sm:$0xf]
      %v338 = vld [vmem:[%s219 + $0x1c0] sm:$0xf]
      %v339 = vld [vmem:[%s219 + $0x1c4] sm:$0xf]
      %v340 = vld [vmem:[%s219 + $0x1c8] sm:$0xf]
      %v341 = vld [vmem:[%s219 + $0x1cc] sm:$0xf]
      %v342 = vld [vmem:[%s219 + $0x1d0] sm:$0xf]
      %v343 = vld [vmem:[%s219 + $0x1d4] sm:$0xf]
      %v344 = vld [vmem:[%s219 + $0x1d8] sm:$0xf]
      %v345 = vld [vmem:[%s219 + $0x1dc] sm:$0xf]
      %v346 = vld [vmem:[%s1] sm:$0xf]
      %v347 = vld [vmem:[%s1 + $0x4] sm:$0xf]
      %v348 = vld [vmem:[%s1 + $0x8] sm:$0xf]
      %v349 = vld [vmem:[%s1 + $0xc] sm:$0x3]
      %v350 = vld [vmem:[%s2] sm:$0x1]
      %v352 = vperm.slane %v350, 0
      %v474 = vunpack.c.l.b16 %v226
      %v475 = vunpack.c.l.b16 %v227
      %v476 = vunpack.c.l.b16 %v228
      %v477 = vunpack.c.l.b16 %v229
      %v478 = vunpack.c.l.b16 %v230
      %v479 = vunpack.c.l.b16 %v231
      %v480 = vunpack.c.l.b16 %v232
      %v481 = vunpack.c.l.b16 %v233
      %v482 = vunpack.c.l.b16 %v234
      %v483 = vunpack.c.l.b16 %v235
      %v484 = vunpack.c.l.b16 %v236
      %v485 = vunpack.c.l.b16 %v237
      %v486 = vunpack.c.l.b16 %v238
      %v487 = vunpack.c.l.b16 %v239
      %v488 = vunpack.c.l.b16 %v240
      %v489 = vunpack.c.l.b16 %v241
      %v490 = vunpack.c.l.b16 %v242
      %v491 = vunpack.c.l.b16 %v243
      %v492 = vunpack.c.l.b16 %v244
      %v493 = vunpack.c.l.b16 %v245
      %v494 = vunpack.c.l.b16 %v246
      %v495 = vunpack.c.l.b16 %v247
      %v496 = vunpack.c.l.b16 %v248
      %v497 = vunpack.c.l.b16 %v249
      %v498 = vunpack.c.l.b16 %v250
      %v499 = vunpack.c.l.b16 %v251
      %v500 = vunpack.c.l.b16 %v252
      %v501 = vunpack.c.l.b16 %v253
      %v502 = vunpack.c.l.b16 %v254
      %v503 = vunpack.c.l.b16 %v255
      %v504 = vunpack.c.l.b16 %v256
      %v505 = vunpack.c.l.b16 %v257
      %v506 = vunpack.c.l.b16 %v258
      %v507 = vunpack.c.l.b16 %v259
      %v508 = vunpack.c.l.b16 %v260
      %v509 = vunpack.c.l.b16 %v261
      %v510 = vunpack.c.l.b16 %v262
      %v511 = vunpack.c.l.b16 %v263
      %v512 = vunpack.c.l.b16 %v264
      %v513 = vunpack.c.l.b16 %v265
      %v514 = vunpack.c.l.b16 %v266
      %v515 = vunpack.c.l.b16 %v267
      %v516 = vunpack.c.l.b16 %v268
      %v517 = vunpack.c.l.b16 %v269
      %v518 = vunpack.c.l.b16 %v270
      %v519 = vunpack.c.l.b16 %v271
      %v520 = vunpack.c.l.b16 %v272
      %v521 = vunpack.c.l.b16 %v273
      %v522 = vunpack.c.l.b16 %v274
      %v523 = vunpack.c.l.b16 %v275
      %v524 = vunpack.c.l.b16 %v276
      %v525 = vunpack.c.l.b16 %v277
      %v526 = vunpack.c.l.b16 %v278
      %v527 = vunpack.c.l.b16 %v279
      %v528 = vunpack.c.l.b16 %v280
      %v529 = vunpack.c.l.b16 %v281
      %v530 = vunpack.c.l.b16 %v282
      %v531 = vunpack.c.l.b16 %v283
      %v532 = vunpack.c.l.b16 %v284
      %v533 = vunpack.c.l.b16 %v285
      %v534 = vunpack.c.l.b16 %v286
      %v535 = vunpack.c.l.b16 %v287
      %v536 = vunpack.c.l.b16 %v288
      %v537 = vunpack.c.l.b16 %v289
      %v538 = vunpack.c.l.b16 %v290
      %v539 = vunpack.c.l.b16 %v291
      %v540 = vunpack.c.l.b16 %v292
      %v541 = vunpack.c.l.b16 %v293
      %v542 = vunpack.c.l.b16 %v294
      %v543 = vunpack.c.l.b16 %v295
      %v544 = vunpack.c.l.b16 %v296
      %v545 = vunpack.c.l.b16 %v297
      %v546 = vunpack.c.l.b16 %v298
      %v547 = vunpack.c.l.b16 %v299
      %v548 = vunpack.c.l.b16 %v300
      %v549 = vunpack.c.l.b16 %v301
      %v550 = vunpack.c.l.b16 %v302
      %v551 = vunpack.c.l.b16 %v303
      %v552 = vunpack.c.l.b16 %v304
      %v553 = vunpack.c.l.b16 %v305
      %v554 = vunpack.c.l.b16 %v306
      %v555 = vunpack.c.l.b16 %v307
      %v556 = vunpack.c.l.b16 %v308
      %v557 = vunpack.c.l.b16 %v309
      %v558 = vunpack.c.l.b16 %v310
      %v559 = vunpack.c.l.b16 %v311
      %v560 = vunpack.c.l.b16 %v312
      %v561 = vunpack.c.l.b16 %v313
      %v562 = vunpack.c.l.b16 %v314
      %v563 = vunpack.c.l.b16 %v315
      %v564 = vunpack.c.l.b16 %v316
      %v565 = vunpack.c.l.b16 %v317
      %v566 = vunpack.c.l.b16 %v318
      %v567 = vunpack.c.l.b16 %v319
      %v568 = vunpack.c.l.b16 %v320
      %v569 = vunpack.c.l.b16 %v321
      %v570 = vunpack.c.l.b16 %v322
      %v571 = vunpack.c.l.b16 %v323
      %v572 = vunpack.c.l.b16 %v324
      %v573 = vunpack.c.l.b16 %v325
      %v574 = vunpack.c.l.b16 %v326
      %v575 = vunpack.c.l.b16 %v327
      %v576 = vunpack.c.l.b16 %v328
      %v577 = vunpack.c.l.b16 %v329
      %v578 = vunpack.c.l.b16 %v330
      %v579 = vunpack.c.l.b16 %v331
      %v580 = vunpack.c.l.b16 %v332
      %v581 = vunpack.c.l.b16 %v333
      %v582 = vunpack.c.l.b16 %v334
      %v583 = vunpack.c.l.b16 %v335
      %v584 = vunpack.c.l.b16 %v336
      %v585 = vunpack.c.l.b16 %v337
      %v586 = vunpack.c.l.b16 %v338
      %v587 = vunpack.c.l.b16 %v339
      %v588 = vunpack.c.l.b16 %v340
      %v589 = vunpack.c.l.b16 %v341
      %v590 = vunpack.c.l.b16 %v342
      %v591 = vunpack.c.l.b16 %v343
      %v592 = vunpack.c.l.b16 %v344
      %v593 = vunpack.c.l.b16 %v345
      %v594 = vpack.c.b16 %v475, %v474
      %v595 = vpack.c.b16 %v477, %v476
      %v596 = vpack.c.b16 %v479, %v478
      %v597 = vpack.c.b16 %v481, %v480
      %v598 = vpack.c.b16 %v483, %v482
      %v599 = vpack.c.b16 %v485, %v484
      %v600 = vpack.c.b16 %v487, %v486
      %v601 = vpack.c.b16 %v489, %v488
      %v602 = vpack.c.b16 %v491, %v490
      %v603 = vpack.c.b16 %v493, %v492
      %v604 = vpack.c.b16 %v495, %v494
      %v605 = vpack.c.b16 %v497, %v496
      %v606 = vpack.c.b16 %v499, %v498
      %v607 = vpack.c.b16 %v501, %v500
      %v608 = vpack.c.b16 %v503, %v502
      %v609 = vpack.c.b16 %v505, %v504
      %v610 = vpack.c.b16 %v507, %v506
      %v611 = vpack.c.b16 %v509, %v508
      %v612 = vpack.c.b16 %v511, %v510
      %v613 = vpack.c.b16 %v513, %v512
      %v614 = vpack.c.b16 %v515, %v514
      %v615 = vpack.c.b16 %v517, %v516
      %v616 = vpack.c.b16 %v519, %v518
      %v617 = vpack.c.b16 %v521, %v520
      %v618 = vpack.c.b16 %v523, %v522
      %v619 = vpack.c.b16 %v525, %v524
      %v620 = vpack.c.b16 %v527, %v526
      %v621 = vpack.c.b16 %v529, %v528
      %v622 = vpack.c.b16 %v531, %v530
      %v623 = vpack.c.b16 %v533, %v532
      %v624 = vpack.c.b16 %v535, %v534
      %v625 = vpack.c.b16 %v537, %v536
      %v626 = vpack.c.b16 %v539, %v538
      %v627 = vpack.c.b16 %v541, %v540
      %v628 = vpack.c.b16 %v543, %v542
      %v629 = vpack.c.b16 %v545, %v544
      %v630 = vpack.c.b16 %v547, %v546
      %v631 = vpack.c.b16 %v549, %v548
      %v632 = vpack.c.b16 %v551, %v550
      %v633 = vpack.c.b16 %v553, %v552
      %v634 = vpack.c.b16 %v555, %v554
      %v635 = vpack.c.b16 %v557, %v556
      %v636 = vpack.c.b16 %v559, %v558
      %v637 = vpack.c.b16 %v561, %v560
      %v638 = vpack.c.b16 %v563, %v562
      %v639 = vpack.c.b16 %v565, %v564
      %v640 = vpack.c.b16 %v567, %v566
      %v641 = vpack.c.b16 %v569, %v568
      %v642 = vpack.c.b16 %v571, %v570
      %v643 = vpack.c.b16 %v573, %v572
      %v644 = vpack.c.b16 %v575, %v574
      %v645 = vpack.c.b16 %v577, %v576
      %v646 = vpack.c.b16 %v579, %v578
      %v647 = vpack.c.b16 %v581, %v580
      %v648 = vpack.c.b16 %v583, %v582
      %v649 = vpack.c.b16 %v585, %v584
      %v650 = vpack.c.b16 %v587, %v586
      %v651 = vpack.c.b16 %v589, %v588
      %v652 = vpack.c.b16 %v591, %v590
      %v653 = vpack.c.b16 %v593, %v592
      %v658 = vunpack.c.l.b16 %v346
      %v659 = vunpack.c.l.b16 %v347
      %v660 = vunpack.c.l.b16 %v348
      %v661 = vunpack.c.l.b16 %v349
      %v662 = vpack.c.b16 %v659, %v658
      %v663 = vpack.c.b16 %v661, %v660
      %vm665 = vcmask 220160
      %v667 = vsel %vm665, %v594, 0
      %v670 = vsel %vm665, %v595, 0
      %v673 = vsel %vm665, %v596, 0
      %v676 = vsel %vm665, %v597, 0
      %v679 = vsel %vm665, %v598, 0
      %v682 = vsel %vm665, %v599, 0
      %v685 = vsel %vm665, %v600, 0
      %v688 = vsel %vm665, %v601, 0
      %v691 = vsel %vm665, %v602, 0
      %v694 = vsel %vm665, %v603, 0
      %v697 = vsel %vm665, %v604, 0
      %v700 = vsel %vm665, %v605, 0
      %v703 = vsel %vm665, %v606, 0
      %v706 = vsel %vm665, %v607, 0
      %v709 = vsel %vm665, %v608, 0
      %v712 = vsel %vm665, %v609, 0
      %v715 = vsel %vm665, %v610, 0
      %v718 = vsel %vm665, %v611, 0
      %v721 = vsel %vm665, %v612, 0
      %v724 = vsel %vm665, %v613, 0
      %v727 = vsel %vm665, %v614, 0
      %v730 = vsel %vm665, %v615, 0
      %v733 = vsel %vm665, %v616, 0
      %v736 = vsel %vm665, %v617, 0
      %v739 = vsel %vm665, %v618, 0
      %v742 = vsel %vm665, %v619, 0
      %v745 = vsel %vm665, %v620, 0
      %v748 = vsel %vm665, %v621, 0
      %v751 = vsel %vm665, %v622, 0
      %v754 = vsel %vm665, %v623, 0
      %v757 = vsel %vm665, %v624, 0
      %v760 = vsel %vm665, %v625, 0
      %v763 = vsel %vm665, %v626, 0
      %v766 = vsel %vm665, %v627, 0
      %v769 = vsel %vm665, %v628, 0
      %v772 = vsel %vm665, %v629, 0
      %v775 = vsel %vm665, %v630, 0
      %v778 = vsel %vm665, %v631, 0
      %v781 = vsel %vm665, %v632, 0
      %v784 = vsel %vm665, %v633, 0
      %v787 = vsel %vm665, %v634, 0
      %v790 = vsel %vm665, %v635, 0
      %v793 = vsel %vm665, %v636, 0
      %v796 = vsel %vm665, %v637, 0
      %v799 = vsel %vm665, %v638, 0
      %v802 = vsel %vm665, %v639, 0
      %v805 = vsel %vm665, %v640, 0
      %v808 = vsel %vm665, %v641, 0
      %v811 = vsel %vm665, %v642, 0
      %v814 = vsel %vm665, %v643, 0
      %v817 = vsel %vm665, %v644, 0
      %v820 = vsel %vm665, %v645, 0
      %v823 = vsel %vm665, %v646, 0
      %v826 = vsel %vm665, %v647, 0
      %v829 = vsel %vm665, %v648, 0
      %v832 = vsel %vm665, %v649, 0
      %v835 = vsel %vm665, %v650, 0
      %v838 = vsel %vm665, %v651, 0
      %v841 = vsel %vm665, %v652, 0
      %v844 = vsel %vm665, %v653, 0
      %vm846 = vcmask 1044480
      %vm847 = vcmask 1045504
      %v848 = vsel %vm846, 4294967295, 65535
      %v849 = vsel %vm847, %v848, 0
      %v851 = vand.u32 %v663, %v849
      %853 = vmatpush.bf16.msra.mxu0 0
      %854 = vmatpush.bf16.msra.mxu0 0
      %855 = vmatpush.bf16.msra.mxu0 0
      %856 = vmatpush.bf16.msra.mxu0 0
      %857 = vmatpush.bf16.msra.mxu0 0
      %858 = vmatpush.bf16.msra.mxu0 0
      %859 = vmatpush.bf16.msra.mxu0 %v851
      %860 = vmatpush.bf16.msra.mxu0 %v662
      %861 = vmatmul.bf16.gmra.mxu0 %v667
      %v862 = vpop.f32.mrf.mxu0
      %v863 = vadd.f32 %v352, %v862
      %v864 = vpop.f32.mrf.mxu0
      %v865 = vadd.f32 %v352, %v864
      %866 = vmatmul.bf16.gmra.mxu0 %v670
      %v867 = vpop.f32.mrf.mxu0
      %v868 = vadd.f32 %v352, %v867
      %v869 = vpop.f32.mrf.mxu0
      %v870 = vadd.f32 %v352, %v869
      %871 = vmatmul.bf16.gmra.mxu0 %v673
      %v872 = vpop.f32.mrf.mxu0
      %v873 = vadd.f32 %v352, %v872
      %v874 = vpop.f32.mrf.mxu0
      %v875 = vadd.f32 %v352, %v874
      %876 = vmatmul.bf16.gmra.mxu0 %v676
      %v877 = vpop.f32.mrf.mxu0
      %v878 = vadd.f32 %v352, %v877
      %v879 = vpop.f32.mrf.mxu0
      %v880 = vadd.f32 %v352, %v879
      %881 = vmatmul.bf16.gmra.mxu0 %v679
      %v882 = vpop.f32.mrf.mxu0
      %v883 = vadd.f32 %v352, %v882
      %v884 = vpop.f32.mrf.mxu0
      %v885 = vadd.f32 %v352, %v884
      %886 = vmatmul.bf16.gmra.mxu0 %v682
      %v887 = vpop.f32.mrf.mxu0
      %v888 = vadd.f32 %v352, %v887
      %v889 = vpop.f32.mrf.mxu0
      %v890 = vadd.f32 %v352, %v889
      %891 = vmatmul.bf16.gmra.mxu0 %v685
      %v892 = vpop.f32.mrf.mxu0
      %v893 = vadd.f32 %v352, %v892
      %v894 = vpop.f32.mrf.mxu0
      %v895 = vadd.f32 %v352, %v894
      %896 = vmatmul.bf16.gmra.mxu0 %v688
      %v897 = vpop.f32.mrf.mxu0
      %v898 = vadd.f32 %v352, %v897
      %v899 = vpop.f32.mrf.mxu0
      %v900 = vadd.f32 %v352, %v899
      %901 = vmatmul.bf16.gmra.mxu0 %v691
      %v902 = vpop.f32.mrf.mxu0
      %v903 = vadd.f32 %v352, %v902
      %v904 = vpop.f32.mrf.mxu0
      %v905 = vadd.f32 %v352, %v904
      %906 = vmatmul.bf16.gmra.mxu0 %v694
      %v907 = vpop.f32.mrf.mxu0
      %v908 = vadd.f32 %v352, %v907
      %v909 = vpop.f32.mrf.mxu0
      %v910 = vadd.f32 %v352, %v909
      %911 = vmatmul.bf16.gmra.mxu0 %v697
      %v912 = vpop.f32.mrf.mxu0
      %v913 = vadd.f32 %v352, %v912
      %v914 = vpop.f32.mrf.mxu0
      %v915 = vadd.f32 %v352, %v914
      %916 = vmatmul.bf16.gmra.mxu0 %v700
      %v917 = vpop.f32.mrf.mxu0
      %v918 = vadd.f32 %v352, %v917
      %v919 = vpop.f32.mrf.mxu0
      %v920 = vadd.f32 %v352, %v919
      %921 = vmatmul.bf16.gmra.mxu0 %v703
      %v922 = vpop.f32.mrf.mxu0
      %v923 = vadd.f32 %v352, %v922
      %v924 = vpop.f32.mrf.mxu0
      %v925 = vadd.f32 %v352, %v924
      %926 = vmatmul.bf16.gmra.mxu0 %v706
      %v927 = vpop.f32.mrf.mxu0
      %v928 = vadd.f32 %v352, %v927
      %v929 = vpop.f32.mrf.mxu0
      %v930 = vadd.f32 %v352, %v929
      %931 = vmatmul.bf16.gmra.mxu0 %v709
      %v932 = vpop.f32.mrf.mxu0
      %v933 = vadd.f32 %v352, %v932
      %v934 = vpop.f32.mrf.mxu0
      %v935 = vadd.f32 %v352, %v934
      %936 = vmatmul.bf16.gmra.mxu0 %v712
      %v937 = vpop.f32.mrf.mxu0
      %v938 = vadd.f32 %v352, %v937
      %v939 = vpop.f32.mrf.mxu0
      %v940 = vadd.f32 %v352, %v939
      %941 = vmatmul.bf16.gmra.mxu0 %v715
      %v942 = vpop.f32.mrf.mxu0
      %v943 = vadd.f32 %v352, %v942
      %v944 = vpop.f32.mrf.mxu0
      %v945 = vadd.f32 %v352, %v944
      %946 = vmatmul.bf16.gmra.mxu0 %v718
      %v947 = vpop.f32.mrf.mxu0
      %v948 = vadd.f32 %v352, %v947
      %v949 = vpop.f32.mrf.mxu0
      %v950 = vadd.f32 %v352, %v949
      %951 = vmatmul.bf16.gmra.mxu0 %v721
      %v952 = vpop.f32.mrf.mxu0
      %v953 = vadd.f32 %v352, %v952
      %v954 = vpop.f32.mrf.mxu0
      %v955 = vadd.f32 %v352, %v954
      %956 = vmatmul.bf16.gmra.mxu0 %v724
      %v957 = vpop.f32.mrf.mxu0
      %v958 = vadd.f32 %v352, %v957
      %v959 = vpop.f32.mrf.mxu0
      %v960 = vadd.f32 %v352, %v959
      %961 = vmatmul.bf16.gmra.mxu0 %v727
      %v962 = vpop.f32.mrf.mxu0
      %v963 = vadd.f32 %v352, %v962
      %v964 = vpop.f32.mrf.mxu0
      %v965 = vadd.f32 %v352, %v964
      %966 = vmatmul.bf16.gmra.mxu0 %v730
      %v967 = vpop.f32.mrf.mxu0
      %v968 = vadd.f32 %v352, %v967
      %v969 = vpop.f32.mrf.mxu0
      %v970 = vadd.f32 %v352, %v969
      %971 = vmatmul.bf16.gmra.mxu0 %v733
      %v972 = vpop.f32.mrf.mxu0
      %v973 = vadd.f32 %v352, %v972
      %v974 = vpop.f32.mrf.mxu0
      %v975 = vadd.f32 %v352, %v974
      %976 = vmatmul.bf16.gmra.mxu0 %v736
      %v977 = vpop.f32.mrf.mxu0
      %v978 = vadd.f32 %v352, %v977
      %v979 = vpop.f32.mrf.mxu0
      %v980 = vadd.f32 %v352, %v979
      %981 = vmatmul.bf16.gmra.mxu0 %v739
      %v982 = vpop.f32.mrf.mxu0
      %v983 = vadd.f32 %v352, %v982
      %v984 = vpop.f32.mrf.mxu0
      %v985 = vadd.f32 %v352, %v984
      %986 = vmatmul.bf16.gmra.mxu0 %v742
      %v987 = vpop.f32.mrf.mxu0
      %v988 = vadd.f32 %v352, %v987
      %v989 = vpop.f32.mrf.mxu0
      %v990 = vadd.f32 %v352, %v989
      %991 = vmatmul.bf16.gmra.mxu0 %v745
      %v992 = vpop.f32.mrf.mxu0
      %v993 = vadd.f32 %v352, %v992
      %v994 = vpop.f32.mrf.mxu0
      %v995 = vadd.f32 %v352, %v994
      %996 = vmatmul.bf16.gmra.mxu0 %v748
      %v997 = vpop.f32.mrf.mxu0
      %v998 = vadd.f32 %v352, %v997
      %v999 = vpop.f32.mrf.mxu0
      %v1000 = vadd.f32 %v352, %v999
      %1001 = vmatmul.bf16.gmra.mxu0 %v751
      %v1002 = vpop.f32.mrf.mxu0
      %v1003 = vadd.f32 %v352, %v1002
      %v1004 = vpop.f32.mrf.mxu0
      %v1005 = vadd.f32 %v352, %v1004
      %1006 = vmatmul.bf16.gmra.mxu0 %v754
      %v1007 = vpop.f32.mrf.mxu0
      %v1008 = vadd.f32 %v352, %v1007
      %v1009 = vpop.f32.mrf.mxu0
      %v1010 = vadd.f32 %v352, %v1009
      %1011 = vmatmul.bf16.gmra.mxu0 %v757
      %v1012 = vpop.f32.mrf.mxu0
      %v1013 = vadd.f32 %v352, %v1012
      %v1014 = vpop.f32.mrf.mxu0
      %v1015 = vadd.f32 %v352, %v1014
      %1016 = vmatmul.bf16.gmra.mxu0 %v760
      %v1017 = vpop.f32.mrf.mxu0
      %v1018 = vadd.f32 %v352, %v1017
      %v1019 = vpop.f32.mrf.mxu0
      %v1020 = vadd.f32 %v352, %v1019
      %1021 = vmatmul.bf16.gmra.mxu0 %v763
      %v1022 = vpop.f32.mrf.mxu0
      %v1023 = vadd.f32 %v352, %v1022
      %v1024 = vpop.f32.mrf.mxu0
      %v1025 = vadd.f32 %v352, %v1024
      %1026 = vmatmul.bf16.gmra.mxu0 %v766
      %v1027 = vpop.f32.mrf.mxu0
      %v1028 = vadd.f32 %v352, %v1027
      %v1029 = vpop.f32.mrf.mxu0
      %v1030 = vadd.f32 %v352, %v1029
      %1031 = vmatmul.bf16.gmra.mxu0 %v769
      %v1032 = vpop.f32.mrf.mxu0
      %v1033 = vadd.f32 %v352, %v1032
      %v1034 = vpop.f32.mrf.mxu0
      %v1035 = vadd.f32 %v352, %v1034
      %1036 = vmatmul.bf16.gmra.mxu0 %v772
      %v1037 = vpop.f32.mrf.mxu0
      %v1038 = vadd.f32 %v352, %v1037
      %v1039 = vpop.f32.mrf.mxu0
      %v1040 = vadd.f32 %v352, %v1039
      %1041 = vmatmul.bf16.gmra.mxu0 %v775
      %v1042 = vpop.f32.mrf.mxu0
      %v1043 = vadd.f32 %v352, %v1042
      %v1044 = vpop.f32.mrf.mxu0
      %v1045 = vadd.f32 %v352, %v1044
      %1046 = vmatmul.bf16.gmra.mxu0 %v778
      %v1047 = vpop.f32.mrf.mxu0
      %v1048 = vadd.f32 %v352, %v1047
      %v1049 = vpop.f32.mrf.mxu0
      %v1050 = vadd.f32 %v352, %v1049
      %1051 = vmatmul.bf16.gmra.mxu0 %v781
      %v1052 = vpop.f32.mrf.mxu0
      %v1053 = vadd.f32 %v352, %v1052
      %v1054 = vpop.f32.mrf.mxu0
      %v1055 = vadd.f32 %v352, %v1054
      %1056 = vmatmul.bf16.gmra.mxu0 %v784
      %v1057 = vpop.f32.mrf.mxu0
      %v1058 = vadd.f32 %v352, %v1057
      %v1059 = vpop.f32.mrf.mxu0
      %v1060 = vadd.f32 %v352, %v1059
      %1061 = vmatmul.bf16.gmra.mxu0 %v787
      %v1062 = vpop.f32.mrf.mxu0
      %v1063 = vadd.f32 %v352, %v1062
      %v1064 = vpop.f32.mrf.mxu0
      %v1065 = vadd.f32 %v352, %v1064
      %1066 = vmatmul.bf16.gmra.mxu0 %v790
      %v1067 = vpop.f32.mrf.mxu0
      %v1068 = vadd.f32 %v352, %v1067
      %v1069 = vpop.f32.mrf.mxu0
      %v1070 = vadd.f32 %v352, %v1069
      %1071 = vmatmul.bf16.gmra.mxu0 %v793
      %v1072 = vpop.f32.mrf.mxu0
      %v1073 = vadd.f32 %v352, %v1072
      %v1074 = vpop.f32.mrf.mxu0
      %v1075 = vadd.f32 %v352, %v1074
      %1076 = vmatmul.bf16.gmra.mxu0 %v796
      %v1077 = vpop.f32.mrf.mxu0
      %v1078 = vadd.f32 %v352, %v1077
      %v1079 = vpop.f32.mrf.mxu0
      %v1080 = vadd.f32 %v352, %v1079
      %1081 = vmatmul.bf16.gmra.mxu0 %v799
      %v1082 = vpop.f32.mrf.mxu0
      %v1083 = vadd.f32 %v352, %v1082
      %v1084 = vpop.f32.mrf.mxu0
      %v1085 = vadd.f32 %v352, %v1084
      %1086 = vmatmul.bf16.gmra.mxu0 %v802
      %v1087 = vpop.f32.mrf.mxu0
      %v1088 = vadd.f32 %v352, %v1087
      %v1089 = vpop.f32.mrf.mxu0
      %v1090 = vadd.f32 %v352, %v1089
      %1091 = vmatmul.bf16.gmra.mxu0 %v805
      %v1092 = vpop.f32.mrf.mxu0
      %v1093 = vadd.f32 %v352, %v1092
      %v1094 = vpop.f32.mrf.mxu0
      %v1095 = vadd.f32 %v352, %v1094
      %1096 = vmatmul.bf16.gmra.mxu0 %v808
      %v1097 = vpop.f32.mrf.mxu0
      %v1098 = vadd.f32 %v352, %v1097
      %v1099 = vpop.f32.mrf.mxu0
      %v1100 = vadd.f32 %v352, %v1099
      %1101 = vmatmul.bf16.gmra.mxu0 %v811
      %v1102 = vpop.f32.mrf.mxu0
      %v1103 = vadd.f32 %v352, %v1102
      %v1104 = vpop.f32.mrf.mxu0
      %v1105 = vadd.f32 %v352, %v1104
      %1106 = vmatmul.bf16.gmra.mxu0 %v814
      %v1107 = vpop.f32.mrf.mxu0
      %v1108 = vadd.f32 %v352, %v1107
      %v1109 = vpop.f32.mrf.mxu0
      %v1110 = vadd.f32 %v352, %v1109
      %1111 = vmatmul.bf16.gmra.mxu0 %v817
      %v1112 = vpop.f32.mrf.mxu0
      %v1113 = vadd.f32 %v352, %v1112
      %v1114 = vpop.f32.mrf.mxu0
      %v1115 = vadd.f32 %v352, %v1114
      %1116 = vmatmul.bf16.gmra.mxu0 %v820
      %v1117 = vpop.f32.mrf.mxu0
      %v1118 = vadd.f32 %v352, %v1117
      %v1119 = vpop.f32.mrf.mxu0
      %v1120 = vadd.f32 %v352, %v1119
      %1121 = vmatmul.bf16.gmra.mxu0 %v823
      %v1122 = vpop.f32.mrf.mxu0
      %v1123 = vadd.f32 %v352, %v1122
      %v1124 = vpop.f32.mrf.mxu0
      %v1125 = vadd.f32 %v352, %v1124
      %1126 = vmatmul.bf16.gmra.mxu0 %v826
      %v1127 = vpop.f32.mrf.mxu0
      %v1128 = vadd.f32 %v352, %v1127
      %v1129 = vpop.f32.mrf.mxu0
      %v1130 = vadd.f32 %v352, %v1129
      %1131 = vmatmul.bf16.gmra.mxu0 %v829
      %v1132 = vpop.f32.mrf.mxu0
      %v1133 = vadd.f32 %v352, %v1132
      %v1134 = vpop.f32.mrf.mxu0
      %v1135 = vadd.f32 %v352, %v1134
      %1136 = vmatmul.bf16.gmra.mxu0 %v832
      %v1137 = vpop.f32.mrf.mxu0
      %v1138 = vadd.f32 %v352, %v1137
      %v1139 = vpop.f32.mrf.mxu0
      %v1140 = vadd.f32 %v352, %v1139
      %1141 = vmatmul.bf16.gmra.mxu0 %v835
      %v1142 = vpop.f32.mrf.mxu0
      %v1143 = vadd.f32 %v352, %v1142
      %v1144 = vpop.f32.mrf.mxu0
      %v1145 = vadd.f32 %v352, %v1144
      %1146 = vmatmul.bf16.gmra.mxu0 %v838
      %v1147 = vpop.f32.mrf.mxu0
      %v1148 = vadd.f32 %v352, %v1147
      %v1149 = vpop.f32.mrf.mxu0
      %v1150 = vadd.f32 %v352, %v1149
      %1151 = vmatmul.bf16.gmra.mxu0 %v841
      %v1152 = vpop.f32.mrf.mxu0
      %v1153 = vadd.f32 %v352, %v1152
      %v1154 = vpop.f32.mrf.mxu0
      %v1155 = vadd.f32 %v352, %v1154
      %1156 = vmatmul.bf16.gmra.mxu0 %v844
      %v1157 = vpop.f32.mrf.mxu0
      %v1158 = vadd.f32 %v352, %v1157
      %v1159 = vpop.f32.mrf.mxu0
      %v1160 = vadd.f32 %v352, %v1159
      %1161 = vdwg.mxu0
      %v1162 = vmax.f32 %v863, 0.0
      %v1163 = vmax.f32 %v865, 0.0
      %v1164 = vmax.f32 %v868, 0.0
      %v1165 = vmax.f32 %v870, 0.0
      %v1166 = vmax.f32 %v873, 0.0
      %v1167 = vmax.f32 %v875, 0.0
      %v1168 = vmax.f32 %v878, 0.0
      %v1169 = vmax.f32 %v880, 0.0
      %v1170 = vmax.f32 %v883, 0.0
      %v1171 = vmax.f32 %v885, 0.0
      %v1172 = vmax.f32 %v888, 0.0
      %v1173 = vmax.f32 %v890, 0.0
      %v1174 = vmax.f32 %v893, 0.0
      %v1175 = vmax.f32 %v895, 0.0
      %v1176 = vmax.f32 %v898, 0.0
      %v1177 = vmax.f32 %v900, 0.0
      %v1178 = vmax.f32 %v903, 0.0
      %v1179 = vmax.f32 %v905, 0.0
      %v1180 = vmax.f32 %v908, 0.0
      %v1181 = vmax.f32 %v910, 0.0
      %v1182 = vmax.f32 %v913, 0.0
      %v1183 = vmax.f32 %v915, 0.0
      %v1184 = vmax.f32 %v918, 0.0
      %v1185 = vmax.f32 %v920, 0.0
      %v1186 = vmax.f32 %v923, 0.0
      %v1187 = vmax.f32 %v925, 0.0
      %v1188 = vmax.f32 %v928, 0.0
      %v1189 = vmax.f32 %v930, 0.0
      %v1190 = vmax.f32 %v933, 0.0
      %v1191 = vmax.f32 %v935, 0.0
      %v1192 = vmax.f32 %v938, 0.0
      %v1193 = vmax.f32 %v940, 0.0
      %v1194 = vmax.f32 %v943, 0.0
      %v1195 = vmax.f32 %v945, 0.0
      %v1196 = vmax.f32 %v948, 0.0
      %v1197 = vmax.f32 %v950, 0.0
      %v1198 = vmax.f32 %v953, 0.0
      %v1199 = vmax.f32 %v955, 0.0
      %v1200 = vmax.f32 %v958, 0.0
      %v1201 = vmax.f32 %v960, 0.0
      %v1202 = vmax.f32 %v963, 0.0
      %v1203 = vmax.f32 %v965, 0.0
      %v1204 = vmax.f32 %v968, 0.0
      %v1205 = vmax.f32 %v970, 0.0
      %v1206 = vmax.f32 %v973, 0.0
      %v1207 = vmax.f32 %v975, 0.0
      %v1208 = vmax.f32 %v978, 0.0
      %v1209 = vmax.f32 %v980, 0.0
      %v1210 = vmax.f32 %v983, 0.0
      %v1211 = vmax.f32 %v985, 0.0
      %v1212 = vmax.f32 %v988, 0.0
      %v1213 = vmax.f32 %v990, 0.0
      %v1214 = vmax.f32 %v993, 0.0
      %v1215 = vmax.f32 %v995, 0.0
      %v1216 = vmax.f32 %v998, 0.0
      %v1217 = vmax.f32 %v1000, 0.0
      %v1218 = vmax.f32 %v1003, 0.0
      %v1219 = vmax.f32 %v1005, 0.0
      %v1220 = vmax.f32 %v1008, 0.0
      %v1221 = vmax.f32 %v1010, 0.0
      %v1222 = vmax.f32 %v1013, 0.0
      %v1223 = vmax.f32 %v1015, 0.0
      %v1224 = vmax.f32 %v1018, 0.0
      %v1225 = vmax.f32 %v1020, 0.0
      %v1226 = vmax.f32 %v1023, 0.0
      %v1227 = vmax.f32 %v1025, 0.0
      %v1228 = vmax.f32 %v1028, 0.0
      %v1229 = vmax.f32 %v1030, 0.0
      %v1230 = vmax.f32 %v1033, 0.0
      %v1231 = vmax.f32 %v1035, 0.0
      %v1232 = vmax.f32 %v1038, 0.0
      %v1233 = vmax.f32 %v1040, 0.0
      %v1234 = vmax.f32 %v1043, 0.0
      %v1235 = vmax.f32 %v1045, 0.0
      %v1236 = vmax.f32 %v1048, 0.0
      %v1237 = vmax.f32 %v1050, 0.0
      %v1238 = vmax.f32 %v1053, 0.0
      %v1239 = vmax.f32 %v1055, 0.0
      %v1240 = vmax.f32 %v1058, 0.0
      %v1241 = vmax.f32 %v1060, 0.0
      %v1242 = vmax.f32 %v1063, 0.0
      %v1243 = vmax.f32 %v1065, 0.0
      %v1244 = vmax.f32 %v1068, 0.0
      %v1245 = vmax.f32 %v1070, 0.0
      %v1246 = vmax.f32 %v1073, 0.0
      %v1247 = vmax.f32 %v1075, 0.0
      %v1248 = vmax.f32 %v1078, 0.0
      %v1249 = vmax.f32 %v1080, 0.0
      %v1250 = vmax.f32 %v1083, 0.0
      %v1251 = vmax.f32 %v1085, 0.0
      %v1252 = vmax.f32 %v1088, 0.0
      %v1253 = vmax.f32 %v1090, 0.0
      %v1254 = vmax.f32 %v1093, 0.0
      %v1255 = vmax.f32 %v1095, 0.0
      %v1256 = vmax.f32 %v1098, 0.0
      %v1257 = vmax.f32 %v1100, 0.0
      %v1258 = vmax.f32 %v1103, 0.0
      %v1259 = vmax.f32 %v1105, 0.0
      %v1260 = vmax.f32 %v1108, 0.0
      %v1261 = vmax.f32 %v1110, 0.0
      %v1262 = vmax.f32 %v1113, 0.0
      %v1263 = vmax.f32 %v1115, 0.0
      %v1264 = vmax.f32 %v1118, 0.0
      %v1265 = vmax.f32 %v1120, 0.0
      %v1266 = vmax.f32 %v1123, 0.0
      %v1267 = vmax.f32 %v1125, 0.0
      %v1268 = vmax.f32 %v1128, 0.0
      %v1269 = vmax.f32 %v1130, 0.0
      %v1270 = vmax.f32 %v1133, 0.0
      %v1271 = vmax.f32 %v1135, 0.0
      %v1272 = vmax.f32 %v1138, 0.0
      %v1273 = vmax.f32 %v1140, 0.0
      %v1274 = vmax.f32 %v1143, 0.0
      %v1275 = vmax.f32 %v1145, 0.0
      %v1276 = vmax.f32 %v1148, 0.0
      %v1277 = vmax.f32 %v1150, 0.0
      %v1278 = vmax.f32 %v1153, 0.0
      %v1279 = vmax.f32 %v1155, 0.0
      %v1280 = vmax.f32 %v1158, 0.0
      %v1281 = vmax.f32 %v1160, 0.0
      %v1282 = vpack.c.bf16 %v1162, %v1162
      %v1283 = vpack.c.bf16 %v1163, %v1163
      %v1284 = vpack.c.bf16 %v1164, %v1164
      %v1285 = vpack.c.bf16 %v1165, %v1165
      %v1286 = vpack.c.bf16 %v1166, %v1166
      %v1287 = vpack.c.bf16 %v1167, %v1167
      %v1288 = vpack.c.bf16 %v1168, %v1168
      %v1289 = vpack.c.bf16 %v1169, %v1169
      %v1290 = vpack.c.bf16 %v1170, %v1170
      %v1291 = vpack.c.bf16 %v1171, %v1171
      %v1292 = vpack.c.bf16 %v1172, %v1172
      %v1293 = vpack.c.bf16 %v1173, %v1173
      %v1294 = vpack.c.bf16 %v1174, %v1174
      %v1295 = vpack.c.bf16 %v1175, %v1175
      %v1296 = vpack.c.bf16 %v1176, %v1176
      %v1297 = vpack.c.bf16 %v1177, %v1177
      %v1298 = vpack.c.bf16 %v1178, %v1178
      %v1299 = vpack.c.bf16 %v1179, %v1179
      %v1300 = vpack.c.bf16 %v1180, %v1180
      %v1301 = vpack.c.bf16 %v1181, %v1181
      %v1302 = vpack.c.bf16 %v1182, %v1182
      %v1303 = vpack.c.bf16 %v1183, %v1183
      %v1304 = vpack.c.bf16 %v1184, %v1184
      %v1305 = vpack.c.bf16 %v1185, %v1185
      %v1306 = vpack.c.bf16 %v1186, %v1186
      %v1307 = vpack.c.bf16 %v1187, %v1187
      %v1308 = vpack.c.bf16 %v1188, %v1188
      %v1309 = vpack.c.bf16 %v1189, %v1189
      %v1310 = vpack.c.bf16 %v1190, %v1190
      %v1311 = vpack.c.bf16 %v1191, %v1191
      %v1312 = vpack.c.bf16 %v1192, %v1192
      %v1313 = vpack.c.bf16 %v1193, %v1193
      %v1314 = vpack.c.bf16 %v1194, %v1194
      %v1315 = vpack.c.bf16 %v1195, %v1195
      %v1316 = vpack.c.bf16 %v1196, %v1196
      %v1317 = vpack.c.bf16 %v1197, %v1197
      %v1318 = vpack.c.bf16 %v1198, %v1198
      %v1319 = vpack.c.bf16 %v1199, %v1199
      %v1320 = vpack.c.bf16 %v1200, %v1200
      %v1321 = vpack.c.bf16 %v1201, %v1201
      %v1322 = vpack.c.bf16 %v1202, %v1202
      %v1323 = vpack.c.bf16 %v1203, %v1203
      %v1324 = vpack.c.bf16 %v1204, %v1204
      %v1325 = vpack.c.bf16 %v1205, %v1205
      %v1326 = vpack.c.bf16 %v1206, %v1206
      %v1327 = vpack.c.bf16 %v1207, %v1207
      %v1328 = vpack.c.bf16 %v1208, %v1208
      %v1329 = vpack.c.bf16 %v1209, %v1209
      %v1330 = vpack.c.bf16 %v1210, %v1210
      %v1331 = vpack.c.bf16 %v1211, %v1211
      %v1332 = vpack.c.bf16 %v1212, %v1212
      %v1333 = vpack.c.bf16 %v1213, %v1213
      %v1334 = vpack.c.bf16 %v1214, %v1214
      %v1335 = vpack.c.bf16 %v1215, %v1215
      %v1336 = vpack.c.bf16 %v1216, %v1216
      %v1337 = vpack.c.bf16 %v1217, %v1217
      %v1338 = vpack.c.bf16 %v1218, %v1218
      %v1339 = vpack.c.bf16 %v1219, %v1219
      %v1340 = vpack.c.bf16 %v1220, %v1220
      %v1341 = vpack.c.bf16 %v1221, %v1221
      %v1342 = vpack.c.bf16 %v1222, %v1222
      %v1343 = vpack.c.bf16 %v1223, %v1223
      %v1344 = vpack.c.bf16 %v1224, %v1224
      %v1345 = vpack.c.bf16 %v1225, %v1225
      %v1346 = vpack.c.bf16 %v1226, %v1226
      %v1347 = vpack.c.bf16 %v1227, %v1227
      %v1348 = vpack.c.bf16 %v1228, %v1228
      %v1349 = vpack.c.bf16 %v1229, %v1229
      %v1350 = vpack.c.bf16 %v1230, %v1230
      %v1351 = vpack.c.bf16 %v1231, %v1231
      %v1352 = vpack.c.bf16 %v1232, %v1232
      %v1353 = vpack.c.bf16 %v1233, %v1233
      %v1354 = vpack.c.bf16 %v1234, %v1234
      %v1355 = vpack.c.bf16 %v1235, %v1235
      %v1356 = vpack.c.bf16 %v1236, %v1236
      %v1357 = vpack.c.bf16 %v1237, %v1237
      %v1358 = vpack.c.bf16 %v1238, %v1238
      %v1359 = vpack.c.bf16 %v1239, %v1239
      %v1360 = vpack.c.bf16 %v1240, %v1240
      %v1361 = vpack.c.bf16 %v1241, %v1241
      %v1362 = vpack.c.bf16 %v1242, %v1242
      %v1363 = vpack.c.bf16 %v1243, %v1243
      %v1364 = vpack.c.bf16 %v1244, %v1244
      %v1365 = vpack.c.bf16 %v1245, %v1245
      %v1366 = vpack.c.bf16 %v1246, %v1246
      %v1367 = vpack.c.bf16 %v1247, %v1247
      %v1368 = vpack.c.bf16 %v1248, %v1248
      %v1369 = vpack.c.bf16 %v1249, %v1249
      %v1370 = vpack.c.bf16 %v1250, %v1250
      %v1371 = vpack.c.bf16 %v1251, %v1251
      %v1372 = vpack.c.bf16 %v1252, %v1252
      %v1373 = vpack.c.bf16 %v1253, %v1253
      %v1374 = vpack.c.bf16 %v1254, %v1254
      %v1375 = vpack.c.bf16 %v1255, %v1255
      %v1376 = vpack.c.bf16 %v1256, %v1256
      %v1377 = vpack.c.bf16 %v1257, %v1257
      %v1378 = vpack.c.bf16 %v1258, %v1258
      %v1379 = vpack.c.bf16 %v1259, %v1259
      %v1380 = vpack.c.bf16 %v1260, %v1260
      %v1381 = vpack.c.bf16 %v1261, %v1261
      %v1382 = vpack.c.bf16 %v1262, %v1262
      %v1383 = vpack.c.bf16 %v1263, %v1263
      %v1384 = vpack.c.bf16 %v1264, %v1264
      %v1385 = vpack.c.bf16 %v1265, %v1265
      %v1386 = vpack.c.bf16 %v1266, %v1266
      %v1387 = vpack.c.bf16 %v1267, %v1267
      %v1388 = vpack.c.bf16 %v1268, %v1268
      %v1389 = vpack.c.bf16 %v1269, %v1269
      %v1390 = vpack.c.bf16 %v1270, %v1270
      %v1391 = vpack.c.bf16 %v1271, %v1271
      %v1392 = vpack.c.bf16 %v1272, %v1272
      %v1393 = vpack.c.bf16 %v1273, %v1273
      %v1394 = vpack.c.bf16 %v1274, %v1274
      %v1395 = vpack.c.bf16 %v1275, %v1275
      %v1396 = vpack.c.bf16 %v1276, %v1276
      %v1397 = vpack.c.bf16 %v1277, %v1277
      %v1398 = vpack.c.bf16 %v1278, %v1278
      %v1399 = vpack.c.bf16 %v1279, %v1279
      %v1400 = vpack.c.bf16 %v1280, %v1280
      %v1401 = vpack.c.bf16 %v1281, %v1281
      %v1462 = vunpack.c.l.b16 %v1282
      %v1463 = vunpack.c.l.b16 %v1283
      %v1464 = vunpack.c.l.b16 %v1284
      %v1465 = vunpack.c.l.b16 %v1285
      %v1466 = vunpack.c.l.b16 %v1286
      %v1467 = vunpack.c.l.b16 %v1287
      %v1468 = vunpack.c.l.b16 %v1288
      %v1469 = vunpack.c.l.b16 %v1289
      %v1470 = vunpack.c.l.b16 %v1290
      %v1471 = vunpack.c.l.b16 %v1291
      %v1472 = vunpack.c.l.b16 %v1292
      %v1473 = vunpack.c.l.b16 %v1293
      %v1474 = vunpack.c.l.b16 %v1294
      %v1475 = vunpack.c.l.b16 %v1295
      %v1476 = vunpack.c.l.b16 %v1296
      %v1477 = vunpack.c.l.b16 %v1297
      %v1478 = vunpack.c.l.b16 %v1298
      %v1479 = vunpack.c.l.b16 %v1299
      %v1480 = vunpack.c.l.b16 %v1300
      %v1481 = vunpack.c.l.b16 %v1301
      %v1482 = vunpack.c.l.b16 %v1302
      %v1483 = vunpack.c.l.b16 %v1303
      %v1484 = vunpack.c.l.b16 %v1304
      %v1485 = vunpack.c.l.b16 %v1305
      %v1486 = vunpack.c.l.b16 %v1306
      %v1487 = vunpack.c.l.b16 %v1307
      %v1488 = vunpack.c.l.b16 %v1308
      %v1489 = vunpack.c.l.b16 %v1309
      %v1490 = vunpack.c.l.b16 %v1310
      %v1491 = vunpack.c.l.b16 %v1311
      %v1492 = vunpack.c.l.b16 %v1312
      %v1493 = vunpack.c.l.b16 %v1313
      %v1494 = vunpack.c.l.b16 %v1314
      %v1495 = vunpack.c.l.b16 %v1315
      %v1496 = vunpack.c.l.b16 %v1316
      %v1497 = vunpack.c.l.b16 %v1317
      %v1498 = vunpack.c.l.b16 %v1318
      %v1499 = vunpack.c.l.b16 %v1319
      %v1500 = vunpack.c.l.b16 %v1320
      %v1501 = vunpack.c.l.b16 %v1321
      %v1502 = vunpack.c.l.b16 %v1322
      %v1503 = vunpack.c.l.b16 %v1323
      %v1504 = vunpack.c.l.b16 %v1324
      %v1505 = vunpack.c.l.b16 %v1325
      %v1506 = vunpack.c.l.b16 %v1326
      %v1507 = vunpack.c.l.b16 %v1327
      %v1508 = vunpack.c.l.b16 %v1328
      %v1509 = vunpack.c.l.b16 %v1329
      %v1510 = vunpack.c.l.b16 %v1330
      %v1511 = vunpack.c.l.b16 %v1331
      %v1512 = vunpack.c.l.b16 %v1332
      %v1513 = vunpack.c.l.b16 %v1333
      %v1514 = vunpack.c.l.b16 %v1334
      %v1515 = vunpack.c.l.b16 %v1335
      %v1516 = vunpack.c.l.b16 %v1336
      %v1517 = vunpack.c.l.b16 %v1337
      %v1518 = vunpack.c.l.b16 %v1338
      %v1519 = vunpack.c.l.b16 %v1339
      %v1520 = vunpack.c.l.b16 %v1340
      %v1521 = vunpack.c.l.b16 %v1341
      %v1522 = vpack.c.b16 %v1463, %v1462
      %v1523 = vpack.c.b16 %v1465, %v1464
      %v1524 = vpack.c.b16 %v1467, %v1466
      %v1525 = vpack.c.b16 %v1469, %v1468
      %v1526 = vpack.c.b16 %v1471, %v1470
      %v1527 = vpack.c.b16 %v1473, %v1472
      %v1528 = vpack.c.b16 %v1475, %v1474
      %v1529 = vpack.c.b16 %v1477, %v1476
      %v1530 = vpack.c.b16 %v1479, %v1478
      %v1531 = vpack.c.b16 %v1481, %v1480
      %v1532 = vpack.c.b16 %v1483, %v1482
      %v1533 = vpack.c.b16 %v1485, %v1484
      %v1534 = vpack.c.b16 %v1487, %v1486
      %v1535 = vpack.c.b16 %v1489, %v1488
      %v1536 = vpack.c.b16 %v1491, %v1490
      %v1537 = vpack.c.b16 %v1493, %v1492
      %v1538 = vpack.c.b16 %v1495, %v1494
      %v1539 = vpack.c.b16 %v1497, %v1496
      %v1540 = vpack.c.b16 %v1499, %v1498
      %v1541 = vpack.c.b16 %v1501, %v1500
      %v1542 = vpack.c.b16 %v1503, %v1502
      %v1543 = vpack.c.b16 %v1505, %v1504
      %v1544 = vpack.c.b16 %v1507, %v1506
      %v1545 = vpack.c.b16 %v1509, %v1508
      %v1546 = vpack.c.b16 %v1511, %v1510
      %v1547 = vpack.c.b16 %v1513, %v1512
      %v1548 = vpack.c.b16 %v1515, %v1514
      %v1549 = vpack.c.b16 %v1517, %v1516
      %v1550 = vpack.c.b16 %v1519, %v1518
      %v1551 = vpack.c.b16 %v1521, %v1520
      %v1553 = vshrl.u32 %v1522, 16
      %v1555 = vshll.u32 %v1522, 16
      %v1557 = vrot.slane %v1555, 1
      %v1558 = vor.u32 %v1553, %v1557
      %v1560 = vshrl.u32 %v1523, 16
      %v1562 = vshll.u32 %v1523, 16
      %v1564 = vrot.slane %v1562, 1
      %v1565 = vor.u32 %v1560, %v1564
      %v1567 = vshrl.u32 %v1524, 16
      %v1569 = vshll.u32 %v1524, 16
      %v1571 = vrot.slane %v1569, 1
      %v1572 = vor.u32 %v1567, %v1571
      %v1574 = vshrl.u32 %v1525, 16
      %v1576 = vshll.u32 %v1525, 16
      %v1578 = vrot.slane %v1576, 1
      %v1579 = vor.u32 %v1574, %v1578
      %v1581 = vshrl.u32 %v1526, 16
      %v1583 = vshll.u32 %v1526, 16
      %v1585 = vrot.slane %v1583, 1
      %v1586 = vor.u32 %v1581, %v1585
      %v1588 = vshrl.u32 %v1527, 16
      %v1590 = vshll.u32 %v1527, 16
      %v1592 = vrot.slane %v1590, 1
      %v1593 = vor.u32 %v1588, %v1592
      %v1595 = vshrl.u32 %v1528, 16
      %v1597 = vshll.u32 %v1528, 16
      %v1599 = vrot.slane %v1597, 1
      %v1600 = vor.u32 %v1595, %v1599
      %v1602 = vshrl.u32 %v1529, 16
      %v1604 = vshll.u32 %v1529, 16
      %v1606 = vrot.slane %v1604, 1
      %v1607 = vor.u32 %v1602, %v1606
      %v1609 = vshrl.u32 %v1530, 16
      %v1611 = vshll.u32 %v1530, 16
      %v1613 = vrot.slane %v1611, 1
      %v1614 = vor.u32 %v1609, %v1613
      %v1616 = vshrl.u32 %v1531, 16
      %v1618 = vshll.u32 %v1531, 16
      %v1620 = vrot.slane %v1618, 1
      %v1621 = vor.u32 %v1616, %v1620
      %v1623 = vshrl.u32 %v1532, 16
      %v1625 = vshll.u32 %v1532, 16
      %v1627 = vrot.slane %v1625, 1
      %v1628 = vor.u32 %v1623, %v1627
      %v1630 = vshrl.u32 %v1533, 16
      %v1632 = vshll.u32 %v1533, 16
      %v1634 = vrot.slane %v1632, 1
      %v1635 = vor.u32 %v1630, %v1634
      %v1637 = vshrl.u32 %v1534, 16
      %v1639 = vshll.u32 %v1534, 16
      %v1641 = vrot.slane %v1639, 1
      %v1642 = vor.u32 %v1637, %v1641
      %v1644 = vshrl.u32 %v1535, 16
      %v1646 = vshll.u32 %v1535, 16
      %v1648 = vrot.slane %v1646, 1
      %v1649 = vor.u32 %v1644, %v1648
      %v1651 = vshrl.u32 %v1536, 16
      %v1653 = vshll.u32 %v1536, 16
      %v1655 = vrot.slane %v1653, 1
      %v1656 = vor.u32 %v1651, %v1655
      %v1658 = vshrl.u32 %v1537, 16
      %v1660 = vshll.u32 %v1537, 16
      %v1662 = vrot.slane %v1660, 1
      %v1663 = vor.u32 %v1658, %v1662
      %v1665 = vshrl.u32 %v1538, 16
      %v1667 = vshll.u32 %v1538, 16
      %v1669 = vrot.slane %v1667, 1
      %v1670 = vor.u32 %v1665, %v1669
      %v1672 = vshrl.u32 %v1539, 16
      %v1674 = vshll.u32 %v1539, 16
      %v1676 = vrot.slane %v1674, 1
      %v1677 = vor.u32 %v1672, %v1676
      %v1679 = vshrl.u32 %v1540, 16
      %v1681 = vshll.u32 %v1540, 16
      %v1683 = vrot.slane %v1681, 1
      %v1684 = vor.u32 %v1679, %v1683
      %v1686 = vshrl.u32 %v1541, 16
      %v1688 = vshll.u32 %v1541, 16
      %v1690 = vrot.slane %v1688, 1
      %v1691 = vor.u32 %v1686, %v1690
      %v1693 = vshrl.u32 %v1542, 16
      %v1695 = vshll.u32 %v1542, 16
      %v1697 = vrot.slane %v1695, 1
      %v1698 = vor.u32 %v1693, %v1697
      %v1700 = vshrl.u32 %v1543, 16
      %v1702 = vshll.u32 %v1543, 16
      %v1704 = vrot.slane %v1702, 1
      %v1705 = vor.u32 %v1700, %v1704
      %v1707 = vshrl.u32 %v1544, 16
      %v1709 = vshll.u32 %v1544, 16
      %v1711 = vrot.slane %v1709, 1
      %v1712 = vor.u32 %v1707, %v1711
      %v1714 = vshrl.u32 %v1545, 16
      %v1716 = vshll.u32 %v1545, 16
      %v1718 = vrot.slane %v1716, 1
      %v1719 = vor.u32 %v1714, %v1718
      %v1721 = vshrl.u32 %v1546, 16
      %v1723 = vshll.u32 %v1546, 16
      %v1725 = vrot.slane %v1723, 1
      %v1726 = vor.u32 %v1721, %v1725
      %v1728 = vshrl.u32 %v1547, 16
      %v1730 = vshll.u32 %v1547, 16
      %v1732 = vrot.slane %v1730, 1
      %v1733 = vor.u32 %v1728, %v1732
      %v1735 = vshrl.u32 %v1548, 16
      %v1737 = vshll.u32 %v1548, 16
      %v1739 = vrot.slane %v1737, 1
      %v1740 = vor.u32 %v1735, %v1739
      %v1742 = vshrl.u32 %v1549, 16
      %v1744 = vshll.u32 %v1549, 16
      %v1746 = vrot.slane %v1744, 1
      %v1747 = vor.u32 %v1742, %v1746
      %v1749 = vshrl.u32 %v1550, 16
      %v1751 = vshll.u32 %v1550, 16
      %v1753 = vrot.slane %v1751, 1
      %v1754 = vor.u32 %v1749, %v1753
      %v1756 = vshrl.u32 %v1551, 16
      %v1758 = vshll.u32 %v1551, 16
      %v1760 = vrot.slane %v1758, 1
      %v1761 = vor.u32 %v1756, %v1760
      %v1792 = vpack.c.b16 %v1462, %v1462
      %v1793 = vpack.c.b16 %v1464, %v1464
      %v1794 = vpack.c.b16 %v1466, %v1466
      %v1795 = vpack.c.b16 %v1468, %v1468
      %v1796 = vpack.c.b16 %v1470, %v1470
      %v1797 = vpack.c.b16 %v1472, %v1472
      %v1798 = vpack.c.b16 %v1474, %v1474
      %v1799 = vpack.c.b16 %v1476, %v1476
      %v1800 = vpack.c.b16 %v1478, %v1478
      %v1801 = vpack.c.b16 %v1480, %v1480
      %v1802 = vpack.c.b16 %v1482, %v1482
      %v1803 = vpack.c.b16 %v1484, %v1484
      %v1804 = vpack.c.b16 %v1486, %v1486
      %v1805 = vpack.c.b16 %v1488, %v1488
      %v1806 = vpack.c.b16 %v1490, %v1490
      %v1807 = vpack.c.b16 %v1492, %v1492
      %v1808 = vpack.c.b16 %v1494, %v1494
      %v1809 = vpack.c.b16 %v1496, %v1496
      %v1810 = vpack.c.b16 %v1498, %v1498
      %v1811 = vpack.c.b16 %v1500, %v1500
      %v1812 = vpack.c.b16 %v1502, %v1502
      %v1813 = vpack.c.b16 %v1504, %v1504
      %v1814 = vpack.c.b16 %v1506, %v1506
      %v1815 = vpack.c.b16 %v1508, %v1508
      %v1816 = vpack.c.b16 %v1510, %v1510
      %v1817 = vpack.c.b16 %v1512, %v1512
      %v1818 = vpack.c.b16 %v1514, %v1514
      %v1819 = vpack.c.b16 %v1516, %v1516
      %v1820 = vpack.c.b16 %v1518, %v1518
      %v1821 = vpack.c.b16 %v1520, %v1520
      %v1823 = vshll.u32 %v1792, 16
      %v1825 = vrot.slane %v1823, 1
      %v1827 = vshll.u32 %v1793, 16
      %v1829 = vrot.slane %v1827, 1
      %v1831 = vshll.u32 %v1794, 16
      %v1833 = vrot.slane %v1831, 1
      %v1835 = vshll.u32 %v1795, 16
      %v1837 = vrot.slane %v1835, 1
      %v1839 = vshll.u32 %v1796, 16
      %v1841 = vrot.slane %v1839, 1
      %v1843 = vshll.u32 %v1797, 16
      %v1845 = vrot.slane %v1843, 1
      %v1847 = vshll.u32 %v1798, 16
      %v1849 = vrot.slane %v1847, 1
      %v1851 = vshll.u32 %v1799, 16
      %v1853 = vrot.slane %v1851, 1
      %v1855 = vshll.u32 %v1800, 16
      %v1857 = vrot.slane %v1855, 1
      %v1859 = vshll.u32 %v1801, 16
      %v1861 = vrot.slane %v1859, 1
      %v1863 = vshll.u32 %v1802, 16
      %v1865 = vrot.slane %v1863, 1
      %v1867 = vshll.u32 %v1803, 16
      %v1869 = vrot.slane %v1867, 1
      %v1871 = vshll.u32 %v1804, 16
      %v1873 = vrot.slane %v1871, 1
      %v1875 = vshll.u32 %v1805, 16
      %v1877 = vrot.slane %v1875, 1
      %v1879 = vshll.u32 %v1806, 16
      %v1881 = vrot.slane %v1879, 1
      %v1883 = vshll.u32 %v1807, 16
      %v1885 = vrot.slane %v1883, 1
      %v1887 = vshll.u32 %v1808, 16
      %v1889 = vrot.slane %v1887, 1
      %v1891 = vshll.u32 %v1809, 16
      %v1893 = vrot.slane %v1891, 1
      %v1895 = vshll.u32 %v1810, 16
      %v1897 = vrot.slane %v1895, 1
      %v1899 = vshll.u32 %v1811, 16
      %v1901 = vrot.slane %v1899, 1
      %v1903 = vshll.u32 %v1812, 16
      %v1905 = vrot.slane %v1903, 1
      %v1907 = vshll.u32 %v1813, 16
      %v1909 = vrot.slane %v1907, 1
      %v1911 = vshll.u32 %v1814, 16
      %v1913 = vrot.slane %v1911, 1
      %v1915 = vshll.u32 %v1815, 16
      %v1917 = vrot.slane %v1915, 1
      %v1919 = vshll.u32 %v1816, 16
      %v1921 = vrot.slane %v1919, 1
      %v1923 = vshll.u32 %v1817, 16
      %v1925 = vrot.slane %v1923, 1
      %v1927 = vshll.u32 %v1818, 16
      %v1929 = vrot.slane %v1927, 1
      %v1931 = vshll.u32 %v1819, 16
      %v1933 = vrot.slane %v1931, 1
      %v1935 = vshll.u32 %v1820, 16
      %v1937 = vrot.slane %v1935, 1
      %v1939 = vshll.u32 %v1821, 16
      %v1941 = vrot.slane %v1939, 1
      %vm1972 = vcmask 1047552
      %vm1973 = vsmask.f32 7424
      %vm1974 = vmand %vm1972, %vm1973
      %v1975 = vsel %vm1974, %v1558, %v1825
      %v1976 = vsel %vm1974, %v1565, %v1829
      %v1977 = vsel %vm1974, %v1572, %v1833
      %v1978 = vsel %vm1974, %v1579, %v1837
      %v1979 = vsel %vm1974, %v1586, %v1841
      %v1980 = vsel %vm1974, %v1593, %v1845
      %v1981 = vsel %vm1974, %v1600, %v1849
      %v1982 = vsel %vm1974, %v1607, %v1853
      %v1983 = vsel %vm1974, %v1614, %v1857
      %v1984 = vsel %vm1974, %v1621, %v1861
      %v1985 = vsel %vm1974, %v1628, %v1865
      %v1986 = vsel %vm1974, %v1635, %v1869
      %v1987 = vsel %vm1974, %v1642, %v1873
      %v1988 = vsel %vm1974, %v1649, %v1877
      %v1989 = vsel %vm1974, %v1656, %v1881
      %v1990 = vsel %vm1974, %v1663, %v1885
      %v1991 = vsel %vm1974, %v1670, %v1889
      %v1992 = vsel %vm1974, %v1677, %v1893
      %v1993 = vsel %vm1974, %v1684, %v1897
      %v1994 = vsel %vm1974, %v1691, %v1901
      %v1995 = vsel %vm1974, %v1698, %v1905
      %v1996 = vsel %vm1974, %v1705, %v1909
      %v1997 = vsel %vm1974, %v1712, %v1913
      %v1998 = vsel %vm1974, %v1719, %v1917
      %v1999 = vsel %vm1974, %v1726, %v1921
      %v2000 = vsel %vm1974, %v1733, %v1925
      %v2001 = vsel %vm1974, %v1740, %v1929
      %v2002 = vsel %vm1974, %v1747, %v1933
      %v2003 = vsel %vm1974, %v1754, %v1937
      %v2004 = vsel %vm1974, %v1761, %v1941
      %v2065 = vunpack.c.l.b16 %v1342
      %v2066 = vunpack.c.l.b16 %v1343
      %v2067 = vunpack.c.l.b16 %v1344
      %v2068 = vunpack.c.l.b16 %v1345
      %v2069 = vunpack.c.l.b16 %v1346
      %v2070 = vunpack.c.l.b16 %v1347
      %v2071 = vunpack.c.l.b16 %v1348
      %v2072 = vunpack.c.l.b16 %v1349
      %v2073 = vunpack.c.l.b16 %v1350
      %v2074 = vunpack.c.l.b16 %v1351
      %v2075 = vunpack.c.l.b16 %v1352
      %v2076 = vunpack.c.l.b16 %v1353
      %v2077 = vunpack.c.l.b16 %v1354
      %v2078 = vunpack.c.l.b16 %v1355
      %v2079 = vunpack.c.l.b16 %v1356
      %v2080 = vunpack.c.l.b16 %v1357
      %v2081 = vunpack.c.l.b16 %v1358
      %v2082 = vunpack.c.l.b16 %v1359
      %v2083 = vunpack.c.l.b16 %v1360
      %v2084 = vunpack.c.l.b16 %v1361
      %v2085 = vunpack.c.l.b16 %v1362
      %v2086 = vunpack.c.l.b16 %v1363
      %v2087 = vunpack.c.l.b16 %v1364
      %v2088 = vunpack.c.l.b16 %v1365
      %v2089 = vunpack.c.l.b16 %v1366
      %v2090 = vunpack.c.l.b16 %v1367
      %v2091 = vunpack.c.l.b16 %v1368
      %v2092 = vunpack.c.l.b16 %v1369
      %v2093 = vunpack.c.l.b16 %v1370
      %v2094 = vunpack.c.l.b16 %v1371
      %v2095 = vunpack.c.l.b16 %v1372
      %v2096 = vunpack.c.l.b16 %v1373
      %v2097 = vunpack.c.l.b16 %v1374
      %v2098 = vunpack.c.l.b16 %v1375
      %v2099 = vunpack.c.l.b16 %v1376
      %v2100 = vunpack.c.l.b16 %v1377
      %v2101 = vunpack.c.l.b16 %v1378
      %v2102 = vunpack.c.l.b16 %v1379
      %v2103 = vunpack.c.l.b16 %v1380
      %v2104 = vunpack.c.l.b16 %v1381
      %v2105 = vunpack.c.l.b16 %v1382
      %v2106 = vunpack.c.l.b16 %v1383
      %v2107 = vunpack.c.l.b16 %v1384
      %v2108 = vunpack.c.l.b16 %v1385
      %v2109 = vunpack.c.l.b16 %v1386
      %v2110 = vunpack.c.l.b16 %v1387
      %v2111 = vunpack.c.l.b16 %v1388
      %v2112 = vunpack.c.l.b16 %v1389
      %v2113 = vunpack.c.l.b16 %v1390
      %v2114 = vunpack.c.l.b16 %v1391
      %v2115 = vunpack.c.l.b16 %v1392
      %v2116 = vunpack.c.l.b16 %v1393
      %v2117 = vunpack.c.l.b16 %v1394
      %v2118 = vunpack.c.l.b16 %v1395
      %v2119 = vunpack.c.l.b16 %v1396
      %v2120 = vunpack.c.l.b16 %v1397
      %v2121 = vunpack.c.l.b16 %v1398
      %v2122 = vunpack.c.l.b16 %v1399
      %v2123 = vunpack.c.l.b16 %v1400
      %v2124 = vunpack.c.l.b16 %v1401
      %v2125 = vpack.c.b16 %v2066, %v2065
      %v2126 = vpack.c.b16 %v2068, %v2067
      %v2127 = vpack.c.b16 %v2070, %v2069
      %v2128 = vpack.c.b16 %v2072, %v2071
      %v2129 = vpack.c.b16 %v2074, %v2073
      %v2130 = vpack.c.b16 %v2076, %v2075
      %v2131 = vpack.c.b16 %v2078, %v2077
      %v2132 = vpack.c.b16 %v2080, %v2079
      %v2133 = vpack.c.b16 %v2082, %v2081
      %v2134 = vpack.c.b16 %v2084, %v2083
      %v2135 = vpack.c.b16 %v2086, %v2085
      %v2136 = vpack.c.b16 %v2088, %v2087
      %v2137 = vpack.c.b16 %v2090, %v2089
      %v2138 = vpack.c.b16 %v2092, %v2091
      %v2139 = vpack.c.b16 %v2094, %v2093
      %v2140 = vpack.c.b16 %v2096, %v2095
      %v2141 = vpack.c.b16 %v2098, %v2097
      %v2142 = vpack.c.b16 %v2100, %v2099
      %v2143 = vpack.c.b16 %v2102, %v2101
      %v2144 = vpack.c.b16 %v2104, %v2103
      %v2145 = vpack.c.b16 %v2106, %v2105
      %v2146 = vpack.c.b16 %v2108, %v2107
      %v2147 = vpack.c.b16 %v2110, %v2109
      %v2148 = vpack.c.b16 %v2112, %v2111
      %v2149 = vpack.c.b16 %v2114, %v2113
      %v2150 = vpack.c.b16 %v2116, %v2115
      %v2151 = vpack.c.b16 %v2118, %v2117
      %v2152 = vpack.c.b16 %v2120, %v2119
      %v2153 = vpack.c.b16 %v2122, %v2121
      %v2154 = vpack.c.b16 %v2124, %v2123
      %v2156 = vshrl.u32 %v2125, 16
      %v2158 = vshll.u32 %v2125, 16
      %v2160 = vrot.slane %v2158, 1
      %v2161 = vor.u32 %v2156, %v2160
      %v2163 = vshrl.u32 %v2126, 16
      %v2165 = vshll.u32 %v2126, 16
      %v2167 = vrot.slane %v2165, 1
      %v2168 = vor.u32 %v2163, %v2167
      %v2170 = vshrl.u32 %v2127, 16
      %v2172 = vshll.u32 %v2127, 16
      %v2174 = vrot.slane %v2172, 1
      %v2175 = vor.u32 %v2170, %v2174
      %v2177 = vshrl.u32 %v2128, 16
      %v2179 = vshll.u32 %v2128, 16
      %v2181 = vrot.slane %v2179, 1
      %v2182 = vor.u32 %v2177, %v2181
      %v2184 = vshrl.u32 %v2129, 16
      %v2186 = vshll.u32 %v2129, 16
      %v2188 = vrot.slane %v2186, 1
      %v2189 = vor.u32 %v2184, %v2188
      %v2191 = vshrl.u32 %v2130, 16
      %v2193 = vshll.u32 %v2130, 16
      %v2195 = vrot.slane %v2193, 1
      %v2196 = vor.u32 %v2191, %v2195
      %v2198 = vshrl.u32 %v2131, 16
      %v2200 = vshll.u32 %v2131, 16
      %v2202 = vrot.slane %v2200, 1
      %v2203 = vor.u32 %v2198, %v2202
      %v2205 = vshrl.u32 %v2132, 16
      %v2207 = vshll.u32 %v2132, 16
      %v2209 = vrot.slane %v2207, 1
      %v2210 = vor.u32 %v2205, %v2209
      %v2212 = vshrl.u32 %v2133, 16
      %v2214 = vshll.u32 %v2133, 16
      %v2216 = vrot.slane %v2214, 1
      %v2217 = vor.u32 %v2212, %v2216
      %v2219 = vshrl.u32 %v2134, 16
      %v2221 = vshll.u32 %v2134, 16
      %v2223 = vrot.slane %v2221, 1
      %v2224 = vor.u32 %v2219, %v2223
      %v2226 = vshrl.u32 %v2135, 16
      %v2228 = vshll.u32 %v2135, 16
      %v2230 = vrot.slane %v2228, 1
      %v2231 = vor.u32 %v2226, %v2230
      %v2233 = vshrl.u32 %v2136, 16
      %v2235 = vshll.u32 %v2136, 16
      %v2237 = vrot.slane %v2235, 1
      %v2238 = vor.u32 %v2233, %v2237
      %v2240 = vshrl.u32 %v2137, 16
      %v2242 = vshll.u32 %v2137, 16
      %v2244 = vrot.slane %v2242, 1
      %v2245 = vor.u32 %v2240, %v2244
      %v2247 = vshrl.u32 %v2138, 16
      %v2249 = vshll.u32 %v2138, 16
      %v2251 = vrot.slane %v2249, 1
      %v2252 = vor.u32 %v2247, %v2251
      %v2254 = vshrl.u32 %v2139, 16
      %v2256 = vshll.u32 %v2139, 16
      %v2258 = vrot.slane %v2256, 1
      %v2259 = vor.u32 %v2254, %v2258
      %v2261 = vshrl.u32 %v2140, 16
      %v2263 = vshll.u32 %v2140, 16
      %v2265 = vrot.slane %v2263, 1
      %v2266 = vor.u32 %v2261, %v2265
      %v2268 = vshrl.u32 %v2141, 16
      %v2270 = vshll.u32 %v2141, 16
      %v2272 = vrot.slane %v2270, 1
      %v2273 = vor.u32 %v2268, %v2272
      %v2275 = vshrl.u32 %v2142, 16
      %v2277 = vshll.u32 %v2142, 16
      %v2279 = vrot.slane %v2277, 1
      %v2280 = vor.u32 %v2275, %v2279
      %v2282 = vshrl.u32 %v2143, 16
      %v2284 = vshll.u32 %v2143, 16
      %v2286 = vrot.slane %v2284, 1
      %v2287 = vor.u32 %v2282, %v2286
      %v2289 = vshrl.u32 %v2144, 16
      %v2291 = vshll.u32 %v2144, 16
      %v2293 = vrot.slane %v2291, 1
      %v2294 = vor.u32 %v2289, %v2293
      %v2296 = vshrl.u32 %v2145, 16
      %v2298 = vshll.u32 %v2145, 16
      %v2300 = vrot.slane %v2298, 1
      %v2301 = vor.u32 %v2296, %v2300
      %v2303 = vshrl.u32 %v2146, 16
      %v2305 = vshll.u32 %v2146, 16
      %v2307 = vrot.slane %v2305, 1
      %v2308 = vor.u32 %v2303, %v2307
      %v2310 = vshrl.u32 %v2147, 16
      %v2312 = vshll.u32 %v2147, 16
      %v2314 = vrot.slane %v2312, 1
      %v2315 = vor.u32 %v2310, %v2314
      %v2317 = vshrl.u32 %v2148, 16
      %v2319 = vshll.u32 %v2148, 16
      %v2321 = vrot.slane %v2319, 1
      %v2322 = vor.u32 %v2317, %v2321
      %v2324 = vshrl.u32 %v2149, 16
      %v2326 = vshll.u32 %v2149, 16
      %v2328 = vrot.slane %v2326, 1
      %v2329 = vor.u32 %v2324, %v2328
      %v2331 = vshrl.u32 %v2150, 16
      %v2333 = vshll.u32 %v2150, 16
      %v2335 = vrot.slane %v2333, 1
      %v2336 = vor.u32 %v2331, %v2335
      %v2338 = vshrl.u32 %v2151, 16
      %v2340 = vshll.u32 %v2151, 16
      %v2342 = vrot.slane %v2340, 1
      %v2343 = vor.u32 %v2338, %v2342
      %v2345 = vshrl.u32 %v2152, 16
      %v2347 = vshll.u32 %v2152, 16
      %v2349 = vrot.slane %v2347, 1
      %v2350 = vor.u32 %v2345, %v2349
      %v2352 = vshrl.u32 %v2153, 16
      %v2354 = vshll.u32 %v2153, 16
      %v2356 = vrot.slane %v2354, 1
      %v2357 = vor.u32 %v2352, %v2356
      %v2359 = vshrl.u32 %v2154, 16
      %v2361 = vshll.u32 %v2154, 16
      %v2363 = vrot.slane %v2361, 1
      %v2364 = vor.u32 %v2359, %v2363
      %v2395 = vpack.c.b16 %v2065, %v2065
      %v2396 = vpack.c.b16 %v2067, %v2067
      %v2397 = vpack.c.b16 %v2069, %v2069
      %v2398 = vpack.c.b16 %v2071, %v2071
      %v2399 = vpack.c.b16 %v2073, %v2073
      %v2400 = vpack.c.b16 %v2075, %v2075
      %v2401 = vpack.c.b16 %v2077, %v2077
      %v2402 = vpack.c.b16 %v2079, %v2079
      %v2403 = vpack.c.b16 %v2081, %v2081
      %v2404 = vpack.c.b16 %v2083, %v2083
      %v2405 = vpack.c.b16 %v2085, %v2085
      %v2406 = vpack.c.b16 %v2087, %v2087
      %v2407 = vpack.c.b16 %v2089, %v2089
      %v2408 = vpack.c.b16 %v2091, %v2091
      %v2409 = vpack.c.b16 %v2093, %v2093
      %v2410 = vpack.c.b16 %v2095, %v2095
      %v2411 = vpack.c.b16 %v2097, %v2097
      %v2412 = vpack.c.b16 %v2099, %v2099
      %v2413 = vpack.c.b16 %v2101, %v2101
      %v2414 = vpack.c.b16 %v2103, %v2103
      %v2415 = vpack.c.b16 %v2105, %v2105
      %v2416 = vpack.c.b16 %v2107, %v2107
      %v2417 = vpack.c.b16 %v2109, %v2109
      %v2418 = vpack.c.b16 %v2111, %v2111
      %v2419 = vpack.c.b16 %v2113, %v2113
      %v2420 = vpack.c.b16 %v2115, %v2115
      %v2421 = vpack.c.b16 %v2117, %v2117
      %v2422 = vpack.c.b16 %v2119, %v2119
      %v2423 = vpack.c.b16 %v2121, %v2121
      %v2424 = vpack.c.b16 %v2123, %v2123
      %v2426 = vshll.u32 %v2395, 16
      %v2428 = vrot.slane %v2426, 1
      %v2430 = vshll.u32 %v2396, 16
      %v2432 = vrot.slane %v2430, 1
      %v2434 = vshll.u32 %v2397, 16
      %v2436 = vrot.slane %v2434, 1
      %v2438 = vshll.u32 %v2398, 16
      %v2440 = vrot.slane %v2438, 1
      %v2442 = vshll.u32 %v2399, 16
      %v2444 = vrot.slane %v2442, 1
      %v2446 = vshll.u32 %v2400, 16
      %v2448 = vrot.slane %v2446, 1
      %v2450 = vshll.u32 %v2401, 16
      %v2452 = vrot.slane %v2450, 1
      %v2454 = vshll.u32 %v2402, 16
      %v2456 = vrot.slane %v2454, 1
      %v2458 = vshll.u32 %v2403, 16
      %v2460 = vrot.slane %v2458, 1
      %v2462 = vshll.u32 %v2404, 16
      %v2464 = vrot.slane %v2462, 1
      %v2466 = vshll.u32 %v2405, 16
      %v2468 = vrot.slane %v2466, 1
      %v2470 = vshll.u32 %v2406, 16
      %v2472 = vrot.slane %v2470, 1
      %v2474 = vshll.u32 %v2407, 16
      %v2476 = vrot.slane %v2474, 1
      %v2478 = vshll.u32 %v2408, 16
      %v2480 = vrot.slane %v2478, 1
      %v2482 = vshll.u32 %v2409, 16
      %v2484 = vrot.slane %v2482, 1
      %v2486 = vshll.u32 %v2410, 16
      %v2488 = vrot.slane %v2486, 1
      %v2490 = vshll.u32 %v2411, 16
      %v2492 = vrot.slane %v2490, 1
      %v2494 = vshll.u32 %v2412, 16
      %v2496 = vrot.slane %v2494, 1
      %v2498 = vshll.u32 %v2413, 16
      %v2500 = vrot.slane %v2498, 1
      %v2502 = vshll.u32 %v2414, 16
      %v2504 = vrot.slane %v2502, 1
      %v2506 = vshll.u32 %v2415, 16
      %v2508 = vrot.slane %v2506, 1
      %v2510 = vshll.u32 %v2416, 16
      %v2512 = vrot.slane %v2510, 1
      %v2514 = vshll.u32 %v2417, 16
      %v2516 = vrot.slane %v2514, 1
      %v2518 = vshll.u32 %v2418, 16
      %v2520 = vrot.slane %v2518, 1
      %v2522 = vshll.u32 %v2419, 16
      %v2524 = vrot.slane %v2522, 1
      %v2526 = vshll.u32 %v2420, 16
      %v2528 = vrot.slane %v2526, 1
      %v2530 = vshll.u32 %v2421, 16
      %v2532 = vrot.slane %v2530, 1
      %v2534 = vshll.u32 %v2422, 16
      %v2536 = vrot.slane %v2534, 1
      %v2538 = vshll.u32 %v2423, 16
      %v2540 = vrot.slane %v2538, 1
      %v2542 = vshll.u32 %v2424, 16
      %v2544 = vrot.slane %v2542, 1
      %v2575 = vsel %vm1974, %v2161, %v2428
      %v2576 = vsel %vm1974, %v2168, %v2432
      %v2577 = vsel %vm1974, %v2175, %v2436
      %v2578 = vsel %vm1974, %v2182, %v2440
      %v2579 = vsel %vm1974, %v2189, %v2444
      %v2580 = vsel %vm1974, %v2196, %v2448
      %v2581 = vsel %vm1974, %v2203, %v2452
      %v2582 = vsel %vm1974, %v2210, %v2456
      %v2583 = vsel %vm1974, %v2217, %v2460
      %v2584 = vsel %vm1974, %v2224, %v2464
      %v2585 = vsel %vm1974, %v2231, %v2468
      %v2586 = vsel %vm1974, %v2238, %v2472
      %v2587 = vsel %vm1974, %v2245, %v2476
      %v2588 = vsel %vm1974, %v2252, %v2480
      %v2589 = vsel %vm1974, %v2259, %v2484
      %v2590 = vsel %vm1974, %v2266, %v2488
      %v2591 = vsel %vm1974, %v2273, %v2492
      %v2592 = vsel %vm1974, %v2280, %v2496
      %v2593 = vsel %vm1974, %v2287, %v2500
      %v2594 = vsel %vm1974, %v2294, %v2504
      %v2595 = vsel %vm1974, %v2301, %v2508
      %v2596 = vsel %vm1974, %v2308, %v2512
      %v2597 = vsel %vm1974, %v2315, %v2516
      %v2598 = vsel %vm1974, %v2322, %v2520
      %v2599 = vsel %vm1974, %v2329, %v2524
      %v2600 = vsel %vm1974, %v2336, %v2528
      %v2601 = vsel %vm1974, %v2343, %v2532
      %v2602 = vsel %vm1974, %v2350, %v2536
      %v2603 = vsel %vm1974, %v2357, %v2540
      %v2604 = vsel %vm1974, %v2364, %v2544
      %v2605 = vld [vmem:[%s4] sm:$0x1]
      %2606 = vrot.lane.b32.xlu0 %v2125, 32
      %v2607 = vpop.permute.xlu0 %2606
      %2608 = vrot.lane.b32.xlu0 %v2126, 32
      %v2609 = vpop.permute.xlu0 %2608
      %2610 = vrot.lane.b32.xlu0 %v2127, 32
      %v2611 = vpop.permute.xlu0 %2610
      %2612 = vrot.lane.b32.xlu0 %v2128, 32
      %v2613 = vpop.permute.xlu0 %2612
      %2614 = vrot.lane.b32.xlu0 %v2129, 32
      %v2615 = vpop.permute.xlu0 %2614
      %2616 = vrot.lane.b32.xlu0 %v2130, 32
      %v2617 = vpop.permute.xlu0 %2616
      %2618 = vrot.lane.b32.xlu0 %v2131, 32
      %v2619 = vpop.permute.xlu0 %2618
      %2620 = vrot.lane.b32.xlu0 %v2132, 32
      %v2621 = vpop.permute.xlu0 %2620
      %2622 = vrot.lane.b32.xlu0 %v2133, 32
      %v2623 = vpop.permute.xlu0 %2622
      %2624 = vrot.lane.b32.xlu0 %v2134, 32
      %v2625 = vpop.permute.xlu0 %2624
      %2626 = vrot.lane.b32.xlu0 %v2135, 32
      %v2627 = vpop.permute.xlu0 %2626
      %2628 = vrot.lane.b32.xlu0 %v2136, 32
      %v2629 = vpop.permute.xlu0 %2628
      %2630 = vrot.lane.b32.xlu0 %v2137, 32
      %v2631 = vpop.permute.xlu0 %2630
      %2632 = vrot.lane.b32.xlu0 %v2138, 32
      %v2633 = vpop.permute.xlu0 %2632
      %2634 = vrot.lane.b32.xlu0 %v2139, 32
      %v2635 = vpop.permute.xlu0 %2634
      %2636 = vrot.lane.b32.xlu0 %v2140, 32
      %v2637 = vpop.permute.xlu0 %2636
      %2638 = vrot.lane.b32.xlu0 %v2141, 32
      %v2639 = vpop.permute.xlu0 %2638
      %2640 = vrot.lane.b32.xlu0 %v2142, 32
      %v2641 = vpop.permute.xlu0 %2640
      %2642 = vrot.lane.b32.xlu0 %v2143, 32
      %v2643 = vpop.permute.xlu0 %2642
      %2644 = vrot.lane.b32.xlu0 %v2144, 32
      %v2645 = vpop.permute.xlu0 %2644
      %2646 = vrot.lane.b32.xlu0 %v2145, 32
      %v2647 = vpop.permute.xlu0 %2646
      %2648 = vrot.lane.b32.xlu0 %v2146, 32
      %v2649 = vpop.permute.xlu0 %2648
      %2650 = vrot.lane.b32.xlu0 %v2147, 32
      %v2651 = vpop.permute.xlu0 %2650
      %2652 = vrot.lane.b32.xlu0 %v2148, 32
      %v2653 = vpop.permute.xlu0 %2652
      %2654 = vrot.lane.b32.xlu0 %v2149, 32
      %v2655 = vpop.permute.xlu0 %2654
      %2656 = vrot.lane.b32.xlu0 %v2150, 32
      %v2657 = vpop.permute.xlu0 %2656
      %2658 = vrot.lane.b32.xlu0 %v2151, 32
      %v2659 = vpop.permute.xlu0 %2658
      %2660 = vrot.lane.b32.xlu0 %v2152, 32
      %v2661 = vpop.permute.xlu0 %2660
      %2662 = vrot.lane.b32.xlu0 %v2153, 32
      %v2663 = vpop.permute.xlu0 %2662
      %2664 = vrot.lane.b32.xlu0 %v2154, 32
      %v2665 = vpop.permute.xlu0 %2664
      %2696 = vrot.lane.b32.xlu0 %v1975, 64
      %v2697 = vpop.permute.xlu0 %2696
      %2698 = vrot.lane.b32.xlu0 %v1976, 64
      %v2699 = vpop.permute.xlu0 %2698
      %2700 = vrot.lane.b32.xlu0 %v1977, 64
      %v2701 = vpop.permute.xlu0 %2700
      %2702 = vrot.lane.b32.xlu0 %v1978, 64
      %v2703 = vpop.permute.xlu0 %2702
      %2704 = vrot.lane.b32.xlu0 %v1979, 64
      %v2705 = vpop.permute.xlu0 %2704
      %2706 = vrot.lane.b32.xlu0 %v1980, 64
      %v2707 = vpop.permute.xlu0 %2706
      %2708 = vrot.lane.b32.xlu0 %v1981, 64
      %v2709 = vpop.permute.xlu0 %2708
      %2710 = vrot.lane.b32.xlu0 %v1982, 64
      %v2711 = vpop.permute.xlu0 %2710
      %2712 = vrot.lane.b32.xlu0 %v1983, 64
      %v2713 = vpop.permute.xlu0 %2712
      %2714 = vrot.lane.b32.xlu0 %v1984, 64
      %v2715 = vpop.permute.xlu0 %2714
      %2716 = vrot.lane.b32.xlu0 %v1985, 64
      %v2717 = vpop.permute.xlu0 %2716
      %2718 = vrot.lane.b32.xlu0 %v1986, 64
      %v2719 = vpop.permute.xlu0 %2718
      %2720 = vrot.lane.b32.xlu0 %v1987, 64
      %v2721 = vpop.permute.xlu0 %2720
      %2722 = vrot.lane.b32.xlu0 %v1988, 64
      %v2723 = vpop.permute.xlu0 %2722
      %2724 = vrot.lane.b32.xlu0 %v1989, 64
      %v2725 = vpop.permute.xlu0 %2724
      %2726 = vrot.lane.b32.xlu0 %v1990, 64
      %v2727 = vpop.permute.xlu0 %2726
      %2728 = vrot.lane.b32.xlu0 %v1991, 64
      %v2729 = vpop.permute.xlu0 %2728
      %2730 = vrot.lane.b32.xlu0 %v1992, 64
      %v2731 = vpop.permute.xlu0 %2730
      %2732 = vrot.lane.b32.xlu0 %v1993, 64
      %v2733 = vpop.permute.xlu0 %2732
      %2734 = vrot.lane.b32.xlu0 %v1994, 64
      %v2735 = vpop.permute.xlu0 %2734
      %2736 = vrot.lane.b32.xlu0 %v1995, 64
      %v2737 = vpop.permute.xlu0 %2736
      %2738 = vrot.lane.b32.xlu0 %v1996, 64
      %v2739 = vpop.permute.xlu0 %2738
      %2740 = vrot.lane.b32.xlu0 %v1997, 64
      %v2741 = vpop.permute.xlu0 %2740
      %2742 = vrot.lane.b32.xlu0 %v1998, 64
      %v2743 = vpop.permute.xlu0 %2742
      %2744 = vrot.lane.b32.xlu0 %v1999, 64
      %v2745 = vpop.permute.xlu0 %2744
      %2746 = vrot.lane.b32.xlu0 %v2000, 64
      %v2747 = vpop.permute.xlu0 %2746
      %2748 = vrot.lane.b32.xlu0 %v2001, 64
      %v2749 = vpop.permute.xlu0 %2748
      %2750 = vrot.lane.b32.xlu0 %v2002, 64
      %v2751 = vpop.permute.xlu0 %2750
      %2752 = vrot.lane.b32.xlu0 %v2003, 64
      %v2753 = vpop.permute.xlu0 %2752
      %2754 = vrot.lane.b32.xlu0 %v2004, 64
      %v2755 = vpop.permute.xlu0 %2754
      %vm2756 = vcmask 261120
      %v2758 = vsel %vm2756, %v1522, %v2607
      %v2760 = vsel %vm2756, %v1523, %v2609
      %v2762 = vsel %vm2756, %v1524, %v2611
      %v2764 = vsel %vm2756, %v1525, %v2613
      %v2766 = vsel %vm2756, %v1526, %v2615
      %v2768 = vsel %vm2756, %v1527, %v2617
      %v2770 = vsel %vm2756, %v1528, %v2619
      %v2772 = vsel %vm2756, %v1529, %v2621
      %v2774 = vsel %vm2756, %v1530, %v2623
      %v2776 = vsel %vm2756, %v1531, %v2625
      %v2778 = vsel %vm2756, %v1532, %v2627
      %v2780 = vsel %vm2756, %v1533, %v2629
      %v2782 = vsel %vm2756, %v1534, %v2631
      %v2784 = vsel %vm2756, %v1535, %v2633
      %v2786 = vsel %vm2756, %v1536, %v2635
      %v2788 = vsel %vm2756, %v1537, %v2637
      %v2790 = vsel %vm2756, %v1538, %v2639
      %v2792 = vsel %vm2756, %v1539, %v2641
      %v2794 = vsel %vm2756, %v1540, %v2643
      %v2796 = vsel %vm2756, %v1541, %v2645
      %v2798 = vsel %vm2756, %v1542, %v2647
      %v2800 = vsel %vm2756, %v1543, %v2649
      %v2802 = vsel %vm2756, %v1544, %v2651
      %v2804 = vsel %vm2756, %v1545, %v2653
      %v2806 = vsel %vm2756, %v1546, %v2655
      %v2808 = vsel %vm2756, %v1547, %v2657
      %v2810 = vsel %vm2756, %v1548, %v2659
      %v2812 = vsel %vm2756, %v1549, %v2661
      %v2814 = vsel %vm2756, %v1550, %v2663
      %v2816 = vsel %vm2756, %v1551, %v2665
      %vm2817 = vcmask 523264
      %v2819 = vsel %vm2817, %v2758, %v2697
      %v2821 = vsel %vm2817, %v2760, %v2699
      %v2823 = vsel %vm2817, %v2762, %v2701
      %v2825 = vsel %vm2817, %v2764, %v2703
      %v2827 = vsel %vm2817, %v2766, %v2705
      %v2829 = vsel %vm2817, %v2768, %v2707
      %v2831 = vsel %vm2817, %v2770, %v2709
      %v2833 = vsel %vm2817, %v2772, %v2711
      %v2835 = vsel %vm2817, %v2774, %v2713
      %v2837 = vsel %vm2817, %v2776, %v2715
      %v2839 = vsel %vm2817, %v2778, %v2717
      %v2841 = vsel %vm2817, %v2780, %v2719
      %v2843 = vsel %vm2817, %v2782, %v2721
      %v2845 = vsel %vm2817, %v2784, %v2723
      %v2847 = vsel %vm2817, %v2786, %v2725
      %v2849 = vsel %vm2817, %v2788, %v2727
      %v2851 = vsel %vm2817, %v2790, %v2729
      %v2853 = vsel %vm2817, %v2792, %v2731
      %v2855 = vsel %vm2817, %v2794, %v2733
      %v2857 = vsel %vm2817, %v2796, %v2735
      %v2859 = vsel %vm2817, %v2798, %v2737
      %v2861 = vsel %vm2817, %v2800, %v2739
      %v2863 = vsel %vm2817, %v2802, %v2741
      %v2865 = vsel %vm2817, %v2804, %v2743
      %v2867 = vsel %vm2817, %v2806, %v2745
      %v2869 = vsel %vm2817, %v2808, %v2747
      %v2871 = vsel %vm2817, %v2810, %v2749
      %v2873 = vsel %vm2817, %v2812, %v2751
      %v2875 = vsel %vm2817, %v2814, %v2753
      %v2877 = vsel %vm2817, %v2816, %v2755
      %v2878 = vld [vmem:[%s3] sm:$0xf]
      %v2879 = vld [vmem:[%s3 + $0x4] sm:$0xf]
      %v2880 = vld [vmem:[%s3 + $0x8] sm:$0xf]
      %v2881 = vld [vmem:[%s3 + $0xc] sm:$0xf]
      %v2882 = vld [vmem:[%s3 + $0x10] sm:$0xf]
      %v2883 = vld [vmem:[%s3 + $0x14] sm:$0xf]
      %v2884 = vld [vmem:[%s3 + $0x18] sm:$0xf]
      %v2885 = vld [vmem:[%s3 + $0x1c] sm:$0xf]
      %v2886 = vld [vmem:[%s3 + $0x20] sm:$0xf]
      %v2887 = vld [vmem:[%s3 + $0x24] sm:$0xf]
      %v2888 = vld [vmem:[%s3 + $0x28] sm:$0xf]
      %v2889 = vld [vmem:[%s3 + $0x2c] sm:$0xf]
      %s2890 = scalar_lea.vmem %s3, 48
      %v2891 = vld [vmem:[%s2890] sm:$0xf]
      %v2892 = vld [vmem:[%s2890 + $0x4] sm:$0xf]
      %v2893 = vld [vmem:[%s2890 + $0x8] sm:$0xf]
      %v2894 = vld [vmem:[%s2890 + $0xc] sm:$0xf]
      %v2895 = vld [vmem:[%s2890 + $0x10] sm:$0xf]
      %v2896 = vld [vmem:[%s2890 + $0x14] sm:$0xf]
      %v2897 = vld [vmem:[%s2890 + $0x18] sm:$0xf]
      %v2898 = vld [vmem:[%s2890 + $0x1c] sm:$0xf]
      %v2899 = vld [vmem:[%s2890 + $0x20] sm:$0xf]
      %v2900 = vld [vmem:[%s2890 + $0x24] sm:$0xf]
      %v2901 = vld [vmem:[%s2890 + $0x28] sm:$0xf]
      %v2902 = vld [vmem:[%s2890 + $0x2c] sm:$0xf]
      %v2915 = vunpack.c.l.b16 %v2891
      %v2916 = vunpack.c.l.b16 %v2892
      %v2917 = vunpack.c.l.b16 %v2893
      %v2918 = vunpack.c.l.b16 %v2894
      %v2919 = vunpack.c.l.b16 %v2895
      %v2920 = vunpack.c.l.b16 %v2896
      %v2921 = vunpack.c.l.b16 %v2897
      %v2922 = vunpack.c.l.b16 %v2898
      %v2923 = vunpack.c.l.b16 %v2899
      %v2924 = vunpack.c.l.b16 %v2900
      %v2925 = vunpack.c.l.b16 %v2901
      %v2926 = vunpack.c.l.b16 %v2902
      %v2927 = vpack.c.b16 %v2916, %v2915
      %v2928 = vpack.c.b16 %v2918, %v2917
      %v2929 = vpack.c.b16 %v2920, %v2919
      %v2930 = vpack.c.b16 %v2922, %v2921
      %v2931 = vpack.c.b16 %v2924, %v2923
      %v2932 = vpack.c.b16 %v2926, %v2925
      %vm2939 = vcmask 785408
      %v2940 = vsel %vm2939, %v2821, 0
      %v2942 = vsel %vm2939, %v2823, 0
      %v2944 = vsel %vm2939, %v2825, 0
      %v2946 = vsel %vm2939, %v2827, 0
      %v2948 = vsel %vm2939, %v2829, 0
      %v2950 = vsel %vm2939, %v2831, 0
      %v2952 = vsel %vm2939, %v2833, 0
      %v2954 = vsel %vm2939, %v2835, 0
      %v2956 = vsel %vm2939, %v2837, 0
      %v2958 = vsel %vm2939, %v2839, 0
      %v2960 = vsel %vm2939, %v2841, 0
      %v2962 = vsel %vm2939, %v2843, 0
      %v2964 = vsel %vm2939, %v2845, 0
      %v2966 = vsel %vm2939, %v2847, 0
      %v2968 = vsel %vm2939, %v2849, 0
      %v2970 = vsel %vm2939, %v2851, 0
      %v2972 = vsel %vm2939, %v2853, 0
      %v2974 = vsel %vm2939, %v2855, 0
      %v2976 = vsel %vm2939, %v2857, 0
      %v2978 = vsel %vm2939, %v2859, 0
      %v2980 = vsel %vm2939, %v2861, 0
      %v2982 = vsel %vm2939, %v2863, 0
      %v2984 = vsel %vm2939, %v2865, 0
      %v2986 = vsel %vm2939, %v2867, 0
      %v2988 = vsel %vm2939, %v2869, 0
      %v2990 = vsel %vm2939, %v2871, 0
      %v2992 = vsel %vm2939, %v2873, 0
      %v2994 = vsel %vm2939, %v2875, 0
      %2996 = vmatpush.bf16.msra.mxu0 0
      %2997 = vmatpush.bf16.msra.mxu0 0
      %2998 = vmatpush.bf16.msra.mxu0 %v2932
      %2999 = vmatpush.bf16.msra.mxu0 %v2931
      %3000 = vmatpush.bf16.msra.mxu0 %v2930
      %3001 = vmatpush.bf16.msra.mxu0 %v2929
      %3002 = vmatpush.bf16.msra.mxu0 %v2928
      %3003 = vmatpush.bf16.msra.mxu0 %v2927
      %3004 = vmatmul.bf16.gmra.mxu0 %v2940
      %v3005 = vpop.f32.mrf.mxu0
      %v3006 = vadd.f32 0.0, %v3005
      %v3007 = vpop.f32.mrf.mxu0
      %v3008 = vadd.f32 0.0, %v3007
      %3009 = vmatmul.bf16.gmra.mxu0 %v2942
      %v3010 = vpop.f32.mrf.mxu0
      %v3011 = vadd.f32 0.0, %v3010
      %v3012 = vpop.f32.mrf.mxu0
      %v3013 = vadd.f32 0.0, %v3012
      %3014 = vmatmul.bf16.gmra.mxu0 %v2944
      %v3015 = vpop.f32.mrf.mxu0
      %v3016 = vadd.f32 0.0, %v3015
      %v3017 = vpop.f32.mrf.mxu0
      %v3018 = vadd.f32 0.0, %v3017
      %3019 = vmatmul.bf16.gmra.mxu0 %v2946
      %v3020 = vpop.f32.mrf.mxu0
      %v3021 = vadd.f32 0.0, %v3020
      %v3022 = vpop.f32.mrf.mxu0
      %v3023 = vadd.f32 0.0, %v3022
      %3024 = vmatmul.bf16.gmra.mxu0 %v2948
      %v3025 = vpop.f32.mrf.mxu0
      %v3026 = vadd.f32 0.0, %v3025
      %v3027 = vpop.f32.mrf.mxu0
      %v3028 = vadd.f32 0.0, %v3027
      %3029 = vmatmul.bf16.gmra.mxu0 %v2950
      %v3030 = vpop.f32.mrf.mxu0
      %v3031 = vadd.f32 0.0, %v3030
      %v3032 = vpop.f32.mrf.mxu0
      %v3033 = vadd.f32 0.0, %v3032
      %3034 = vmatmul.bf16.gmra.mxu0 %v2952
      %v3035 = vpop.f32.mrf.mxu0
      %v3036 = vadd.f32 0.0, %v3035
      %v3037 = vpop.f32.mrf.mxu0
      %v3038 = vadd.f32 0.0, %v3037
      %3039 = vmatmul.bf16.gmra.mxu0 %v2954
      %v3040 = vpop.f32.mrf.mxu0
      %v3041 = vadd.f32 0.0, %v3040
      %v3042 = vpop.f32.mrf.mxu0
      %v3043 = vadd.f32 0.0, %v3042
      %3044 = vmatmul.bf16.gmra.mxu0 %v2956
      %v3045 = vpop.f32.mrf.mxu0
      %v3046 = vadd.f32 0.0, %v3045
      %v3047 = vpop.f32.mrf.mxu0
      %v3048 = vadd.f32 0.0, %v3047
      %3049 = vmatmul.bf16.gmra.mxu0 %v2958
      %v3050 = vpop.f32.mrf.mxu0
      %v3051 = vadd.f32 0.0, %v3050
      %v3052 = vpop.f32.mrf.mxu0
      %v3053 = vadd.f32 0.0, %v3052
      %3054 = vmatmul.bf16.gmra.mxu0 %v2960
      %v3055 = vpop.f32.mrf.mxu0
      %v3056 = vadd.f32 0.0, %v3055
      %v3057 = vpop.f32.mrf.mxu0
      %v3058 = vadd.f32 0.0, %v3057
      %3059 = vmatmul.bf16.gmra.mxu0 %v2962
      %v3060 = vpop.f32.mrf.mxu0
      %v3061 = vadd.f32 0.0, %v3060
      %v3062 = vpop.f32.mrf.mxu0
      %v3063 = vadd.f32 0.0, %v3062
      %3064 = vmatmul.bf16.gmra.mxu0 %v2964
      %v3065 = vpop.f32.mrf.mxu0
      %v3066 = vadd.f32 0.0, %v3065
      %v3067 = vpop.f32.mrf.mxu0
      %v3068 = vadd.f32 0.0, %v3067
      %3069 = vmatmul.bf16.gmra.mxu0 %v2966
      %v3070 = vpop.f32.mrf.mxu0
      %v3071 = vadd.f32 0.0, %v3070
      %v3072 = vpop.f32.mrf.mxu0
      %v3073 = vadd.f32 0.0, %v3072
      %3074 = vmatmul.bf16.gmra.mxu0 %v2968
      %v3075 = vpop.f32.mrf.mxu0
      %v3076 = vadd.f32 0.0, %v3075
      %v3077 = vpop.f32.mrf.mxu0
      %v3078 = vadd.f32 0.0, %v3077
      %3079 = vmatmul.bf16.gmra.mxu0 %v2970
      %v3080 = vpop.f32.mrf.mxu0
      %v3081 = vadd.f32 0.0, %v3080
      %v3082 = vpop.f32.mrf.mxu0
      %v3083 = vadd.f32 0.0, %v3082
      %3084 = vmatmul.bf16.gmra.mxu0 %v2972
      %v3085 = vpop.f32.mrf.mxu0
      %v3086 = vadd.f32 0.0, %v3085
      %v3087 = vpop.f32.mrf.mxu0
      %v3088 = vadd.f32 0.0, %v3087
      %3089 = vmatmul.bf16.gmra.mxu0 %v2974
      %v3090 = vpop.f32.mrf.mxu0
      %v3091 = vadd.f32 0.0, %v3090
      %v3092 = vpop.f32.mrf.mxu0
      %v3093 = vadd.f32 0.0, %v3092
      %3094 = vmatmul.bf16.gmra.mxu0 %v2976
      %v3095 = vpop.f32.mrf.mxu0
      %v3096 = vadd.f32 0.0, %v3095
      %v3097 = vpop.f32.mrf.mxu0
      %v3098 = vadd.f32 0.0, %v3097
      %3099 = vmatmul.bf16.gmra.mxu0 %v2978
      %v3100 = vpop.f32.mrf.mxu0
      %v3101 = vadd.f32 0.0, %v3100
      %v3102 = vpop.f32.mrf.mxu0
      %v3103 = vadd.f32 0.0, %v3102
      %3104 = vmatmul.bf16.gmra.mxu0 %v2980
      %v3105 = vpop.f32.mrf.mxu0
      %v3106 = vadd.f32 0.0, %v3105
      %v3107 = vpop.f32.mrf.mxu0
      %v3108 = vadd.f32 0.0, %v3107
      %3109 = vmatmul.bf16.gmra.mxu0 %v2982
      %v3110 = vpop.f32.mrf.mxu0
      %v3111 = vadd.f32 0.0, %v3110
      %v3112 = vpop.f32.mrf.mxu0
      %v3113 = vadd.f32 0.0, %v3112
      %3114 = vmatmul.bf16.gmra.mxu0 %v2984
      %v3115 = vpop.f32.mrf.mxu0
      %v3116 = vadd.f32 0.0, %v3115
      %v3117 = vpop.f32.mrf.mxu0
      %v3118 = vadd.f32 0.0, %v3117
      %3119 = vmatmul.bf16.gmra.mxu0 %v2986
      %v3120 = vpop.f32.mrf.mxu0
      %v3121 = vadd.f32 0.0, %v3120
      %v3122 = vpop.f32.mrf.mxu0
      %v3123 = vadd.f32 0.0, %v3122
      %3124 = vmatmul.bf16.gmra.mxu0 %v2988
      %v3125 = vpop.f32.mrf.mxu0
      %v3126 = vadd.f32 0.0, %v3125
      %v3127 = vpop.f32.mrf.mxu0
      %v3128 = vadd.f32 0.0, %v3127
      %3129 = vmatmul.bf16.gmra.mxu0 %v2990
      %v3130 = vpop.f32.mrf.mxu0
      %v3131 = vadd.f32 0.0, %v3130
      %v3132 = vpop.f32.mrf.mxu0
      %v3133 = vadd.f32 0.0, %v3132
      %3134 = vmatmul.bf16.gmra.mxu0 %v2992
      %v3135 = vpop.f32.mrf.mxu0
      %v3136 = vadd.f32 0.0, %v3135
      %v3137 = vpop.f32.mrf.mxu0
      %v3138 = vadd.f32 0.0, %v3137
      %3139 = vmatmul.bf16.gmra.mxu0 %v2994
      %v3140 = vpop.f32.mrf.mxu0
      %v3141 = vadd.f32 0.0, %v3140
      %v3142 = vpop.f32.mrf.mxu0
      %v3143 = vadd.f32 0.0, %v3142
      %3144 = vdwg.mxu0
      %v3157 = vunpack.c.l.b16 %v2878
      %v3158 = vunpack.c.l.b16 %v2879
      %v3159 = vunpack.c.l.b16 %v2880
      %v3160 = vunpack.c.l.b16 %v2881
      %v3161 = vunpack.c.l.b16 %v2882
      %v3162 = vunpack.c.l.b16 %v2883
      %v3163 = vunpack.c.l.b16 %v2884
      %v3164 = vunpack.c.l.b16 %v2885
      %v3165 = vunpack.c.l.b16 %v2886
      %v3166 = vunpack.c.l.b16 %v2887
      %v3167 = vunpack.c.l.b16 %v2888
      %v3168 = vunpack.c.l.b16 %v2889
      %v3169 = vpack.c.b16 %v3158, %v3157
      %v3170 = vpack.c.b16 %v3160, %v3159
      %v3171 = vpack.c.b16 %v3162, %v3161
      %v3172 = vpack.c.b16 %v3164, %v3163
      %v3173 = vpack.c.b16 %v3166, %v3165
      %v3174 = vpack.c.b16 %v3168, %v3167
      %v3181 = vsel %vm2939, %v2819, 0
      %3183 = vmatpush.bf16.msra.mxu0 0
      %3184 = vmatpush.bf16.msra.mxu0 0
      %3185 = vmatpush.bf16.msra.mxu0 %v3174
      %3186 = vmatpush.bf16.msra.mxu0 %v3173
      %3187 = vmatpush.bf16.msra.mxu0 %v3172
      %3188 = vmatpush.bf16.msra.mxu0 %v3171
      %3189 = vmatpush.bf16.msra.mxu0 %v3170
      %3190 = vmatpush.bf16.msra.mxu0 %v3169
      %3191 = vmatmul.bf16.gmra.mxu0 %v3181
      %v3192 = vpop.f32.mrf.mxu0
      %v3193 = vadd.f32 %v3006, %v3192
      %v3194 = vpop.f32.mrf.mxu0
      %v3195 = vadd.f32 %v3008, %v3194
      %3196 = vmatmul.bf16.gmra.mxu0 %v2940
      %v3197 = vpop.f32.mrf.mxu0
      %v3198 = vadd.f32 %v3011, %v3197
      %v3199 = vpop.f32.mrf.mxu0
      %v3200 = vadd.f32 %v3013, %v3199
      %3201 = vmatmul.bf16.gmra.mxu0 %v2942
      %v3202 = vpop.f32.mrf.mxu0
      %v3203 = vadd.f32 %v3016, %v3202
      %v3204 = vpop.f32.mrf.mxu0
      %v3205 = vadd.f32 %v3018, %v3204
      %3206 = vmatmul.bf16.gmra.mxu0 %v2944
      %v3207 = vpop.f32.mrf.mxu0
      %v3208 = vadd.f32 %v3021, %v3207
      %v3209 = vpop.f32.mrf.mxu0
      %v3210 = vadd.f32 %v3023, %v3209
      %3211 = vmatmul.bf16.gmra.mxu0 %v2946
      %v3212 = vpop.f32.mrf.mxu0
      %v3213 = vadd.f32 %v3026, %v3212
      %v3214 = vpop.f32.mrf.mxu0
      %v3215 = vadd.f32 %v3028, %v3214
      %3216 = vmatmul.bf16.gmra.mxu0 %v2948
      %v3217 = vpop.f32.mrf.mxu0
      %v3218 = vadd.f32 %v3031, %v3217
      %v3219 = vpop.f32.mrf.mxu0
      %v3220 = vadd.f32 %v3033, %v3219
      %3221 = vmatmul.bf16.gmra.mxu0 %v2950
      %v3222 = vpop.f32.mrf.mxu0
      %v3223 = vadd.f32 %v3036, %v3222
      %v3224 = vpop.f32.mrf.mxu0
      %v3225 = vadd.f32 %v3038, %v3224
      %3226 = vmatmul.bf16.gmra.mxu0 %v2952
      %v3227 = vpop.f32.mrf.mxu0
      %v3228 = vadd.f32 %v3041, %v3227
      %v3229 = vpop.f32.mrf.mxu0
      %v3230 = vadd.f32 %v3043, %v3229
      %3231 = vmatmul.bf16.gmra.mxu0 %v2954
      %v3232 = vpop.f32.mrf.mxu0
      %v3233 = vadd.f32 %v3046, %v3232
      %v3234 = vpop.f32.mrf.mxu0
      %v3235 = vadd.f32 %v3048, %v3234
      %3236 = vmatmul.bf16.gmra.mxu0 %v2956
      %v3237 = vpop.f32.mrf.mxu0
      %v3238 = vadd.f32 %v3051, %v3237
      %v3239 = vpop.f32.mrf.mxu0
      %v3240 = vadd.f32 %v3053, %v3239
      %3241 = vmatmul.bf16.gmra.mxu0 %v2958
      %v3242 = vpop.f32.mrf.mxu0
      %v3243 = vadd.f32 %v3056, %v3242
      %v3244 = vpop.f32.mrf.mxu0
      %v3245 = vadd.f32 %v3058, %v3244
      %3246 = vmatmul.bf16.gmra.mxu0 %v2960
      %v3247 = vpop.f32.mrf.mxu0
      %v3248 = vadd.f32 %v3061, %v3247
      %v3249 = vpop.f32.mrf.mxu0
      %v3250 = vadd.f32 %v3063, %v3249
      %3251 = vmatmul.bf16.gmra.mxu0 %v2962
      %v3252 = vpop.f32.mrf.mxu0
      %v3253 = vadd.f32 %v3066, %v3252
      %v3254 = vpop.f32.mrf.mxu0
      %v3255 = vadd.f32 %v3068, %v3254
      %3256 = vmatmul.bf16.gmra.mxu0 %v2964
      %v3257 = vpop.f32.mrf.mxu0
      %v3258 = vadd.f32 %v3071, %v3257
      %v3259 = vpop.f32.mrf.mxu0
      %v3260 = vadd.f32 %v3073, %v3259
      %3261 = vmatmul.bf16.gmra.mxu0 %v2966
      %v3262 = vpop.f32.mrf.mxu0
      %v3263 = vadd.f32 %v3076, %v3262
      %v3264 = vpop.f32.mrf.mxu0
      %v3265 = vadd.f32 %v3078, %v3264
      %3266 = vmatmul.bf16.gmra.mxu0 %v2968
      %v3267 = vpop.f32.mrf.mxu0
      %v3268 = vadd.f32 %v3081, %v3267
      %v3269 = vpop.f32.mrf.mxu0
      %v3270 = vadd.f32 %v3083, %v3269
      %3271 = vmatmul.bf16.gmra.mxu0 %v2970
      %v3272 = vpop.f32.mrf.mxu0
      %v3273 = vadd.f32 %v3086, %v3272
      %v3274 = vpop.f32.mrf.mxu0
      %v3275 = vadd.f32 %v3088, %v3274
      %3276 = vmatmul.bf16.gmra.mxu0 %v2972
      %v3277 = vpop.f32.mrf.mxu0
      %v3278 = vadd.f32 %v3091, %v3277
      %v3279 = vpop.f32.mrf.mxu0
      %v3280 = vadd.f32 %v3093, %v3279
      %3281 = vmatmul.bf16.gmra.mxu0 %v2974
      %v3282 = vpop.f32.mrf.mxu0
      %v3283 = vadd.f32 %v3096, %v3282
      %v3284 = vpop.f32.mrf.mxu0
      %v3285 = vadd.f32 %v3098, %v3284
      %3286 = vmatmul.bf16.gmra.mxu0 %v2976
      %v3287 = vpop.f32.mrf.mxu0
      %v3288 = vadd.f32 %v3101, %v3287
      %v3289 = vpop.f32.mrf.mxu0
      %v3290 = vadd.f32 %v3103, %v3289
      %3291 = vmatmul.bf16.gmra.mxu0 %v2978
      %v3292 = vpop.f32.mrf.mxu0
      %v3293 = vadd.f32 %v3106, %v3292
      %v3294 = vpop.f32.mrf.mxu0
      %v3295 = vadd.f32 %v3108, %v3294
      %3296 = vmatmul.bf16.gmra.mxu0 %v2980
      %v3297 = vpop.f32.mrf.mxu0
      %v3298 = vadd.f32 %v3111, %v3297
      %v3299 = vpop.f32.mrf.mxu0
      %v3300 = vadd.f32 %v3113, %v3299
      %3301 = vmatmul.bf16.gmra.mxu0 %v2982
      %v3302 = vpop.f32.mrf.mxu0
      %v3303 = vadd.f32 %v3116, %v3302
      %v3304 = vpop.f32.mrf.mxu0
      %v3305 = vadd.f32 %v3118, %v3304
      %3306 = vmatmul.bf16.gmra.mxu0 %v2984
      %v3307 = vpop.f32.mrf.mxu0
      %v3308 = vadd.f32 %v3121, %v3307
      %v3309 = vpop.f32.mrf.mxu0
      %v3310 = vadd.f32 %v3123, %v3309
      %3311 = vmatmul.bf16.gmra.mxu0 %v2986
      %v3312 = vpop.f32.mrf.mxu0
      %v3313 = vadd.f32 %v3126, %v3312
      %v3314 = vpop.f32.mrf.mxu0
      %v3315 = vadd.f32 %v3128, %v3314
      %3316 = vmatmul.bf16.gmra.mxu0 %v2988
      %v3317 = vpop.f32.mrf.mxu0
      %v3318 = vadd.f32 %v3131, %v3317
      %v3319 = vpop.f32.mrf.mxu0
      %v3320 = vadd.f32 %v3133, %v3319
      %3321 = vmatmul.bf16.gmra.mxu0 %v2990
      %v3322 = vpop.f32.mrf.mxu0
      %v3323 = vadd.f32 %v3136, %v3322
      %v3324 = vpop.f32.mrf.mxu0
      %v3325 = vadd.f32 %v3138, %v3324
      %3326 = vmatmul.bf16.gmra.mxu0 %v2992
      %v3327 = vpop.f32.mrf.mxu0
      %v3328 = vadd.f32 %v3141, %v3327
      %v3329 = vpop.f32.mrf.mxu0
      %v3330 = vadd.f32 %v3143, %v3329
      %3331 = vdwg.mxu0
      %s3332 = scalar_lea.vmem %s3, 96
      %v3333 = vld [vmem:[%s3332] sm:$0xf]
      %v3334 = vld [vmem:[%s3332 + $0x4] sm:$0xf]
      %v3335 = vld [vmem:[%s3332 + $0x8] sm:$0xf]
      %v3336 = vld [vmem:[%s3332 + $0xc] sm:$0xf]
      %v3337 = vld [vmem:[%s3332 + $0x10] sm:$0xf]
      %v3338 = vld [vmem:[%s3332 + $0x14] sm:$0xf]
      %v3339 = vld [vmem:[%s3332 + $0x18] sm:$0xf]
      %v3340 = vld [vmem:[%s3332 + $0x1c] sm:$0xf]
      %v3341 = vld [vmem:[%s3332 + $0x20] sm:$0xf]
      %v3342 = vld [vmem:[%s3332 + $0x24] sm:$0xf]
      %v3343 = vld [vmem:[%s3332 + $0x28] sm:$0xf]
      %v3344 = vld [vmem:[%s3332 + $0x2c] sm:$0xf]
      %v3357 = vunpack.c.l.b16 %v3333
      %v3358 = vunpack.c.l.b16 %v3334
      %v3359 = vunpack.c.l.b16 %v3335
      %v3360 = vunpack.c.l.b16 %v3336
      %v3361 = vunpack.c.l.b16 %v3337
      %v3362 = vunpack.c.l.b16 %v3338
      %v3363 = vunpack.c.l.b16 %v3339
      %v3364 = vunpack.c.l.b16 %v3340
      %v3365 = vunpack.c.l.b16 %v3341
      %v3366 = vunpack.c.l.b16 %v3342
      %v3367 = vunpack.c.l.b16 %v3343
      %v3368 = vunpack.c.l.b16 %v3344
      %v3369 = vpack.c.b16 %v3358, %v3357
      %v3370 = vpack.c.b16 %v3360, %v3359
      %v3371 = vpack.c.b16 %v3362, %v3361
      %v3372 = vpack.c.b16 %v3364, %v3363
      %v3373 = vpack.c.b16 %v3366, %v3365
      %v3374 = vpack.c.b16 %v3368, %v3367
      %v3381 = vsel %vm2939, %v2877, 0
      %3383 = vmatpush.bf16.msra.mxu0 0
      %3384 = vmatpush.bf16.msra.mxu0 0
      %3385 = vmatpush.bf16.msra.mxu0 %v3374
      %3386 = vmatpush.bf16.msra.mxu0 %v3373
      %3387 = vmatpush.bf16.msra.mxu0 %v3372
      %3388 = vmatpush.bf16.msra.mxu0 %v3371
      %3389 = vmatpush.bf16.msra.mxu0 %v3370
      %3390 = vmatpush.bf16.msra.mxu0 %v3369
      %3391 = vmatmul.bf16.gmra.mxu0 %v2942
      %v3392 = vpop.f32.mrf.mxu0
      %v3393 = vadd.f32 0.0, %v3392
      %v3394 = vpop.f32.mrf.mxu0
      %v3395 = vadd.f32 0.0, %v3394
      %3396 = vmatmul.bf16.gmra.mxu0 %v2944
      %v3397 = vpop.f32.mrf.mxu0
      %v3398 = vadd.f32 0.0, %v3397
      %v3399 = vpop.f32.mrf.mxu0
      %v3400 = vadd.f32 0.0, %v3399
      %3401 = vmatmul.bf16.gmra.mxu0 %v2946
      %v3402 = vpop.f32.mrf.mxu0
      %v3403 = vadd.f32 0.0, %v3402
      %v3404 = vpop.f32.mrf.mxu0
      %v3405 = vadd.f32 0.0, %v3404
      %3406 = vmatmul.bf16.gmra.mxu0 %v2948
      %v3407 = vpop.f32.mrf.mxu0
      %v3408 = vadd.f32 0.0, %v3407
      %v3409 = vpop.f32.mrf.mxu0
      %v3410 = vadd.f32 0.0, %v3409
      %3411 = vmatmul.bf16.gmra.mxu0 %v2950
      %v3412 = vpop.f32.mrf.mxu0
      %v3413 = vadd.f32 0.0, %v3412
      %v3414 = vpop.f32.mrf.mxu0
      %v3415 = vadd.f32 0.0, %v3414
      %3416 = vmatmul.bf16.gmra.mxu0 %v2952
      %v3417 = vpop.f32.mrf.mxu0
      %v3418 = vadd.f32 0.0, %v3417
      %v3419 = vpop.f32.mrf.mxu0
      %v3420 = vadd.f32 0.0, %v3419
      %3421 = vmatmul.bf16.gmra.mxu0 %v2954
      %v3422 = vpop.f32.mrf.mxu0
      %v3423 = vadd.f32 0.0, %v3422
      %v3424 = vpop.f32.mrf.mxu0
      %v3425 = vadd.f32 0.0, %v3424
      %3426 = vmatmul.bf16.gmra.mxu0 %v2956
      %v3427 = vpop.f32.mrf.mxu0
      %v3428 = vadd.f32 0.0, %v3427
      %v3429 = vpop.f32.mrf.mxu0
      %v3430 = vadd.f32 0.0, %v3429
      %3431 = vmatmul.bf16.gmra.mxu0 %v2958
      %v3432 = vpop.f32.mrf.mxu0
      %v3433 = vadd.f32 0.0, %v3432
      %v3434 = vpop.f32.mrf.mxu0
      %v3435 = vadd.f32 0.0, %v3434
      %3436 = vmatmul.bf16.gmra.mxu0 %v2960
      %v3437 = vpop.f32.mrf.mxu0
      %v3438 = vadd.f32 0.0, %v3437
      %v3439 = vpop.f32.mrf.mxu0
      %v3440 = vadd.f32 0.0, %v3439
      %3441 = vmatmul.bf16.gmra.mxu0 %v2962
      %v3442 = vpop.f32.mrf.mxu0
      %v3443 = vadd.f32 0.0, %v3442
      %v3444 = vpop.f32.mrf.mxu0
      %v3445 = vadd.f32 0.0, %v3444
      %3446 = vmatmul.bf16.gmra.mxu0 %v2964
      %v3447 = vpop.f32.mrf.mxu0
      %v3448 = vadd.f32 0.0, %v3447
      %v3449 = vpop.f32.mrf.mxu0
      %v3450 = vadd.f32 0.0, %v3449
      %3451 = vmatmul.bf16.gmra.mxu0 %v2966
      %v3452 = vpop.f32.mrf.mxu0
      %v3453 = vadd.f32 0.0, %v3452
      %v3454 = vpop.f32.mrf.mxu0
      %v3455 = vadd.f32 0.0, %v3454
      %3456 = vmatmul.bf16.gmra.mxu0 %v2968
      %v3457 = vpop.f32.mrf.mxu0
      %v3458 = vadd.f32 0.0, %v3457
      %v3459 = vpop.f32.mrf.mxu0
      %v3460 = vadd.f32 0.0, %v3459
      %3461 = vmatmul.bf16.gmra.mxu0 %v2970
      %v3462 = vpop.f32.mrf.mxu0
      %v3463 = vadd.f32 0.0, %v3462
      %v3464 = vpop.f32.mrf.mxu0
      %v3465 = vadd.f32 0.0, %v3464
      %3466 = vmatmul.bf16.gmra.mxu0 %v2972
      %v3467 = vpop.f32.mrf.mxu0
      %v3468 = vadd.f32 0.0, %v3467
      %v3469 = vpop.f32.mrf.mxu0
      %v3470 = vadd.f32 0.0, %v3469
      %3471 = vmatmul.bf16.gmra.mxu0 %v2974
      %v3472 = vpop.f32.mrf.mxu0
      %v3473 = vadd.f32 0.0, %v3472
      %v3474 = vpop.f32.mrf.mxu0
      %v3475 = vadd.f32 0.0, %v3474
      %3476 = vmatmul.bf16.gmra.mxu0 %v2976
      %v3477 = vpop.f32.mrf.mxu0
      %v3478 = vadd.f32 0.0, %v3477
      %v3479 = vpop.f32.mrf.mxu0
      %v3480 = vadd.f32 0.0, %v3479
      %3481 = vmatmul.bf16.gmra.mxu0 %v2978
      %v3482 = vpop.f32.mrf.mxu0
      %v3483 = vadd.f32 0.0, %v3482
      %v3484 = vpop.f32.mrf.mxu0
      %v3485 = vadd.f32 0.0, %v3484
      %3486 = vmatmul.bf16.gmra.mxu0 %v2980
      %v3487 = vpop.f32.mrf.mxu0
      %v3488 = vadd.f32 0.0, %v3487
      %v3489 = vpop.f32.mrf.mxu0
      %v3490 = vadd.f32 0.0, %v3489
      %3491 = vmatmul.bf16.gmra.mxu0 %v2982
      %v3492 = vpop.f32.mrf.mxu0
      %v3493 = vadd.f32 0.0, %v3492
      %v3494 = vpop.f32.mrf.mxu0
      %v3495 = vadd.f32 0.0, %v3494
      %3496 = vmatmul.bf16.gmra.mxu0 %v2984
      %v3497 = vpop.f32.mrf.mxu0
      %v3498 = vadd.f32 0.0, %v3497
      %v3499 = vpop.f32.mrf.mxu0
      %v3500 = vadd.f32 0.0, %v3499
      %3501 = vmatmul.bf16.gmra.mxu0 %v2986
      %v3502 = vpop.f32.mrf.mxu0
      %v3503 = vadd.f32 0.0, %v3502
      %v3504 = vpop.f32.mrf.mxu0
      %v3505 = vadd.f32 0.0, %v3504
      %3506 = vmatmul.bf16.gmra.mxu0 %v2988
      %v3507 = vpop.f32.mrf.mxu0
      %v3508 = vadd.f32 0.0, %v3507
      %v3509 = vpop.f32.mrf.mxu0
      %v3510 = vadd.f32 0.0, %v3509
      %3511 = vmatmul.bf16.gmra.mxu0 %v2990
      %v3512 = vpop.f32.mrf.mxu0
      %v3513 = vadd.f32 0.0, %v3512
      %v3514 = vpop.f32.mrf.mxu0
      %v3515 = vadd.f32 0.0, %v3514
      %3516 = vmatmul.bf16.gmra.mxu0 %v2992
      %v3517 = vpop.f32.mrf.mxu0
      %v3518 = vadd.f32 0.0, %v3517
      %v3519 = vpop.f32.mrf.mxu0
      %v3520 = vadd.f32 0.0, %v3519
      %3521 = vmatmul.bf16.gmra.mxu0 %v2994
      %v3522 = vpop.f32.mrf.mxu0
      %v3523 = vadd.f32 0.0, %v3522
      %v3524 = vpop.f32.mrf.mxu0
      %v3525 = vadd.f32 0.0, %v3524
      %3526 = vmatmul.bf16.gmra.mxu0 %v3381
      %v3527 = vpop.f32.mrf.mxu0
      %v3528 = vadd.f32 0.0, %v3527
      %v3529 = vpop.f32.mrf.mxu0
      %v3530 = vadd.f32 0.0, %v3529
      %3531 = vdwg.mxu0
      %v3532 = vadd.f32 %v3193, %v3393
      %v3533 = vadd.f32 %v3195, %v3395
      %v3534 = vadd.f32 %v3198, %v3398
      %v3535 = vadd.f32 %v3200, %v3400
      %v3536 = vadd.f32 %v3203, %v3403
      %v3537 = vadd.f32 %v3205, %v3405
      %v3538 = vadd.f32 %v3208, %v3408
      %v3539 = vadd.f32 %v3210, %v3410
      %v3540 = vadd.f32 %v3213, %v3413
      %v3541 = vadd.f32 %v3215, %v3415
      %v3542 = vadd.f32 %v3218, %v3418
      %v3543 = vadd.f32 %v3220, %v3420
      %v3544 = vadd.f32 %v3223, %v3423
      %v3545 = vadd.f32 %v3225, %v3425
      %v3546 = vadd.f32 %v3228, %v3428
      %v3547 = vadd.f32 %v3230, %v3430
      %v3548 = vadd.f32 %v3233, %v3433
      %v3549 = vadd.f32 %v3235, %v3435
      %v3550 = vadd.f32 %v3238, %v3438
      %v3551 = vadd.f32 %v3240, %v3440
      %v3552 = vadd.f32 %v3243, %v3443
      %v3553 = vadd.f32 %v3245, %v3445
      %v3554 = vadd.f32 %v3248, %v3448
      %v3555 = vadd.f32 %v3250, %v3450
      %v3556 = vadd.f32 %v3253, %v3453
      %v3557 = vadd.f32 %v3255, %v3455
      %v3558 = vadd.f32 %v3258, %v3458
      %v3559 = vadd.f32 %v3260, %v3460
      %v3560 = vadd.f32 %v3263, %v3463
      %v3561 = vadd.f32 %v3265, %v3465
      %v3562 = vadd.f32 %v3268, %v3468
      %v3563 = vadd.f32 %v3270, %v3470
      %v3564 = vadd.f32 %v3273, %v3473
      %v3565 = vadd.f32 %v3275, %v3475
      %v3566 = vadd.f32 %v3278, %v3478
      %v3567 = vadd.f32 %v3280, %v3480
      %v3568 = vadd.f32 %v3283, %v3483
      %v3569 = vadd.f32 %v3285, %v3485
      %v3570 = vadd.f32 %v3288, %v3488
      %v3571 = vadd.f32 %v3290, %v3490
      %v3572 = vadd.f32 %v3293, %v3493
      %v3573 = vadd.f32 %v3295, %v3495
      %v3574 = vadd.f32 %v3298, %v3498
      %v3575 = vadd.f32 %v3300, %v3500
      %v3576 = vadd.f32 %v3303, %v3503
      %v3577 = vadd.f32 %v3305, %v3505
      %v3578 = vadd.f32 %v3308, %v3508
      %v3579 = vadd.f32 %v3310, %v3510
      %v3580 = vadd.f32 %v3313, %v3513
      %v3581 = vadd.f32 %v3315, %v3515
      %v3582 = vadd.f32 %v3318, %v3518
      %v3583 = vadd.f32 %v3320, %v3520
      %v3584 = vadd.f32 %v3323, %v3523
      %v3585 = vadd.f32 %v3325, %v3525
      %v3586 = vadd.f32 %v3328, %v3528
      %v3587 = vadd.f32 %v3330, %v3530
      %v3589 = vperm.slane %v2605, 0
      %v3591 = vadd.f32 %v3532, %v3589
      %v3592 = vadd.f32 %v3533, %v3589
      %v3593 = vadd.f32 %v3534, %v3589
      %v3594 = vadd.f32 %v3535, %v3589
      %v3595 = vadd.f32 %v3536, %v3589
      %v3596 = vadd.f32 %v3537, %v3589
      %v3597 = vadd.f32 %v3538, %v3589
      %v3598 = vadd.f32 %v3539, %v3589
      %v3599 = vadd.f32 %v3540, %v3589
      %v3600 = vadd.f32 %v3541, %v3589
      %v3601 = vadd.f32 %v3542, %v3589
      %v3602 = vadd.f32 %v3543, %v3589
      %v3603 = vadd.f32 %v3544, %v3589
      %v3604 = vadd.f32 %v3545, %v3589
      %v3605 = vadd.f32 %v3546, %v3589
      %v3606 = vadd.f32 %v3547, %v3589
      %v3607 = vadd.f32 %v3548, %v3589
      %v3608 = vadd.f32 %v3549, %v3589
      %v3609 = vadd.f32 %v3550, %v3589
      %v3610 = vadd.f32 %v3551, %v3589
      %v3611 = vadd.f32 %v3552, %v3589
      %v3612 = vadd.f32 %v3553, %v3589
      %v3613 = vadd.f32 %v3554, %v3589
      %v3614 = vadd.f32 %v3555, %v3589
      %v3615 = vadd.f32 %v3556, %v3589
      %v3616 = vadd.f32 %v3557, %v3589
      %v3617 = vadd.f32 %v3558, %v3589
      %v3618 = vadd.f32 %v3559, %v3589
      %v3619 = vadd.f32 %v3560, %v3589
      %v3620 = vadd.f32 %v3561, %v3589
      %v3621 = vadd.f32 %v3562, %v3589
      %v3622 = vadd.f32 %v3563, %v3589
      %v3623 = vadd.f32 %v3564, %v3589
      %v3624 = vadd.f32 %v3565, %v3589
      %v3625 = vadd.f32 %v3566, %v3589
      %v3626 = vadd.f32 %v3567, %v3589
      %v3627 = vadd.f32 %v3568, %v3589
      %v3628 = vadd.f32 %v3569, %v3589
      %v3629 = vadd.f32 %v3570, %v3589
      %v3630 = vadd.f32 %v3571, %v3589
      %v3631 = vadd.f32 %v3572, %v3589
      %v3632 = vadd.f32 %v3573, %v3589
      %v3633 = vadd.f32 %v3574, %v3589
      %v3634 = vadd.f32 %v3575, %v3589
      %v3635 = vadd.f32 %v3576, %v3589
      %v3636 = vadd.f32 %v3577, %v3589
      %v3637 = vadd.f32 %v3578, %v3589
      %v3638 = vadd.f32 %v3579, %v3589
      %v3639 = vadd.f32 %v3580, %v3589
      %v3640 = vadd.f32 %v3581, %v3589
      %v3641 = vadd.f32 %v3582, %v3589
      %v3642 = vadd.f32 %v3583, %v3589
      %v3643 = vadd.f32 %v3584, %v3589
      %v3644 = vadd.f32 %v3585, %v3589
      %v3645 = vadd.f32 %v3586, %v3589
      %v3646 = vadd.f32 %v3587, %v3589
      %v3647 = vmax.f32 %v3591, 0.0
      %v3648 = vmax.f32 %v3592, 0.0
      %v3649 = vmax.f32 %v3593, 0.0
      %v3650 = vmax.f32 %v3594, 0.0
      %v3651 = vmax.f32 %v3595, 0.0
      %v3652 = vmax.f32 %v3596, 0.0
      %v3653 = vmax.f32 %v3597, 0.0
      %v3654 = vmax.f32 %v3598, 0.0
      %v3655 = vmax.f32 %v3599, 0.0
      %v3656 = vmax.f32 %v3600, 0.0
      %v3657 = vmax.f32 %v3601, 0.0
      %v3658 = vmax.f32 %v3602, 0.0
      %v3659 = vmax.f32 %v3603, 0.0
      %v3660 = vmax.f32 %v3604, 0.0
      %v3661 = vmax.f32 %v3605, 0.0
      %v3662 = vmax.f32 %v3606, 0.0
      %v3663 = vmax.f32 %v3607, 0.0
      %v3664 = vmax.f32 %v3608, 0.0
      %v3665 = vmax.f32 %v3609, 0.0
      %v3666 = vmax.f32 %v3610, 0.0
      %v3667 = vmax.f32 %v3611, 0.0
      %v3668 = vmax.f32 %v3612, 0.0
      %v3669 = vmax.f32 %v3613, 0.0
      %v3670 = vmax.f32 %v3614, 0.0
      %v3671 = vmax.f32 %v3615, 0.0
      %v3672 = vmax.f32 %v3616, 0.0
      %v3673 = vmax.f32 %v3617, 0.0
      %v3674 = vmax.f32 %v3618, 0.0
      %v3675 = vmax.f32 %v3619, 0.0
      %v3676 = vmax.f32 %v3620, 0.0
      %v3677 = vmax.f32 %v3621, 0.0
      %v3678 = vmax.f32 %v3622, 0.0
      %v3679 = vmax.f32 %v3623, 0.0
      %v3680 = vmax.f32 %v3624, 0.0
      %v3681 = vmax.f32 %v3625, 0.0
      %v3682 = vmax.f32 %v3626, 0.0
      %v3683 = vmax.f32 %v3627, 0.0
      %v3684 = vmax.f32 %v3628, 0.0
      %v3685 = vmax.f32 %v3629, 0.0
      %v3686 = vmax.f32 %v3630, 0.0
      %v3687 = vmax.f32 %v3631, 0.0
      %v3688 = vmax.f32 %v3632, 0.0
      %v3689 = vmax.f32 %v3633, 0.0
      %v3690 = vmax.f32 %v3634, 0.0
      %v3691 = vmax.f32 %v3635, 0.0
      %v3692 = vmax.f32 %v3636, 0.0
      %v3693 = vmax.f32 %v3637, 0.0
      %v3694 = vmax.f32 %v3638, 0.0
      %v3695 = vmax.f32 %v3639, 0.0
      %v3696 = vmax.f32 %v3640, 0.0
      %v3697 = vmax.f32 %v3641, 0.0
      %v3698 = vmax.f32 %v3642, 0.0
      %v3699 = vmax.f32 %v3643, 0.0
      %v3700 = vmax.f32 %v3644, 0.0
      %v3701 = vmax.f32 %v3645, 0.0
      %v3702 = vmax.f32 %v3646, 0.0
      %3703 = vrot.lane.b32.xlu0 %v1975, 32
      %v3704 = vpop.permute.xlu0 %3703
      %3705 = vrot.lane.b32.xlu0 %v1976, 32
      %v3706 = vpop.permute.xlu0 %3705
      %3707 = vrot.lane.b32.xlu0 %v1977, 32
      %v3708 = vpop.permute.xlu0 %3707
      %3709 = vrot.lane.b32.xlu0 %v1978, 32
      %v3710 = vpop.permute.xlu0 %3709
      %3711 = vrot.lane.b32.xlu0 %v1979, 32
      %v3712 = vpop.permute.xlu0 %3711
      %3713 = vrot.lane.b32.xlu0 %v1980, 32
      %v3714 = vpop.permute.xlu0 %3713
      %3715 = vrot.lane.b32.xlu0 %v1981, 32
      %v3716 = vpop.permute.xlu0 %3715
      %3717 = vrot.lane.b32.xlu0 %v1982, 32
      %v3718 = vpop.permute.xlu0 %3717
      %3719 = vrot.lane.b32.xlu0 %v1983, 32
      %v3720 = vpop.permute.xlu0 %3719
      %3721 = vrot.lane.b32.xlu0 %v1984, 32
      %v3722 = vpop.permute.xlu0 %3721
      %3723 = vrot.lane.b32.xlu0 %v1985, 32
      %v3724 = vpop.permute.xlu0 %3723
      %3725 = vrot.lane.b32.xlu0 %v1986, 32
      %v3726 = vpop.permute.xlu0 %3725
      %3727 = vrot.lane.b32.xlu0 %v1987, 32
      %v3728 = vpop.permute.xlu0 %3727
      %3729 = vrot.lane.b32.xlu0 %v1988, 32
      %v3730 = vpop.permute.xlu0 %3729
      %3731 = vrot.lane.b32.xlu0 %v1989, 32
      %v3732 = vpop.permute.xlu0 %3731
      %3733 = vrot.lane.b32.xlu0 %v1990, 32
      %v3734 = vpop.permute.xlu0 %3733
      %3735 = vrot.lane.b32.xlu0 %v1991, 32
      %v3736 = vpop.permute.xlu0 %3735
      %3737 = vrot.lane.b32.xlu0 %v1992, 32
      %v3738 = vpop.permute.xlu0 %3737
      %3739 = vrot.lane.b32.xlu0 %v1993, 32
      %v3740 = vpop.permute.xlu0 %3739
      %3741 = vrot.lane.b32.xlu0 %v1994, 32
      %v3742 = vpop.permute.xlu0 %3741
      %3743 = vrot.lane.b32.xlu0 %v1995, 32
      %v3744 = vpop.permute.xlu0 %3743
      %3745 = vrot.lane.b32.xlu0 %v1996, 32
      %v3746 = vpop.permute.xlu0 %3745
      %3747 = vrot.lane.b32.xlu0 %v1997, 32
      %v3748 = vpop.permute.xlu0 %3747
      %3749 = vrot.lane.b32.xlu0 %v1998, 32
      %v3750 = vpop.permute.xlu0 %3749
      %3751 = vrot.lane.b32.xlu0 %v1999, 32
      %v3752 = vpop.permute.xlu0 %3751
      %3753 = vrot.lane.b32.xlu0 %v2000, 32
      %v3754 = vpop.permute.xlu0 %3753
      %3755 = vrot.lane.b32.xlu0 %v2001, 32
      %v3756 = vpop.permute.xlu0 %3755
      %3757 = vrot.lane.b32.xlu0 %v2002, 32
      %v3758 = vpop.permute.xlu0 %3757
      %3759 = vrot.lane.b32.xlu0 %v2003, 32
      %v3760 = vpop.permute.xlu0 %3759
      %3761 = vrot.lane.b32.xlu0 %v2004, 32
      %v3762 = vpop.permute.xlu0 %3761
      %3793 = vrot.lane.b32.xlu0 %v2575, 64
      %v3794 = vpop.permute.xlu0 %3793
      %3795 = vrot.lane.b32.xlu0 %v2576, 64
      %v3796 = vpop.permute.xlu0 %3795
      %3797 = vrot.lane.b32.xlu0 %v2577, 64
      %v3798 = vpop.permute.xlu0 %3797
      %3799 = vrot.lane.b32.xlu0 %v2578, 64
      %v3800 = vpop.permute.xlu0 %3799
      %3801 = vrot.lane.b32.xlu0 %v2579, 64
      %v3802 = vpop.permute.xlu0 %3801
      %3803 = vrot.lane.b32.xlu0 %v2580, 64
      %v3804 = vpop.permute.xlu0 %3803
      %3805 = vrot.lane.b32.xlu0 %v2581, 64
      %v3806 = vpop.permute.xlu0 %3805
      %3807 = vrot.lane.b32.xlu0 %v2582, 64
      %v3808 = vpop.permute.xlu0 %3807
      %3809 = vrot.lane.b32.xlu0 %v2583, 64
      %v3810 = vpop.permute.xlu0 %3809
      %3811 = vrot.lane.b32.xlu0 %v2584, 64
      %v3812 = vpop.permute.xlu0 %3811
      %3813 = vrot.lane.b32.xlu0 %v2585, 64
      %v3814 = vpop.permute.xlu0 %3813
      %3815 = vrot.lane.b32.xlu0 %v2586, 64
      %v3816 = vpop.permute.xlu0 %3815
      %3817 = vrot.lane.b32.xlu0 %v2587, 64
      %v3818 = vpop.permute.xlu0 %3817
      %3819 = vrot.lane.b32.xlu0 %v2588, 64
      %v3820 = vpop.permute.xlu0 %3819
      %3821 = vrot.lane.b32.xlu0 %v2589, 64
      %v3822 = vpop.permute.xlu0 %3821
      %3823 = vrot.lane.b32.xlu0 %v2590, 64
      %v3824 = vpop.permute.xlu0 %3823
      %3825 = vrot.lane.b32.xlu0 %v2591, 64
      %v3826 = vpop.permute.xlu0 %3825
      %3827 = vrot.lane.b32.xlu0 %v2592, 64
      %v3828 = vpop.permute.xlu0 %3827
      %3829 = vrot.lane.b32.xlu0 %v2593, 64
      %v3830 = vpop.permute.xlu0 %3829
      %3831 = vrot.lane.b32.xlu0 %v2594, 64
      %v3832 = vpop.permute.xlu0 %3831
      %3833 = vrot.lane.b32.xlu0 %v2595, 64
      %v3834 = vpop.permute.xlu0 %3833
      %3835 = vrot.lane.b32.xlu0 %v2596, 64
      %v3836 = vpop.permute.xlu0 %3835
      %3837 = vrot.lane.b32.xlu0 %v2597, 64
      %v3838 = vpop.permute.xlu0 %3837
      %3839 = vrot.lane.b32.xlu0 %v2598, 64
      %v3840 = vpop.permute.xlu0 %3839
      %3841 = vrot.lane.b32.xlu0 %v2599, 64
      %v3842 = vpop.permute.xlu0 %3841
      %3843 = vrot.lane.b32.xlu0 %v2600, 64
      %v3844 = vpop.permute.xlu0 %3843
      %3845 = vrot.lane.b32.xlu0 %v2601, 64
      %v3846 = vpop.permute.xlu0 %3845
      %3847 = vrot.lane.b32.xlu0 %v2602, 64
      %v3848 = vpop.permute.xlu0 %3847
      %3849 = vrot.lane.b32.xlu0 %v2603, 64
      %v3850 = vpop.permute.xlu0 %3849
      %3851 = vrot.lane.b32.xlu0 %v2604, 64
      %v3852 = vpop.permute.xlu0 %3851
      %v3854 = vsel %vm2756, %v2125, %v3704
      %v3856 = vsel %vm2756, %v2126, %v3706
      %v3858 = vsel %vm2756, %v2127, %v3708
      %v3860 = vsel %vm2756, %v2128, %v3710
      %v3862 = vsel %vm2756, %v2129, %v3712
      %v3864 = vsel %vm2756, %v2130, %v3714
      %v3866 = vsel %vm2756, %v2131, %v3716
      %v3868 = vsel %vm2756, %v2132, %v3718
      %v3870 = vsel %vm2756, %v2133, %v3720
      %v3872 = vsel %vm2756, %v2134, %v3722
      %v3874 = vsel %vm2756, %v2135, %v3724
      %v3876 = vsel %vm2756, %v2136, %v3726
      %v3878 = vsel %vm2756, %v2137, %v3728
      %v3880 = vsel %vm2756, %v2138, %v3730
      %v3882 = vsel %vm2756, %v2139, %v3732
      %v3884 = vsel %vm2756, %v2140, %v3734
      %v3886 = vsel %vm2756, %v2141, %v3736
      %v3888 = vsel %vm2756, %v2142, %v3738
      %v3890 = vsel %vm2756, %v2143, %v3740
      %v3892 = vsel %vm2756, %v2144, %v3742
      %v3894 = vsel %vm2756, %v2145, %v3744
      %v3896 = vsel %vm2756, %v2146, %v3746
      %v3898 = vsel %vm2756, %v2147, %v3748
      %v3900 = vsel %vm2756, %v2148, %v3750
      %v3902 = vsel %vm2756, %v2149, %v3752
      %v3904 = vsel %vm2756, %v2150, %v3754
      %v3906 = vsel %vm2756, %v2151, %v3756
      %v3908 = vsel %vm2756, %v2152, %v3758
      %v3910 = vsel %vm2756, %v2153, %v3760
      %v3912 = vsel %vm2756, %v2154, %v3762
      %v3914 = vsel %vm2817, %v3854, %v3794
      %v3916 = vsel %vm2817, %v3856, %v3796
      %v3918 = vsel %vm2817, %v3858, %v3798
      %v3920 = vsel %vm2817, %v3860, %v3800
      %v3922 = vsel %vm2817, %v3862, %v3802
      %v3924 = vsel %vm2817, %v3864, %v3804
      %v3926 = vsel %vm2817, %v3866, %v3806
      %v3928 = vsel %vm2817, %v3868, %v3808
      %v3930 = vsel %vm2817, %v3870, %v3810
      %v3932 = vsel %vm2817, %v3872, %v3812
      %v3934 = vsel %vm2817, %v3874, %v3814
      %v3936 = vsel %vm2817, %v3876, %v3816
      %v3938 = vsel %vm2817, %v3878, %v3818
      %v3940 = vsel %vm2817, %v3880, %v3820
      %v3942 = vsel %vm2817, %v3882, %v3822
      %v3944 = vsel %vm2817, %v3884, %v3824
      %v3946 = vsel %vm2817, %v3886, %v3826
      %v3948 = vsel %vm2817, %v3888, %v3828
      %v3950 = vsel %vm2817, %v3890, %v3830
      %v3952 = vsel %vm2817, %v3892, %v3832
      %v3954 = vsel %vm2817, %v3894, %v3834
      %v3956 = vsel %vm2817, %v3896, %v3836
      %v3958 = vsel %vm2817, %v3898, %v3838
      %v3960 = vsel %vm2817, %v3900, %v3840
      %v3962 = vsel %vm2817, %v3902, %v3842
      %v3964 = vsel %vm2817, %v3904, %v3844
      %v3966 = vsel %vm2817, %v3906, %v3846
      %v3968 = vsel %vm2817, %v3908, %v3848
      %v3970 = vsel %vm2817, %v3910, %v3850
      %v3972 = vsel %vm2817, %v3912, %v3852
      %v3973 = vsel %vm2939, %v3916, 0
      %v3975 = vsel %vm2939, %v3918, 0
      %v3977 = vsel %vm2939, %v3920, 0
      %v3979 = vsel %vm2939, %v3922, 0
      %v3981 = vsel %vm2939, %v3924, 0
      %v3983 = vsel %vm2939, %v3926, 0
      %v3985 = vsel %vm2939, %v3928, 0
      %v3987 = vsel %vm2939, %v3930, 0
      %v3989 = vsel %vm2939, %v3932, 0
      %v3991 = vsel %vm2939, %v3934, 0
      %v3993 = vsel %vm2939, %v3936, 0
      %v3995 = vsel %vm2939, %v3938, 0
      %v3997 = vsel %vm2939, %v3940, 0
      %v3999 = vsel %vm2939, %v3942, 0
      %v4001 = vsel %vm2939, %v3944, 0
      %v4003 = vsel %vm2939, %v3946, 0
      %v4005 = vsel %vm2939, %v3948, 0
      %v4007 = vsel %vm2939, %v3950, 0
      %v4009 = vsel %vm2939, %v3952, 0
      %v4011 = vsel %vm2939, %v3954, 0
      %v4013 = vsel %vm2939, %v3956, 0
      %v4015 = vsel %vm2939, %v3958, 0
      %v4017 = vsel %vm2939, %v3960, 0
      %v4019 = vsel %vm2939, %v3962, 0
      %v4021 = vsel %vm2939, %v3964, 0
      %v4023 = vsel %vm2939, %v3966, 0
      %v4025 = vsel %vm2939, %v3968, 0
      %v4027 = vsel %vm2939, %v3970, 0
      %4029 = vmatpush.bf16.msra.mxu0 0
      %4030 = vmatpush.bf16.msra.mxu0 0
      %4031 = vmatpush.bf16.msra.mxu0 %v2932
      %4032 = vmatpush.bf16.msra.mxu0 %v2931
      %4033 = vmatpush.bf16.msra.mxu0 %v2930
      %4034 = vmatpush.bf16.msra.mxu0 %v2929
      %4035 = vmatpush.bf16.msra.mxu0 %v2928
      %4036 = vmatpush.bf16.msra.mxu0 %v2927
      %4037 = vmatmul.bf16.gmra.mxu0 %v3973
      %v4038 = vpop.f32.mrf.mxu0
      %v4039 = vadd.f32 0.0, %v4038
      %v4040 = vpop.f32.mrf.mxu0
      %v4041 = vadd.f32 0.0, %v4040
      %4042 = vmatmul.bf16.gmra.mxu0 %v3975
      %v4043 = vpop.f32.mrf.mxu0
      %v4044 = vadd.f32 0.0, %v4043
      %v4045 = vpop.f32.mrf.mxu0
      %v4046 = vadd.f32 0.0, %v4045
      %4047 = vmatmul.bf16.gmra.mxu0 %v3977
      %v4048 = vpop.f32.mrf.mxu0
      %v4049 = vadd.f32 0.0, %v4048
      %v4050 = vpop.f32.mrf.mxu0
      %v4051 = vadd.f32 0.0, %v4050
      %4052 = vmatmul.bf16.gmra.mxu0 %v3979
      %v4053 = vpop.f32.mrf.mxu0
      %v4054 = vadd.f32 0.0, %v4053
      %v4055 = vpop.f32.mrf.mxu0
      %v4056 = vadd.f32 0.0, %v4055
      %4057 = vmatmul.bf16.gmra.mxu0 %v3981
      %v4058 = vpop.f32.mrf.mxu0
      %v4059 = vadd.f32 0.0, %v4058
      %v4060 = vpop.f32.mrf.mxu0
      %v4061 = vadd.f32 0.0, %v4060
      %4062 = vmatmul.bf16.gmra.mxu0 %v3983
      %v4063 = vpop.f32.mrf.mxu0
      %v4064 = vadd.f32 0.0, %v4063
      %v4065 = vpop.f32.mrf.mxu0
      %v4066 = vadd.f32 0.0, %v4065
      %4067 = vmatmul.bf16.gmra.mxu0 %v3985
      %v4068 = vpop.f32.mrf.mxu0
      %v4069 = vadd.f32 0.0, %v4068
      %v4070 = vpop.f32.mrf.mxu0
      %v4071 = vadd.f32 0.0, %v4070
      %4072 = vmatmul.bf16.gmra.mxu0 %v3987
      %v4073 = vpop.f32.mrf.mxu0
      %v4074 = vadd.f32 0.0, %v4073
      %v4075 = vpop.f32.mrf.mxu0
      %v4076 = vadd.f32 0.0, %v4075
      %4077 = vmatmul.bf16.gmra.mxu0 %v3989
      %v4078 = vpop.f32.mrf.mxu0
      %v4079 = vadd.f32 0.0, %v4078
      %v4080 = vpop.f32.mrf.mxu0
      %v4081 = vadd.f32 0.0, %v4080
      %4082 = vmatmul.bf16.gmra.mxu0 %v3991
      %v4083 = vpop.f32.mrf.mxu0
      %v4084 = vadd.f32 0.0, %v4083
      %v4085 = vpop.f32.mrf.mxu0
      %v4086 = vadd.f32 0.0, %v4085
      %4087 = vmatmul.bf16.gmra.mxu0 %v3993
      %v4088 = vpop.f32.mrf.mxu0
      %v4089 = vadd.f32 0.0, %v4088
      %v4090 = vpop.f32.mrf.mxu0
      %v4091 = vadd.f32 0.0, %v4090
      %4092 = vmatmul.bf16.gmra.mxu0 %v3995
      %v4093 = vpop.f32.mrf.mxu0
      %v4094 = vadd.f32 0.0, %v4093
      %v4095 = vpop.f32.mrf.mxu0
      %v4096 = vadd.f32 0.0, %v4095
      %4097 = vmatmul.bf16.gmra.mxu0 %v3997
      %v4098 = vpop.f32.mrf.mxu0
      %v4099 = vadd.f32 0.0, %v4098
      %v4100 = vpop.f32.mrf.mxu0
      %v4101 = vadd.f32 0.0, %v4100
      %4102 = vmatmul.bf16.gmra.mxu0 %v3999
      %v4103 = vpop.f32.mrf.mxu0
      %v4104 = vadd.f32 0.0, %v4103
      %v4105 = vpop.f32.mrf.mxu0
      %v4106 = vadd.f32 0.0, %v4105
      %4107 = vmatmul.bf16.gmra.mxu0 %v4001
      %v4108 = vpop.f32.mrf.mxu0
      %v4109 = vadd.f32 0.0, %v4108
      %v4110 = vpop.f32.mrf.mxu0
      %v4111 = vadd.f32 0.0, %v4110
      %4112 = vmatmul.bf16.gmra.mxu0 %v4003
      %v4113 = vpop.f32.mrf.mxu0
      %v4114 = vadd.f32 0.0, %v4113
      %v4115 = vpop.f32.mrf.mxu0
      %v4116 = vadd.f32 0.0, %v4115
      %4117 = vmatmul.bf16.gmra.mxu0 %v4005
      %v4118 = vpop.f32.mrf.mxu0
      %v4119 = vadd.f32 0.0, %v4118
      %v4120 = vpop.f32.mrf.mxu0
      %v4121 = vadd.f32 0.0, %v4120
      %4122 = vmatmul.bf16.gmra.mxu0 %v4007
      %v4123 = vpop.f32.mrf.mxu0
      %v4124 = vadd.f32 0.0, %v4123
      %v4125 = vpop.f32.mrf.mxu0
      %v4126 = vadd.f32 0.0, %v4125
      %4127 = vmatmul.bf16.gmra.mxu0 %v4009
      %v4128 = vpop.f32.mrf.mxu0
      %v4129 = vadd.f32 0.0, %v4128
      %v4130 = vpop.f32.mrf.mxu0
      %v4131 = vadd.f32 0.0, %v4130
      %4132 = vmatmul.bf16.gmra.mxu0 %v4011
      %v4133 = vpop.f32.mrf.mxu0
      %v4134 = vadd.f32 0.0, %v4133
      %v4135 = vpop.f32.mrf.mxu0
      %v4136 = vadd.f32 0.0, %v4135
      %4137 = vmatmul.bf16.gmra.mxu0 %v4013
      %v4138 = vpop.f32.mrf.mxu0
      %v4139 = vadd.f32 0.0, %v4138
      %v4140 = vpop.f32.mrf.mxu0
      %v4141 = vadd.f32 0.0, %v4140
      %4142 = vmatmul.bf16.gmra.mxu0 %v4015
      %v4143 = vpop.f32.mrf.mxu0
      %v4144 = vadd.f32 0.0, %v4143
      %v4145 = vpop.f32.mrf.mxu0
      %v4146 = vadd.f32 0.0, %v4145
      %4147 = vmatmul.bf16.gmra.mxu0 %v4017
      %v4148 = vpop.f32.mrf.mxu0
      %v4149 = vadd.f32 0.0, %v4148
      %v4150 = vpop.f32.mrf.mxu0
      %v4151 = vadd.f32 0.0, %v4150
      %4152 = vmatmul.bf16.gmra.mxu0 %v4019
      %v4153 = vpop.f32.mrf.mxu0
      %v4154 = vadd.f32 0.0, %v4153
      %v4155 = vpop.f32.mrf.mxu0
      %v4156 = vadd.f32 0.0, %v4155
      %4157 = vmatmul.bf16.gmra.mxu0 %v4021
      %v4158 = vpop.f32.mrf.mxu0
      %v4159 = vadd.f32 0.0, %v4158
      %v4160 = vpop.f32.mrf.mxu0
      %v4161 = vadd.f32 0.0, %v4160
      %4162 = vmatmul.bf16.gmra.mxu0 %v4023
      %v4163 = vpop.f32.mrf.mxu0
      %v4164 = vadd.f32 0.0, %v4163
      %v4165 = vpop.f32.mrf.mxu0
      %v4166 = vadd.f32 0.0, %v4165
      %4167 = vmatmul.bf16.gmra.mxu0 %v4025
      %v4168 = vpop.f32.mrf.mxu0
      %v4169 = vadd.f32 0.0, %v4168
      %v4170 = vpop.f32.mrf.mxu0
      %v4171 = vadd.f32 0.0, %v4170
      %4172 = vmatmul.bf16.gmra.mxu0 %v4027
      %v4173 = vpop.f32.mrf.mxu0
      %v4174 = vadd.f32 0.0, %v4173
      %v4175 = vpop.f32.mrf.mxu0
      %v4176 = vadd.f32 0.0, %v4175
      %4177 = vdwg.mxu0
      %v4178 = vsel %vm2939, %v3914, 0
      %4180 = vmatpush.bf16.msra.mxu0 0
      %4181 = vmatpush.bf16.msra.mxu0 0
      %4182 = vmatpush.bf16.msra.mxu0 %v3174
      %4183 = vmatpush.bf16.msra.mxu0 %v3173
      %4184 = vmatpush.bf16.msra.mxu0 %v3172
      %4185 = vmatpush.bf16.msra.mxu0 %v3171
      %4186 = vmatpush.bf16.msra.mxu0 %v3170
      %4187 = vmatpush.bf16.msra.mxu0 %v3169
      %4188 = vmatmul.bf16.gmra.mxu0 %v4178
      %v4189 = vpop.f32.mrf.mxu0
      %v4190 = vadd.f32 %v4039, %v4189
      %v4191 = vpop.f32.mrf.mxu0
      %v4192 = vadd.f32 %v4041, %v4191
      %4193 = vmatmul.bf16.gmra.mxu0 %v3973
      %v4194 = vpop.f32.mrf.mxu0
      %v4195 = vadd.f32 %v4044, %v4194
      %v4196 = vpop.f32.mrf.mxu0
      %v4197 = vadd.f32 %v4046, %v4196
      %4198 = vmatmul.bf16.gmra.mxu0 %v3975
      %v4199 = vpop.f32.mrf.mxu0
      %v4200 = vadd.f32 %v4049, %v4199
      %v4201 = vpop.f32.mrf.mxu0
      %v4202 = vadd.f32 %v4051, %v4201
      %4203 = vmatmul.bf16.gmra.mxu0 %v3977
      %v4204 = vpop.f32.mrf.mxu0
      %v4205 = vadd.f32 %v4054, %v4204
      %v4206 = vpop.f32.mrf.mxu0
      %v4207 = vadd.f32 %v4056, %v4206
      %4208 = vmatmul.bf16.gmra.mxu0 %v3979
      %v4209 = vpop.f32.mrf.mxu0
      %v4210 = vadd.f32 %v4059, %v4209
      %v4211 = vpop.f32.mrf.mxu0
      %v4212 = vadd.f32 %v4061, %v4211
      %4213 = vmatmul.bf16.gmra.mxu0 %v3981
      %v4214 = vpop.f32.mrf.mxu0
      %v4215 = vadd.f32 %v4064, %v4214
      %v4216 = vpop.f32.mrf.mxu0
      %v4217 = vadd.f32 %v4066, %v4216
      %4218 = vmatmul.bf16.gmra.mxu0 %v3983
      %v4219 = vpop.f32.mrf.mxu0
      %v4220 = vadd.f32 %v4069, %v4219
      %v4221 = vpop.f32.mrf.mxu0
      %v4222 = vadd.f32 %v4071, %v4221
      %4223 = vmatmul.bf16.gmra.mxu0 %v3985
      %v4224 = vpop.f32.mrf.mxu0
      %v4225 = vadd.f32 %v4074, %v4224
      %v4226 = vpop.f32.mrf.mxu0
      %v4227 = vadd.f32 %v4076, %v4226
      %4228 = vmatmul.bf16.gmra.mxu0 %v3987
      %v4229 = vpop.f32.mrf.mxu0
      %v4230 = vadd.f32 %v4079, %v4229
      %v4231 = vpop.f32.mrf.mxu0
      %v4232 = vadd.f32 %v4081, %v4231
      %4233 = vmatmul.bf16.gmra.mxu0 %v3989
      %v4234 = vpop.f32.mrf.mxu0
      %v4235 = vadd.f32 %v4084, %v4234
      %v4236 = vpop.f32.mrf.mxu0
      %v4237 = vadd.f32 %v4086, %v4236
      %4238 = vmatmul.bf16.gmra.mxu0 %v3991
      %v4239 = vpop.f32.mrf.mxu0
      %v4240 = vadd.f32 %v4089, %v4239
      %v4241 = vpop.f32.mrf.mxu0
      %v4242 = vadd.f32 %v4091, %v4241
      %4243 = vmatmul.bf16.gmra.mxu0 %v3993
      %v4244 = vpop.f32.mrf.mxu0
      %v4245 = vadd.f32 %v4094, %v4244
      %v4246 = vpop.f32.mrf.mxu0
      %v4247 = vadd.f32 %v4096, %v4246
      %4248 = vmatmul.bf16.gmra.mxu0 %v3995
      %v4249 = vpop.f32.mrf.mxu0
      %v4250 = vadd.f32 %v4099, %v4249
      %v4251 = vpop.f32.mrf.mxu0
      %v4252 = vadd.f32 %v4101, %v4251
      %4253 = vmatmul.bf16.gmra.mxu0 %v3997
      %v4254 = vpop.f32.mrf.mxu0
      %v4255 = vadd.f32 %v4104, %v4254
      %v4256 = vpop.f32.mrf.mxu0
      %v4257 = vadd.f32 %v4106, %v4256
      %4258 = vmatmul.bf16.gmra.mxu0 %v3999
      %v4259 = vpop.f32.mrf.mxu0
      %v4260 = vadd.f32 %v4109, %v4259
      %v4261 = vpop.f32.mrf.mxu0
      %v4262 = vadd.f32 %v4111, %v4261
      %4263 = vmatmul.bf16.gmra.mxu0 %v4001
      %v4264 = vpop.f32.mrf.mxu0
      %v4265 = vadd.f32 %v4114, %v4264
      %v4266 = vpop.f32.mrf.mxu0
      %v4267 = vadd.f32 %v4116, %v4266
      %4268 = vmatmul.bf16.gmra.mxu0 %v4003
      %v4269 = vpop.f32.mrf.mxu0
      %v4270 = vadd.f32 %v4119, %v4269
      %v4271 = vpop.f32.mrf.mxu0
      %v4272 = vadd.f32 %v4121, %v4271
      %4273 = vmatmul.bf16.gmra.mxu0 %v4005
      %v4274 = vpop.f32.mrf.mxu0
      %v4275 = vadd.f32 %v4124, %v4274
      %v4276 = vpop.f32.mrf.mxu0
      %v4277 = vadd.f32 %v4126, %v4276
      %4278 = vmatmul.bf16.gmra.mxu0 %v4007
      %v4279 = vpop.f32.mrf.mxu0
      %v4280 = vadd.f32 %v4129, %v4279
      %v4281 = vpop.f32.mrf.mxu0
      %v4282 = vadd.f32 %v4131, %v4281
      %4283 = vmatmul.bf16.gmra.mxu0 %v4009
      %v4284 = vpop.f32.mrf.mxu0
      %v4285 = vadd.f32 %v4134, %v4284
      %v4286 = vpop.f32.mrf.mxu0
      %v4287 = vadd.f32 %v4136, %v4286
      %4288 = vmatmul.bf16.gmra.mxu0 %v4011
      %v4289 = vpop.f32.mrf.mxu0
      %v4290 = vadd.f32 %v4139, %v4289
      %v4291 = vpop.f32.mrf.mxu0
      %v4292 = vadd.f32 %v4141, %v4291
      %4293 = vmatmul.bf16.gmra.mxu0 %v4013
      %v4294 = vpop.f32.mrf.mxu0
      %v4295 = vadd.f32 %v4144, %v4294
      %v4296 = vpop.f32.mrf.mxu0
      %v4297 = vadd.f32 %v4146, %v4296
      %4298 = vmatmul.bf16.gmra.mxu0 %v4015
      %v4299 = vpop.f32.mrf.mxu0
      %v4300 = vadd.f32 %v4149, %v4299
      %v4301 = vpop.f32.mrf.mxu0
      %v4302 = vadd.f32 %v4151, %v4301
      %4303 = vmatmul.bf16.gmra.mxu0 %v4017
      %v4304 = vpop.f32.mrf.mxu0
      %v4305 = vadd.f32 %v4154, %v4304
      %v4306 = vpop.f32.mrf.mxu0
      %v4307 = vadd.f32 %v4156, %v4306
      %4308 = vmatmul.bf16.gmra.mxu0 %v4019
      %v4309 = vpop.f32.mrf.mxu0
      %v4310 = vadd.f32 %v4159, %v4309
      %v4311 = vpop.f32.mrf.mxu0
      %v4312 = vadd.f32 %v4161, %v4311
      %4313 = vmatmul.bf16.gmra.mxu0 %v4021
      %v4314 = vpop.f32.mrf.mxu0
      %v4315 = vadd.f32 %v4164, %v4314
      %v4316 = vpop.f32.mrf.mxu0
      %v4317 = vadd.f32 %v4166, %v4316
      %4318 = vmatmul.bf16.gmra.mxu0 %v4023
      %v4319 = vpop.f32.mrf.mxu0
      %v4320 = vadd.f32 %v4169, %v4319
      %v4321 = vpop.f32.mrf.mxu0
      %v4322 = vadd.f32 %v4171, %v4321
      %4323 = vmatmul.bf16.gmra.mxu0 %v4025
      %v4324 = vpop.f32.mrf.mxu0
      %v4325 = vadd.f32 %v4174, %v4324
      %v4326 = vpop.f32.mrf.mxu0
      %v4327 = vadd.f32 %v4176, %v4326
      %4328 = vdwg.mxu0
      %v4329 = vsel %vm2939, %v3972, 0
      %4331 = vmatpush.bf16.msra.mxu0 0
      %4332 = vmatpush.bf16.msra.mxu0 0
      %4333 = vmatpush.bf16.msra.mxu0 %v3374
      %4334 = vmatpush.bf16.msra.mxu0 %v3373
      %4335 = vmatpush.bf16.msra.mxu0 %v3372
      %4336 = vmatpush.bf16.msra.mxu0 %v3371
      %4337 = vmatpush.bf16.msra.mxu0 %v3370
      %4338 = vmatpush.bf16.msra.mxu0 %v3369
      %4339 = vmatmul.bf16.gmra.mxu0 %v3975
      %v4340 = vpop.f32.mrf.mxu0
      %v4341 = vadd.f32 0.0, %v4340
      %v4342 = vpop.f32.mrf.mxu0
      %v4343 = vadd.f32 0.0, %v4342
      %4344 = vmatmul.bf16.gmra.mxu0 %v3977
      %v4345 = vpop.f32.mrf.mxu0
      %v4346 = vadd.f32 0.0, %v4345
      %v4347 = vpop.f32.mrf.mxu0
      %v4348 = vadd.f32 0.0, %v4347
      %4349 = vmatmul.bf16.gmra.mxu0 %v3979
      %v4350 = vpop.f32.mrf.mxu0
      %v4351 = vadd.f32 0.0, %v4350
      %v4352 = vpop.f32.mrf.mxu0
      %v4353 = vadd.f32 0.0, %v4352
      %4354 = vmatmul.bf16.gmra.mxu0 %v3981
      %v4355 = vpop.f32.mrf.mxu0
      %v4356 = vadd.f32 0.0, %v4355
      %v4357 = vpop.f32.mrf.mxu0
      %v4358 = vadd.f32 0.0, %v4357
      %4359 = vmatmul.bf16.gmra.mxu0 %v3983
      %v4360 = vpop.f32.mrf.mxu0
      %v4361 = vadd.f32 0.0, %v4360
      %v4362 = vpop.f32.mrf.mxu0
      %v4363 = vadd.f32 0.0, %v4362
      %4364 = vmatmul.bf16.gmra.mxu0 %v3985
      %v4365 = vpop.f32.mrf.mxu0
      %v4366 = vadd.f32 0.0, %v4365
      %v4367 = vpop.f32.mrf.mxu0
      %v4368 = vadd.f32 0.0, %v4367
      %4369 = vmatmul.bf16.gmra.mxu0 %v3987
      %v4370 = vpop.f32.mrf.mxu0
      %v4371 = vadd.f32 0.0, %v4370
      %v4372 = vpop.f32.mrf.mxu0
      %v4373 = vadd.f32 0.0, %v4372
      %4374 = vmatmul.bf16.gmra.mxu0 %v3989
      %v4375 = vpop.f32.mrf.mxu0
      %v4376 = vadd.f32 0.0, %v4375
      %v4377 = vpop.f32.mrf.mxu0
      %v4378 = vadd.f32 0.0, %v4377
      %4379 = vmatmul.bf16.gmra.mxu0 %v3991
      %v4380 = vpop.f32.mrf.mxu0
      %v4381 = vadd.f32 0.0, %v4380
      %v4382 = vpop.f32.mrf.mxu0
      %v4383 = vadd.f32 0.0, %v4382
      %4384 = vmatmul.bf16.gmra.mxu0 %v3993
      %v4385 = vpop.f32.mrf.mxu0
      %v4386 = vadd.f32 0.0, %v4385
      %v4387 = vpop.f32.mrf.mxu0
      %v4388 = vadd.f32 0.0, %v4387
      %4389 = vmatmul.bf16.gmra.mxu0 %v3995
      %v4390 = vpop.f32.mrf.mxu0
      %v4391 = vadd.f32 0.0, %v4390
      %v4392 = vpop.f32.mrf.mxu0
      %v4393 = vadd.f32 0.0, %v4392
      %4394 = vmatmul.bf16.gmra.mxu0 %v3997
      %v4395 = vpop.f32.mrf.mxu0
      %v4396 = vadd.f32 0.0, %v4395
      %v4397 = vpop.f32.mrf.mxu0
      %v4398 = vadd.f32 0.0, %v4397
      %4399 = vmatmul.bf16.gmra.mxu0 %v3999
      %v4400 = vpop.f32.mrf.mxu0
      %v4401 = vadd.f32 0.0, %v4400
      %v4402 = vpop.f32.mrf.mxu0
      %v4403 = vadd.f32 0.0, %v4402
      %4404 = vmatmul.bf16.gmra.mxu0 %v4001
      %v4405 = vpop.f32.mrf.mxu0
      %v4406 = vadd.f32 0.0, %v4405
      %v4407 = vpop.f32.mrf.mxu0
      %v4408 = vadd.f32 0.0, %v4407
      %4409 = vmatmul.bf16.gmra.mxu0 %v4003
      %v4410 = vpop.f32.mrf.mxu0
      %v4411 = vadd.f32 0.0, %v4410
      %v4412 = vpop.f32.mrf.mxu0
      %v4413 = vadd.f32 0.0, %v4412
      %4414 = vmatmul.bf16.gmra.mxu0 %v4005
      %v4415 = vpop.f32.mrf.mxu0
      %v4416 = vadd.f32 0.0, %v4415
      %v4417 = vpop.f32.mrf.mxu0
      %v4418 = vadd.f32 0.0, %v4417
      %4419 = vmatmul.bf16.gmra.mxu0 %v4007
      %v4420 = vpop.f32.mrf.mxu0
      %v4421 = vadd.f32 0.0, %v4420
      %v4422 = vpop.f32.mrf.mxu0
      %v4423 = vadd.f32 0.0, %v4422
      %4424 = vmatmul.bf16.gmra.mxu0 %v4009
      %v4425 = vpop.f32.mrf.mxu0
      %v4426 = vadd.f32 0.0, %v4425
      %v4427 = vpop.f32.mrf.mxu0
      %v4428 = vadd.f32 0.0, %v4427
      %4429 = vmatmul.bf16.gmra.mxu0 %v4011
      %v4430 = vpop.f32.mrf.mxu0
      %v4431 = vadd.f32 0.0, %v4430
      %v4432 = vpop.f32.mrf.mxu0
      %v4433 = vadd.f32 0.0, %v4432
      %4434 = vmatmul.bf16.gmra.mxu0 %v4013
      %v4435 = vpop.f32.mrf.mxu0
      %v4436 = vadd.f32 0.0, %v4435
      %v4437 = vpop.f32.mrf.mxu0
      %v4438 = vadd.f32 0.0, %v4437
      %4439 = vmatmul.bf16.gmra.mxu0 %v4015
      %v4440 = vpop.f32.mrf.mxu0
      %v4441 = vadd.f32 0.0, %v4440
      %v4442 = vpop.f32.mrf.mxu0
      %v4443 = vadd.f32 0.0, %v4442
      %4444 = vmatmul.bf16.gmra.mxu0 %v4017
      %v4445 = vpop.f32.mrf.mxu0
      %v4446 = vadd.f32 0.0, %v4445
      %v4447 = vpop.f32.mrf.mxu0
      %v4448 = vadd.f32 0.0, %v4447
      %4449 = vmatmul.bf16.gmra.mxu0 %v4019
      %v4450 = vpop.f32.mrf.mxu0
      %v4451 = vadd.f32 0.0, %v4450
      %v4452 = vpop.f32.mrf.mxu0
      %v4453 = vadd.f32 0.0, %v4452
      %4454 = vmatmul.bf16.gmra.mxu0 %v4021
      %v4455 = vpop.f32.mrf.mxu0
      %v4456 = vadd.f32 0.0, %v4455
      %v4457 = vpop.f32.mrf.mxu0
      %v4458 = vadd.f32 0.0, %v4457
      %4459 = vmatmul.bf16.gmra.mxu0 %v4023
      %v4460 = vpop.f32.mrf.mxu0
      %v4461 = vadd.f32 0.0, %v4460
      %v4462 = vpop.f32.mrf.mxu0
      %v4463 = vadd.f32 0.0, %v4462
      %4464 = vmatmul.bf16.gmra.mxu0 %v4025
      %v4465 = vpop.f32.mrf.mxu0
      %v4466 = vadd.f32 0.0, %v4465
      %v4467 = vpop.f32.mrf.mxu0
      %v4468 = vadd.f32 0.0, %v4467
      %4469 = vmatmul.bf16.gmra.mxu0 %v4027
      %v4470 = vpop.f32.mrf.mxu0
      %v4471 = vadd.f32 0.0, %v4470
      %v4472 = vpop.f32.mrf.mxu0
      %v4473 = vadd.f32 0.0, %v4472
      %4474 = vmatmul.bf16.gmra.mxu0 %v4329
      %v4475 = vpop.f32.mrf.mxu0
      %v4476 = vadd.f32 0.0, %v4475
      %v4477 = vpop.f32.mrf.mxu0
      %v4478 = vadd.f32 0.0, %v4477
      %4479 = vdwg.mxu0
      %v4480 = vadd.f32 %v4190, %v4341
      %v4481 = vadd.f32 %v4192, %v4343
      %v4482 = vadd.f32 %v4195, %v4346
      %v4483 = vadd.f32 %v4197, %v4348
      %v4484 = vadd.f32 %v4200, %v4351
      %v4485 = vadd.f32 %v4202, %v4353
      %v4486 = vadd.f32 %v4205, %v4356
      %v4487 = vadd.f32 %v4207, %v4358
      %v4488 = vadd.f32 %v4210, %v4361
      %v4489 = vadd.f32 %v4212, %v4363
      %v4490 = vadd.f32 %v4215, %v4366
      %v4491 = vadd.f32 %v4217, %v4368
      %v4492 = vadd.f32 %v4220, %v4371
      %v4493 = vadd.f32 %v4222, %v4373
      %v4494 = vadd.f32 %v4225, %v4376
      %v4495 = vadd.f32 %v4227, %v4378
      %v4496 = vadd.f32 %v4230, %v4381
      %v4497 = vadd.f32 %v4232, %v4383
      %v4498 = vadd.f32 %v4235, %v4386
      %v4499 = vadd.f32 %v4237, %v4388
      %v4500 = vadd.f32 %v4240, %v4391
      %v4501 = vadd.f32 %v4242, %v4393
      %v4502 = vadd.f32 %v4245, %v4396
      %v4503 = vadd.f32 %v4247, %v4398
      %v4504 = vadd.f32 %v4250, %v4401
      %v4505 = vadd.f32 %v4252, %v4403
      %v4506 = vadd.f32 %v4255, %v4406
      %v4507 = vadd.f32 %v4257, %v4408
      %v4508 = vadd.f32 %v4260, %v4411
      %v4509 = vadd.f32 %v4262, %v4413
      %v4510 = vadd.f32 %v4265, %v4416
      %v4511 = vadd.f32 %v4267, %v4418
      %v4512 = vadd.f32 %v4270, %v4421
      %v4513 = vadd.f32 %v4272, %v4423
      %v4514 = vadd.f32 %v4275, %v4426
      %v4515 = vadd.f32 %v4277, %v4428
      %v4516 = vadd.f32 %v4280, %v4431
      %v4517 = vadd.f32 %v4282, %v4433
      %v4518 = vadd.f32 %v4285, %v4436
      %v4519 = vadd.f32 %v4287, %v4438
      %v4520 = vadd.f32 %v4290, %v4441
      %v4521 = vadd.f32 %v4292, %v4443
      %v4522 = vadd.f32 %v4295, %v4446
      %v4523 = vadd.f32 %v4297, %v4448
      %v4524 = vadd.f32 %v4300, %v4451
      %v4525 = vadd.f32 %v4302, %v4453
      %v4526 = vadd.f32 %v4305, %v4456
      %v4527 = vadd.f32 %v4307, %v4458
      %v4528 = vadd.f32 %v4310, %v4461
      %v4529 = vadd.f32 %v4312, %v4463
      %v4530 = vadd.f32 %v4315, %v4466
      %v4531 = vadd.f32 %v4317, %v4468
      %v4532 = vadd.f32 %v4320, %v4471
      %v4533 = vadd.f32 %v4322, %v4473
      %v4534 = vadd.f32 %v4325, %v4476
      %v4535 = vadd.f32 %v4327, %v4478
      %v4536 = vadd.f32 %v4480, %v3589
      %v4537 = vadd.f32 %v4481, %v3589
      %v4538 = vadd.f32 %v4482, %v3589
      %v4539 = vadd.f32 %v4483, %v3589
      %v4540 = vadd.f32 %v4484, %v3589
      %v4541 = vadd.f32 %v4485, %v3589
      %v4542 = vadd.f32 %v4486, %v3589
      %v4543 = vadd.f32 %v4487, %v3589
      %v4544 = vadd.f32 %v4488, %v3589
      %v4545 = vadd.f32 %v4489, %v3589
      %v4546 = vadd.f32 %v4490, %v3589
      %v4547 = vadd.f32 %v4491, %v3589
      %v4548 = vadd.f32 %v4492, %v3589
      %v4549 = vadd.f32 %v4493, %v3589
      %v4550 = vadd.f32 %v4494, %v3589
      %v4551 = vadd.f32 %v4495, %v3589
      %v4552 = vadd.f32 %v4496, %v3589
      %v4553 = vadd.f32 %v4497, %v3589
      %v4554 = vadd.f32 %v4498, %v3589
      %v4555 = vadd.f32 %v4499, %v3589
      %v4556 = vadd.f32 %v4500, %v3589
      %v4557 = vadd.f32 %v4501, %v3589
      %v4558 = vadd.f32 %v4502, %v3589
      %v4559 = vadd.f32 %v4503, %v3589
      %v4560 = vadd.f32 %v4504, %v3589
      %v4561 = vadd.f32 %v4505, %v3589
      %v4562 = vadd.f32 %v4506, %v3589
      %v4563 = vadd.f32 %v4507, %v3589
      %v4564 = vadd.f32 %v4508, %v3589
      %v4565 = vadd.f32 %v4509, %v3589
      %v4566 = vadd.f32 %v4510, %v3589
      %v4567 = vadd.f32 %v4511, %v3589
      %v4568 = vadd.f32 %v4512, %v3589
      %v4569 = vadd.f32 %v4513, %v3589
      %v4570 = vadd.f32 %v4514, %v3589
      %v4571 = vadd.f32 %v4515, %v3589
      %v4572 = vadd.f32 %v4516, %v3589
      %v4573 = vadd.f32 %v4517, %v3589
      %v4574 = vadd.f32 %v4518, %v3589
      %v4575 = vadd.f32 %v4519, %v3589
      %v4576 = vadd.f32 %v4520, %v3589
      %v4577 = vadd.f32 %v4521, %v3589
      %v4578 = vadd.f32 %v4522, %v3589
      %v4579 = vadd.f32 %v4523, %v3589
      %v4580 = vadd.f32 %v4524, %v3589
      %v4581 = vadd.f32 %v4525, %v3589
      %v4582 = vadd.f32 %v4526, %v3589
      %v4583 = vadd.f32 %v4527, %v3589
      %v4584 = vadd.f32 %v4528, %v3589
      %v4585 = vadd.f32 %v4529, %v3589
      %v4586 = vadd.f32 %v4530, %v3589
      %v4587 = vadd.f32 %v4531, %v3589
      %v4588 = vadd.f32 %v4532, %v3589
      %v4589 = vadd.f32 %v4533, %v3589
      %v4590 = vadd.f32 %v4534, %v3589
      %v4591 = vadd.f32 %v4535, %v3589
      %v4592 = vmax.f32 %v4536, 0.0
      %v4593 = vmax.f32 %v4537, 0.0
      %v4594 = vmax.f32 %v4538, 0.0
      %v4595 = vmax.f32 %v4539, 0.0
      %v4596 = vmax.f32 %v4540, 0.0
      %v4597 = vmax.f32 %v4541, 0.0
      %v4598 = vmax.f32 %v4542, 0.0
      %v4599 = vmax.f32 %v4543, 0.0
      %v4600 = vmax.f32 %v4544, 0.0
      %v4601 = vmax.f32 %v4545, 0.0
      %v4602 = vmax.f32 %v4546, 0.0
      %v4603 = vmax.f32 %v4547, 0.0
      %v4604 = vmax.f32 %v4548, 0.0
      %v4605 = vmax.f32 %v4549, 0.0
      %v4606 = vmax.f32 %v4550, 0.0
      %v4607 = vmax.f32 %v4551, 0.0
      %v4608 = vmax.f32 %v4552, 0.0
      %v4609 = vmax.f32 %v4553, 0.0
      %v4610 = vmax.f32 %v4554, 0.0
      %v4611 = vmax.f32 %v4555, 0.0
      %v4612 = vmax.f32 %v4556, 0.0
      %v4613 = vmax.f32 %v4557, 0.0
      %v4614 = vmax.f32 %v4558, 0.0
      %v4615 = vmax.f32 %v4559, 0.0
      %v4616 = vmax.f32 %v4560, 0.0
      %v4617 = vmax.f32 %v4561, 0.0
      %v4618 = vmax.f32 %v4562, 0.0
      %v4619 = vmax.f32 %v4563, 0.0
      %v4620 = vmax.f32 %v4564, 0.0
      %v4621 = vmax.f32 %v4565, 0.0
      %v4622 = vmax.f32 %v4566, 0.0
      %v4623 = vmax.f32 %v4567, 0.0
      %v4624 = vmax.f32 %v4568, 0.0
      %v4625 = vmax.f32 %v4569, 0.0
      %v4626 = vmax.f32 %v4570, 0.0
      %v4627 = vmax.f32 %v4571, 0.0
      %v4628 = vmax.f32 %v4572, 0.0
      %v4629 = vmax.f32 %v4573, 0.0
      %v4630 = vmax.f32 %v4574, 0.0
      %v4631 = vmax.f32 %v4575, 0.0
      %v4632 = vmax.f32 %v4576, 0.0
      %v4633 = vmax.f32 %v4577, 0.0
      %v4634 = vmax.f32 %v4578, 0.0
      %v4635 = vmax.f32 %v4579, 0.0
      %v4636 = vmax.f32 %v4580, 0.0
      %v4637 = vmax.f32 %v4581, 0.0
      %v4638 = vmax.f32 %v4582, 0.0
      %v4639 = vmax.f32 %v4583, 0.0
      %v4640 = vmax.f32 %v4584, 0.0
      %v4641 = vmax.f32 %v4585, 0.0
      %v4642 = vmax.f32 %v4586, 0.0
      %v4643 = vmax.f32 %v4587, 0.0
      %v4644 = vmax.f32 %v4588, 0.0
      %v4645 = vmax.f32 %v4589, 0.0
      %v4646 = vmax.f32 %v4590, 0.0
      %v4647 = vmax.f32 %v4591, 0.0
      %v4648 = vmax.f32 %v3647, %v4592
      %v4649 = vmax.f32 %v3648, %v4593
      %v4650 = vmax.f32 %v3649, %v4594
      %v4651 = vmax.f32 %v3650, %v4595
      %v4652 = vmax.f32 %v3651, %v4596
      %v4653 = vmax.f32 %v3652, %v4597
      %v4654 = vmax.f32 %v3653, %v4598
      %v4655 = vmax.f32 %v3654, %v4599
      %v4656 = vmax.f32 %v3655, %v4600
      %v4657 = vmax.f32 %v3656, %v4601
      %v4658 = vmax.f32 %v3657, %v4602
      %v4659 = vmax.f32 %v3658, %v4603
      %v4660 = vmax.f32 %v3659, %v4604
      %v4661 = vmax.f32 %v3660, %v4605
      %v4662 = vmax.f32 %v3661, %v4606
      %v4663 = vmax.f32 %v3662, %v4607
      %v4664 = vmax.f32 %v3663, %v4608
      %v4665 = vmax.f32 %v3664, %v4609
      %v4666 = vmax.f32 %v3665, %v4610
      %v4667 = vmax.f32 %v3666, %v4611
      %v4668 = vmax.f32 %v3667, %v4612
      %v4669 = vmax.f32 %v3668, %v4613
      %v4670 = vmax.f32 %v3669, %v4614
      %v4671 = vmax.f32 %v3670, %v4615
      %v4672 = vmax.f32 %v3671, %v4616
      %v4673 = vmax.f32 %v3672, %v4617
      %v4674 = vmax.f32 %v3673, %v4618
      %v4675 = vmax.f32 %v3674, %v4619
      %v4676 = vmax.f32 %v3675, %v4620
      %v4677 = vmax.f32 %v3676, %v4621
      %v4678 = vmax.f32 %v3677, %v4622
      %v4679 = vmax.f32 %v3678, %v4623
      %v4680 = vmax.f32 %v3679, %v4624
      %v4681 = vmax.f32 %v3680, %v4625
      %v4682 = vmax.f32 %v3681, %v4626
      %v4683 = vmax.f32 %v3682, %v4627
      %v4684 = vmax.f32 %v3683, %v4628
      %v4685 = vmax.f32 %v3684, %v4629
      %v4686 = vmax.f32 %v3685, %v4630
      %v4687 = vmax.f32 %v3686, %v4631
      %v4688 = vmax.f32 %v3687, %v4632
      %v4689 = vmax.f32 %v3688, %v4633
      %v4690 = vmax.f32 %v3689, %v4634
      %v4691 = vmax.f32 %v3690, %v4635
      %v4692 = vmax.f32 %v3691, %v4636
      %v4693 = vmax.f32 %v3692, %v4637
      %v4694 = vmax.f32 %v3693, %v4638
      %v4695 = vmax.f32 %v3694, %v4639
      %v4696 = vmax.f32 %v3695, %v4640
      %v4697 = vmax.f32 %v3696, %v4641
      %v4698 = vmax.f32 %v3697, %v4642
      %v4699 = vmax.f32 %v3698, %v4643
      %v4700 = vmax.f32 %v3699, %v4644
      %v4701 = vmax.f32 %v3700, %v4645
      %v4702 = vmax.f32 %v3701, %v4646
      %v4703 = vmax.f32 %v3702, %v4647
      %v4704 = vsel %vm2756, %v4648, -inf
      %v4705 = vsel %vm2756, %v4650, -inf
      %v4706 = vmax.f32 %v4704, %v4705
      %v4707 = vsel %vm2756, %v4649, -inf
      %v4708 = vsel %vm2756, %v4651, -inf
      %v4709 = vmax.f32 %v4707, %v4708
      %v4710 = vsel %vm2756, %v4652, -inf
      %v4711 = vsel %vm2756, %v4654, -inf
      %v4712 = vmax.f32 %v4710, %v4711
      %v4713 = vsel %vm2756, %v4653, -inf
      %v4714 = vsel %vm2756, %v4655, -inf
      %v4715 = vmax.f32 %v4713, %v4714
      %v4716 = vsel %vm2756, %v4656, -inf
      %v4717 = vsel %vm2756, %v4658, -inf
      %v4718 = vmax.f32 %v4716, %v4717
      %v4719 = vsel %vm2756, %v4657, -inf
      %v4720 = vsel %vm2756, %v4659, -inf
      %v4721 = vmax.f32 %v4719, %v4720
      %v4722 = vsel %vm2756, %v4660, -inf
      %v4723 = vsel %vm2756, %v4662, -inf
      %v4724 = vmax.f32 %v4722, %v4723
      %v4725 = vsel %vm2756, %v4661, -inf
      %v4726 = vsel %vm2756, %v4663, -inf
      %v4727 = vmax.f32 %v4725, %v4726
      %v4728 = vsel %vm2756, %v4664, -inf
      %v4729 = vsel %vm2756, %v4666, -inf
      %v4730 = vmax.f32 %v4728, %v4729
      %v4731 = vsel %vm2756, %v4665, -inf
      %v4732 = vsel %vm2756, %v4667, -inf
      %v4733 = vmax.f32 %v4731, %v4732
      %v4734 = vsel %vm2756, %v4668, -inf
      %v4735 = vsel %vm2756, %v4670, -inf
      %v4736 = vmax.f32 %v4734, %v4735
      %v4737 = vsel %vm2756, %v4669, -inf
      %v4738 = vsel %vm2756, %v4671, -inf
      %v4739 = vmax.f32 %v4737, %v4738
      %v4740 = vsel %vm2756, %v4672, -inf
      %v4741 = vsel %vm2756, %v4674, -inf
      %v4742 = vmax.f32 %v4740, %v4741
      %v4743 = vsel %vm2756, %v4673, -inf
      %v4744 = vsel %vm2756, %v4675, -inf
      %v4745 = vmax.f32 %v4743, %v4744
      %v4746 = vsel %vm2756, %v4676, -inf
      %v4747 = vsel %vm2756, %v4678, -inf
      %v4748 = vmax.f32 %v4746, %v4747
      %v4749 = vsel %vm2756, %v4677, -inf
      %v4750 = vsel %vm2756, %v4679, -inf
      %v4751 = vmax.f32 %v4749, %v4750
      %v4752 = vsel %vm2756, %v4680, -inf
      %v4753 = vsel %vm2756, %v4682, -inf
      %v4754 = vmax.f32 %v4752, %v4753
      %v4755 = vsel %vm2756, %v4681, -inf
      %v4756 = vsel %vm2756, %v4683, -inf
      %v4757 = vmax.f32 %v4755, %v4756
      %v4758 = vsel %vm2756, %v4684, -inf
      %v4759 = vsel %vm2756, %v4686, -inf
      %v4760 = vmax.f32 %v4758, %v4759
      %v4761 = vsel %vm2756, %v4685, -inf
      %v4762 = vsel %vm2756, %v4687, -inf
      %v4763 = vmax.f32 %v4761, %v4762
      %v4764 = vsel %vm2756, %v4688, -inf
      %v4765 = vsel %vm2756, %v4690, -inf
      %v4766 = vmax.f32 %v4764, %v4765
      %v4767 = vsel %vm2756, %v4689, -inf
      %v4768 = vsel %vm2756, %v4691, -inf
      %v4769 = vmax.f32 %v4767, %v4768
      %v4770 = vsel %vm2756, %v4692, -inf
      %v4771 = vsel %vm2756, %v4694, -inf
      %v4772 = vmax.f32 %v4770, %v4771
      %v4773 = vsel %vm2756, %v4693, -inf
      %v4774 = vsel %vm2756, %v4695, -inf
      %v4775 = vmax.f32 %v4773, %v4774
      %v4776 = vsel %vm2756, %v4696, -inf
      %v4777 = vsel %vm2756, %v4698, -inf
      %v4778 = vmax.f32 %v4776, %v4777
      %v4779 = vsel %vm2756, %v4697, -inf
      %v4780 = vsel %vm2756, %v4699, -inf
      %v4781 = vmax.f32 %v4779, %v4780
      %v4782 = vsel %vm2756, %v4700, -inf
      %v4783 = vsel %vm2756, %v4702, -inf
      %v4784 = vmax.f32 %v4782, %v4783
      %v4785 = vsel %vm2756, %v4701, -inf
      %v4786 = vsel %vm2756, %v4703, -inf
      %v4787 = vmax.f32 %v4785, %v4786
      %v4788 = vpack.c.bf16 %v4706, %v4706
      %v4789 = vpack.c.bf16 %v4709, %v4709
      %v4790 = vpack.c.bf16 %v4712, %v4712
      %v4791 = vpack.c.bf16 %v4715, %v4715
      %v4792 = vpack.c.bf16 %v4718, %v4718
      %v4793 = vpack.c.bf16 %v4721, %v4721
      %v4794 = vpack.c.bf16 %v4724, %v4724
      %v4795 = vpack.c.bf16 %v4727, %v4727
      %v4796 = vpack.c.bf16 %v4730, %v4730
      %v4797 = vpack.c.bf16 %v4733, %v4733
      %v4798 = vpack.c.bf16 %v4736, %v4736
      %v4799 = vpack.c.bf16 %v4739, %v4739
      %v4800 = vpack.c.bf16 %v4742, %v4742
      %v4801 = vpack.c.bf16 %v4745, %v4745
      %v4802 = vpack.c.bf16 %v4748, %v4748
      %v4803 = vpack.c.bf16 %v4751, %v4751
      %v4804 = vpack.c.bf16 %v4754, %v4754
      %v4805 = vpack.c.bf16 %v4757, %v4757
      %v4806 = vpack.c.bf16 %v4760, %v4760
      %v4807 = vpack.c.bf16 %v4763, %v4763
      %v4808 = vpack.c.bf16 %v4766, %v4766
      %v4809 = vpack.c.bf16 %v4769, %v4769
      %v4810 = vpack.c.bf16 %v4772, %v4772
      %v4811 = vpack.c.bf16 %v4775, %v4775
      %v4812 = vpack.c.bf16 %v4778, %v4778
      %v4813 = vpack.c.bf16 %v4781, %v4781
      %v4814 = vpack.c.bf16 %v4784, %v4784
      %v4815 = vpack.c.bf16 %v4787, %v4787
      %vm4816 = vcmask 257024
      %4817 = vst.msk [vmem:[%s224] sm:$0xf] %vm4816, %v4788
      %4818 = vst.msk [vmem:[%s224 + $0x4] sm:$0xf] %vm4816, %v4789
      %4819 = vst.msk [vmem:[%s224 + $0x8] sm:$0xf] %vm4816, %v4790
      %4820 = vst.msk [vmem:[%s224 + $0xc] sm:$0xf] %vm4816, %v4791
      %4821 = vst.msk [vmem:[%s224 + $0x10] sm:$0xf] %vm4816, %v4792
      %4822 = vst.msk [vmem:[%s224 + $0x14] sm:$0xf] %vm4816, %v4793
      %4823 = vst.msk [vmem:[%s224 + $0x18] sm:$0xf] %vm4816, %v4794
      %4824 = vst.msk [vmem:[%s224 + $0x1c] sm:$0xf] %vm4816, %v4795
      %4825 = vst.msk [vmem:[%s224 + $0x20] sm:$0xf] %vm4816, %v4796
      %4826 = vst.msk [vmem:[%s224 + $0x24] sm:$0xf] %vm4816, %v4797
      %4827 = vst.msk [vmem:[%s224 + $0x28] sm:$0xf] %vm4816, %v4798
      %4828 = vst.msk [vmem:[%s224 + $0x2c] sm:$0xf] %vm4816, %v4799
      %4829 = vst.msk [vmem:[%s224 + $0x30] sm:$0xf] %vm4816, %v4800
      %4830 = vst.msk [vmem:[%s224 + $0x34] sm:$0xf] %vm4816, %v4801
      %4831 = vst.msk [vmem:[%s224 + $0x38] sm:$0xf] %vm4816, %v4802
      %4832 = vst.msk [vmem:[%s224 + $0x3c] sm:$0xf] %vm4816, %v4803
      %4833 = vst.msk [vmem:[%s224 + $0x40] sm:$0xf] %vm4816, %v4804
      %4834 = vst.msk [vmem:[%s224 + $0x44] sm:$0xf] %vm4816, %v4805
      %4835 = vst.msk [vmem:[%s224 + $0x48] sm:$0xf] %vm4816, %v4806
      %4836 = vst.msk [vmem:[%s224 + $0x4c] sm:$0xf] %vm4816, %v4807
      %4837 = vst.msk [vmem:[%s224 + $0x50] sm:$0xf] %vm4816, %v4808
      %4838 = vst.msk [vmem:[%s224 + $0x54] sm:$0xf] %vm4816, %v4809
      %4839 = vst.msk [vmem:[%s224 + $0x58] sm:$0xf] %vm4816, %v4810
      %4840 = vst.msk [vmem:[%s224 + $0x5c] sm:$0xf] %vm4816, %v4811
      %4841 = vst.msk [vmem:[%s224 + $0x60] sm:$0xf] %vm4816, %v4812
      %4842 = vst.msk [vmem:[%s224 + $0x64] sm:$0xf] %vm4816, %v4813
      %4843 = vst.msk [vmem:[%s224 + $0x68] sm:$0xf] %vm4816, %v4814
      %4844 = vst.msk [vmem:[%s224 + $0x6c] sm:$0xf] %vm4816, %v4815
      %p4845 = scmp.lt.s32.totalorder %s16, 1
      %s4846 = scalar_select %p4845, %s16, 1
      %s4847 = smul.addr %s4846, 28
      %s4848 = smul.addr %s4847, 4
      %s4849 = scalar_lea.vmem %s5, %s4848
      // Predicated region
      $region41: #{net_forward.2} parent=39 // pred_check
        %p4850 = pneg %p144
      $region42: #{net_forward.2} parent=39 // pred_check_branch
        %4852 = sbr.rel (%p4850) target = $region44
      $region43: #{net_forward.2} parent=39 // pred_region
        _
      $region44: #{net_forward.2} parent=39 // pred_fallthru
        _
    $region40: #{net_forward.2} parent=5 // pred_fallthru
      _
    %p4853 = scmp.le.s32.totalorder 2, %s11
    // Predicated region
    $region45: #{net_forward.2} parent=5 // pred_check
      %p4854 = pneg %p4853
    $region46: #{net_forward.2} parent=5 // pred_check_branch
      %4856 = sbr.rel (%p4854) target = $region48
    $region47: #{net_forward.2} parent=5 // pred_region
      %s4857 = ssub.s32 %s11, 2
      // Predicated region
      $region49: #{net_forward.2} parent=47 // pred_check
        %p4858 = pneg %p150
      $region50: #{net_forward.2} parent=47 // pred_check_branch
        %4860 = sbr.rel (%p4858) target = $region52
      $region51: #{net_forward.2} parent=47 // pred_region
        %p4861 = scmp.lt.s32.totalorder %s17, 1
        %s4862 = scalar_select %p4861, %s17, 1
        %s4863 = smul.addr %s4862, 28
        %s4864 = smul.addr %s4863, 4
        %s4865 = scalar_lea.vmem %s5, %s4864
      $region52: #{net_forward.2} parent=47 // pred_fallthru
        _
    $region48: #{net_forward.2} parent=5 // pred_fallthru
      _
  $region6: #{net_forward.2} parent=0 // loop_footer
    %s15 = sadd.s32 1, %s11
  $region7: #{net_forward.2} parent=0 // loop_footer_branch
    %10 = sbr.rel target = $region3
  $region8: #{net_forward.2} parent=0 // loop_exit
    _

</llo_original>
